<compile_context>
chip_gen: v7x
topology: tpu7x:2x2x1
jax: 0.10.0
libtpu: 0.0.40
codegen_flags: <defaults>
</compile_context>

<pallas_src>
import math

import jax
import jax.numpy as jnp
from jax import lax
from jax.experimental import pallas as pl
from jax.experimental.pallas import tpu as pltpu


# ----------------------------- small helpers --------------------------------

def _round_up(x, m):
    return ((x + m - 1) // m) * m


def _tpu_vmem_capacity_bytes():
    try:
        return int(pltpu.get_tpu_info().vmem_capacity_bytes)
    except Exception:  # pragma: no cover - emulator / unknown backend
        return 64 * 1024 * 1024


def _vmem_limit_bytes():
    cap = _tpu_vmem_capacity_bytes()
    if cap >= 128 * 1024 * 1024:
        # v5e / v6e: exploit the 128 MiB physical VMEM.
        return 100 * 1024 * 1024
    # v7x (64 MiB physical): stay conservative.
    return min(48 * 1024 * 1024, max(32 * 1024 * 1024, (cap * 3) // 4))


def _layernorm(x, g, b, eps=1e-5):
    mu = jnp.mean(x, axis=-1, keepdims=True)
    xc = x - mu
    var = jnp.mean(xc * xc, axis=-1, keepdims=True)
    return xc * lax.rsqrt(var + eps) * g + b


def _gelu_tanh(x):
    # TODO(synk): PyTorch nn.GELU defaults to exact erf; tanh approximation is
    # used since erf lowering on Mosaic is not guaranteed.
    c = math.sqrt(2.0 / math.pi)
    return 0.5 * x * (1.0 + jnp.tanh(c * (x + 0.044715 * x * x * x)))


# ------------------------- matmul + bias (conv lowering) ---------------------

def _matmul_bias_kernel(a_ref, w_ref, b_ref, o_ref):
    # Single full-K block per grid step: one dot + bias + direct store
    # (no accumulator scratch, no pl.when init/finalize).
    o_ref[...] = (jnp.dot(a_ref[...], w_ref[...],
                          preferred_element_type=jnp.float32)
                  + b_ref[...]).astype(o_ref.dtype)


def _pick_tm(M):
    """M tile (multiple of 16 for bf16 sublane packing); for M > 256 guarantee
    >= 2 'parallel' M tiles so both v7x TensorCores get work."""
    if M <= 256:
        tm = _round_up(max(M, 16), 16)
        return tm, tm
    tm = min(512, _round_up((M + 1) // 2, 16))
    return tm, _round_up(M, tm)


def _matmul_bias(a, w, b, out_dtype):
    """a:(M,K) @ w:(K,N) + b:(N,) -> (M,N) in out_dtype.

    K is a single full-extent block (no K padding / no K grid); grid is over
    M tiles only, bf16 MXU operands with f32 accumulation.
    """
    M, K = a.shape
    N = w.shape[1]
    tm, Mp = _pick_tm(M)

    a_bf = a.astype(jnp.bfloat16)
    if Mp > M:
        a_bf = jnp.pad(a_bf, ((0, Mp - M), (0, 0)))
    w_bf = w.astype(jnp.bfloat16)
    b2 = b.reshape(1, N).astype(jnp.float32)

    out = pl.pallas_call(
        _matmul_bias_kernel,
        out_shape=jax.ShapeDtypeStruct((Mp, N), out_dtype),
        grid=(Mp // tm,),
        in_specs=[pl.BlockSpec((tm, K), lambda i: (i, 0)),
                  pl.BlockSpec((K, N), lambda i: (0, 0)),
                  pl.BlockSpec((1, N), lambda i: (0, 0))],
        out_specs=pl.BlockSpec((tm, N), lambda i: (i, 0)),
        compiler_params=pltpu.CompilerParams(
            dimension_semantics=("parallel",),
            vmem_limit_bytes=_vmem_limit_bytes()),
    )(a_bf, w_bf, b2)
    return out[:M] if Mp > M else out


# ------------------------- SpatialTransformer kernel -------------------------
# Consolidated vector params, one (8, dmax) block instead of 7 tiny DMAs:
#   row 0: ln1 gamma   row 1: ln1 beta   row 2: proj bias
#   row 3: ln2 gamma   row 4: ln2 beta   row 5: mlp b1     row 6: mlp b2

_KV_CHUNK = 256   # bounds the (N, Tk) score/exp temporaries (v7x VMEM)


def _spatial_transformer_kernel(x_ref, wqkv_ref, wp_ref, w1_ref, w2_ref,
                                vec_ref, o_tok_ref, o_chw_ref, k_sc, v_sc):
    Bb, N, C = x_ref.shape
    D = wp_ref.shape[0]          # in_dim
    Hd = w1_ref.shape[1]         # mlp hidden
    num_heads = 1
    scale = float(C // num_heads) ** -0.5   # T2T: head_dim = dim // num_heads

    vecs = vec_ref[...]
    ln1_g, ln1_b = vecs[0:1, :C], vecs[1:2, :C]
    bp = vecs[2:3, :D]
    ln2_g, ln2_b = vecs[3:4, :D], vecs[4:5, :D]
    b1, b2 = vecs[5:6, :Hd], vecs[6:7, :D]

    x = x_ref[...].astype(jnp.float32).reshape(Bb * N, C)
    xn = _layernorm(x, ln1_g, ln1_b).astype(jnp.bfloat16)

    # Fused QKV projection: one MXU call with 3*D output lanes instead of
    # three lane-sparse D-wide matmuls.
    qkv = jnp.dot(xn, wqkv_ref[...], preferred_element_type=jnp.float32)
    q = qkv[:, :D]
    k = qkv[:, D:2 * D]
    v = qkv[:, 2 * D:3 * D]                 # kept f32 for the T2T v-skip

    # Softmax scale folded into q; q/k only live as bf16 (working-set cut).
    q_bf = (q * scale).astype(jnp.bfloat16).reshape(Bb, N, D)
    k_bf = k.astype(jnp.bfloat16).reshape(Bb, N, D)
    v_bf = v.astype(jnp.bfloat16).reshape(Bb, N, D)

    def chunk_update(carry, k_chunk, v_chunk):
        m_run, l_run, acc = carry
        # Contraction on the last dim of both operands: no k.T materialization.
        s = jnp.einsum('bqd,bkd->bqk', q_bf, k_chunk,
                       preferred_element_type=jnp.float32)
        m_new = jnp.maximum(m_run, jnp.max(s, axis=-1, keepdims=True))
        alpha = jnp.exp(m_run - m_new)
        pmat = jnp.exp(s - m_new)
        l_new = alpha * l_run + jnp.sum(pmat, axis=-1, keepdims=True)
        acc_new = alpha * acc + jnp.einsum('bqk,bkd->bqd',
                                           pmat.astype(jnp.bfloat16), v_chunk,
                                           preferred_element_type=jnp.float32)
        return m_new, l_new, acc_new

    init = (jnp.full((Bb, N, 1), -jnp.inf, jnp.float32),
            jnp.zeros((Bb, N, 1), jnp.float32),
            jnp.zeros((Bb, N, D), jnp.float32))

    # Online-softmax over KV chunks held in VMEM scratch; lax.fori_loop bounds
    # the live ranges of the (N, Tk) score/exp temporaries.
    tk = min(_KV_CHUNK, N)
    k_sc[...] = k_bf
    v_sc[...] = v_bf
    n_full, rem = divmod(N, tk)

    def body(c, carry):
        lo = pl.multiple_of(c * tk, tk)
        return chunk_update(carry,
                            k_sc[:, pl.ds(lo, tk), :],
                            v_sc[:, pl.ds(lo, tk), :])

    carry = lax.fori_loop(0, n_full, body, init, unroll=(n_full <= 4))
    if rem:
        lo = n_full * tk
        carry = chunk_update(carry,
                             k_sc[:, pl.ds(lo, rem), :],
                             v_sc[:, pl.ds(lo, rem), :])
    m_run, l_run, acc = carry

    y = (acc * pl.reciprocal(l_run, approx=True)).reshape(Bb * N, D)
    y = jnp.dot(y.astype(jnp.bfloat16), wp_ref[...],
                preferred_element_type=jnp.float32) + bp
    x1 = v + y                     # T2T v-skip (input/output dims may differ)

    x2 = _layernorm(x1, ln2_g, ln2_b).astype(jnp.bfloat16)
    h = jnp.dot(x2, w1_ref[...], preferred_element_type=jnp.float32) + b1
    h = _gelu_tanh(h).astype(jnp.bfloat16)
    h = jnp.dot(h, w2_ref[...], preferred_element_type=jnp.float32) + b2

    out = (x1 + h).reshape(Bb, N, D)
    o_tok_ref[...] = out.astype(o_tok_ref.dtype)                        # bf16 tokens
    o_chw_ref[...] = jnp.transpose(out, (0, 2, 1)).astype(o_chw_ref.dtype)  # f32 (D,N)


def _pick_batch_block(B, per_b_bytes):
    """Fold as much batch per grid step as fits the generation-aware VMEM
    budget while keeping >= 2 'parallel' steps when B >= 2 (v7x megacore)."""
    if B <= 1:
        return 1
    big_vmem = _tpu_vmem_capacity_bytes() >= 128 * 1024 * 1024
    budget = (24 if big_vmem else 8) * 1024 * 1024
    bblk = B // 2 if B % 2 == 0 else 1
    while bblk > 1 and (B % bblk != 0 or bblk * per_b_bytes > budget):
        bblk -= 1
    return max(1, bblk)


def _spatial_transformer(x_tokens, p):
    """x_tokens: (B, N, C) -> ((B, N, D) bf16 tokens, (B, D, N) f32 chan-major)."""
    B, N, C = x_tokens.shape
    D = p['wp'].shape[0]
    tk = min(_KV_CHUNK, N)
    per_b = 4 * N * (C + 6 * D + tk) + 2 * N * (C + 3 * D)   # rough working set
    bblk = _pick_batch_block(B, per_b)

    wqkv, wp, w1, w2 = (p[n].astype(jnp.bfloat16)
                        for n in ('wqkv', 'wp', 'w1', 'w2'))
    vecs = p['vecs'].astype(jnp.float32)

    weight_specs = [pl.BlockSpec(a.shape, lambda b: (0, 0))
                    for a in (wqkv, wp, w1, w2, vecs)]
    return pl.pallas_call(
        _spatial_transformer_kernel,
        out_shape=(jax.ShapeDtypeStruct((B, N, D), jnp.bfloat16),
                   jax.ShapeDtypeStruct((B, D, N), jnp.float32)),
        grid=(B // bblk,),
        in_specs=[pl.BlockSpec((bblk, N, C), lambda b: (b, 0, 0))] + weight_specs,
        out_specs=(pl.BlockSpec((bblk, N, D), lambda b: (b, 0, 0)),
                   pl.BlockSpec((bblk, D, N), lambda b: (b, 0, 0))),
        scratch_shapes=[pltpu.VMEM((bblk, N, D), jnp.bfloat16),
                        pltpu.VMEM((bblk, N, D), jnp.bfloat16)],
        compiler_params=pltpu.CompilerParams(
            dimension_semantics=("parallel",),
            vmem_limit_bytes=_vmem_limit_bytes()),
    )(x_tokens, wqkv, wp, w1, w2, vecs)


# --------------------------- conv via im2col + matmul ------------------------

def _im2col_nhwc(x, k, s, p):
    """x: (B, H, W, C) -> patches (B*OH*OW, k*k*C), K ordered (kh, kw, Cin)."""
    B, H, W, C = x.shape
    OH = (H + 2 * p - k) // s + 1
    OW = (W + 2 * p - k) // s + 1
    xp = jnp.pad(x, ((0, 0), (p, p), (p, p), (0, 0)))
    cols = []
    for i in range(k):
        for j in range(k):
            cols.append(xp[:, i:i + s * (OH - 1) + 1:s,
                              j:j + s * (OW - 1) + 1:s, :])
    patches = jnp.stack(cols, axis=3).reshape(B * OH * OW, k * k * C)
    return patches, OH, OW


def _conv2d_tokens(x_nhwc, w, b, stride, pad, out_dtype):
    """NHWC conv -> tokens (B, OH*OW, Cout); weight (Cout, Cin, k, k).

    Rows come out in PyTorch's `conv(x).view(B,C,-1).transpose(1,2)` order.
    TODO(synk): fuse patch extraction into the matmul kernel via manual DMA at
    production sizes to avoid the k*k HBM amplification of XLA-side im2col.
    """
    B, H, W, Cin = x_nhwc.shape
    Cout, _, k, _ = w.shape
    patches, OH, OW = _im2col_nhwc(x_nhwc.astype(jnp.bfloat16), k, stride, pad)
    wm = jnp.transpose(w, (2, 3, 1, 0)).reshape(k * k * Cin, Cout)
    out = _matmul_bias(patches, wm, b, out_dtype)        # (B*OH*OW, Cout)
    return out.reshape(B, OH * OW, Cout), OH, OW


# ------------------------------ parameter init -------------------------------

def init_params(key, in_chans, token_dim, embed_dim):
    ks = jax.random.split(key, 8)

    def w(k, shape, s=0.02):
        return jax.random.normal(k, shape, jnp.float32) * s

    def attn_params(k, dim, in_dim, mlp_ratio=1.0):
        kk = jax.random.split(k, 6)
        hid = int(in_dim * mlp_ratio)
        dmax = max(dim, in_dim, hid)
        vecs = jnp.zeros((8, dmax), jnp.float32)
        vecs = vecs.at[0, :dim].set(1.0)      # ln1 gamma
        vecs = vecs.at[3, :in_dim].set(1.0)   # ln2 gamma (betas / biases zero)
        wq = w(kk[0], (dim, in_dim))
        wk = w(kk[1], (dim, in_dim))
        wv = w(kk[2], (dim, in_dim))
        return dict(
            wqkv=jnp.concatenate([wq, wk, wv], axis=1),   # fused (dim, 3*in_dim)
            wp=w(kk[3], (in_dim, in_dim)),
            w1=w(kk[4], (in_dim, hid)),
            w2=w(kk[5], (hid, in_dim)),
            vecs=vecs,
        )

    return dict(
        conv0_w=w(ks[0], (token_dim, in_chans, 7, 7)),
        conv0_b=w(ks[1], (token_dim,)),
        conv1_w=w(ks[2], (token_dim, token_dim, 3, 3)),
        conv1_b=w(ks[3], (token_dim,)),
        conv2_w=w(ks[4], (embed_dim, token_dim, 3, 3)),
        conv2_b=w(ks[5], (embed_dim,)),
        attn1=attn_params(ks[6], token_dim, token_dim),
        attn2=attn_params(ks[7], token_dim, token_dim),
    )


# --------------------------------- forward -----------------------------------

def ftn_encoder_forward(x, p):
    """x: (B, in_chans, H, W) NCHW (matches the PyTorch module)."""
    B = x.shape[0]
    token_dim = p['conv0_w'].shape[0]
    encoder_list = []

    # Compute path stays in NHWC / token layout (bf16 intermediates); the NCHW
    # encoder_list outputs come channel-major straight from the transformer
    # kernel, so only the raw input needs an XLA transpose.
    xh = jnp.transpose(x, (0, 2, 3, 1)).astype(jnp.bfloat16)

    # swt_0: conv k7 s4 p2 -> tokens -> attention1
    t, oh, ow = _conv2d_tokens(xh, p['conv0_w'], p['conv0_b'], stride=4, pad=2,
                               out_dtype=jnp.bfloat16)
    t_tok, t_chw = _spatial_transformer(t, p['attn1'])
    encoder_list.append(t_chw.reshape(B, token_dim, oh, ow))
    xh = t_tok.reshape(B, oh, ow, token_dim)

    # swt_1: conv k3 s2 p1 -> tokens -> attention2
    t, oh, ow = _conv2d_tokens(xh, p['conv1_w'], p['conv1_b'], stride=2, pad=1,
                               out_dtype=jnp.bfloat16)
    t_tok, t_chw = _spatial_transformer(t, p['attn2'])
    encoder_list.append(t_chw.reshape(B, token_dim, oh, ow))
    xh = t_tok.reshape(B, oh, ow, token_dim)

    # swt_2: conv k3 s2 p1 -> final tokens (B, N, embed_dim), f32
    t, _, _ = _conv2d_tokens(xh, p['conv2_w'], p['conv2_b'], stride=2, pad=1,
                             out_dtype=jnp.float32)
    return t, encoder_list


if __name__ == "__main__":
    key = jax.random.PRNGKey(0)
    k_params, k_x = jax.random.split(key)

    B, in_chans, img_size = 2, 3, 32
    token_dim, embed_dim = 32, 64

    params = init_params(k_params, in_chans, token_dim, embed_dim)
    x = jax.random.normal(k_x, (B, in_chans, img_size, img_size), jnp.float32)

    fwd = jax.jit(ftn_encoder_forward)
    out, enc_list = fwd(x, params)
    out = jax.block_until_ready(out)
    enc_list = [jax.block_until_ready(e) for e in enc_list]

    assert out.shape == (B, (img_size // 16) ** 2, embed_dim), out.shape
    assert out.dtype == jnp.float32
    assert enc_list[0].shape == (B, token_dim, img_size // 4, img_size // 4)
    assert enc_list[1].shape == (B, token_dim, img_size // 8, img_size // 8)
    assert bool(jnp.all(jnp.isfinite(out)))
    assert all(bool(jnp.all(jnp.isfinite(e))) for e in enc_list)

    print("KERNEL_OK")
</pallas_src>

<mosaic_0001>
module attributes {stable_mosaic.version = 11 : i64} {
  func.func @_matmul_bias_kernel(%arg0: i32, %arg1: memref<128x147xbf16, #tpu.memory_space<vmem>>, %arg2: memref<147x32xbf16, #tpu.memory_space<vmem>>, %arg3: memref<1x32xf32, #tpu.memory_space<vmem>>, %arg4: memref<128x32xbf16, #tpu.memory_space<vmem>>) attributes {dimension_semantics = [#tpu.dimension_semantics<parallel>], iteration_bounds = array<i64: 1>, scalar_prefetch = 0 : i64, scratch_operands = 0 : i64, tpu.core_type = #tpu.core_type<tc>, window_params = [{transform_indices = @transform_0, window_bounds = array<i64: 128, 147>}, {pipeline_mode = #tpu.pipeline_mode<synchronous>, transform_indices = @transform_1, window_bounds = array<i64: 147, 32>}, {pipeline_mode = #tpu.pipeline_mode<synchronous>, transform_indices = @transform_2, window_bounds = array<i64: 1, 32>}, {transform_indices = @transform_3, window_bounds = array<i64: 128, 32>}]} {
    %c0 = arith.constant 0 : index
    %c0_0 = arith.constant 0 : index
    %0 = vector.load %arg1[%c0, %c0_0] : memref<128x147xbf16, #tpu.memory_space<vmem>>, vector<128x147xbf16>
    %c0_1 = arith.constant 0 : index
    %c0_2 = arith.constant 0 : index
    %1 = vector.load %arg2[%c0_1, %c0_2] : memref<147x32xbf16, #tpu.memory_space<vmem>>, vector<147x32xbf16>
    %cst = arith.constant dense<0.000000e+00> : vector<128x32xf32>
    %2 = tpu.matmul %0, %1, %cst {dimension_numbers = #tpu.dot_dimension_numbers<[1], [0], [0], [1], [0, 0, 1, 1], [], []>} : vector<128x147xbf16>, vector<147x32xbf16>, vector<128x32xf32> -> vector<128x32xf32>
    %c0_3 = arith.constant 0 : index
    %c0_4 = arith.constant 0 : index
    %3 = vector.load %arg3[%c0_3, %c0_4] : memref<1x32xf32, #tpu.memory_space<vmem>>, vector<1x32xf32>
    %4 = vector.broadcast %3 : vector<1x32xf32> to vector<128x32xf32>
    %5 = arith.addf %2, %4 : vector<128x32xf32>
    %6 = arith.truncf %5 : vector<128x32xf32> to vector<128x32xbf16>
    %c0_5 = arith.constant 0 : index
    %c0_6 = arith.constant 0 : index
    %7 = vector.load %arg4[%c0_5, %c0_6] : memref<128x32xbf16, #tpu.memory_space<vmem>>, vector<128x32xbf16>
    tpu.vector_store %arg4[%c0_5, %c0_6], %6 {strides = array<i32>} : memref<128x32xbf16, #tpu.memory_space<vmem>>, vector<128x32xbf16>,
    return
  }
  func.func @transform_0(%arg0: i32) -> (i32, i32) {
    %c0_i32 = arith.constant 0 : i32
    %c0_i32_0 = arith.constant 0 : i32
    return %arg0, %c0_i32 : i32, i32
  }
  func.func @transform_1(%arg0: i32) -> (i32, i32) {
    %c0_i32 = arith.constant 0 : i32
    %c0_i32_0 = arith.constant 0 : i32
    %c0_i32_1 = arith.constant 0 : i32
    return %c0_i32, %c0_i32_0 : i32, i32
  }
  func.func @transform_2(%arg0: i32) -> (i32, i32) {
    %c0_i32 = arith.constant 0 : i32
    %c0_i32_0 = arith.constant 0 : i32
    %c0_i32_1 = arith.constant 0 : i32
    return %c0_i32, %c0_i32_0 : i32, i32
  }
  func.func @transform_3(%arg0: i32) -> (i32, i32) {
    %c0_i32 = arith.constant 0 : i32
    %c0_i32_0 = arith.constant 0 : i32
    return %arg0, %c0_i32 : i32, i32
  }
}

module attributes {stable_mosaic.version = 11 : i64} {
  func.func @_spatial_transformer_kernel(%arg0: i32, %arg1: memref<1x64x32xbf16, #tpu.memory_space<vmem>>, %arg2: memref<32x96xbf16, #tpu.memory_space<vmem>>, %arg3: memref<32x32xbf16, #tpu.memory_space<vmem>>, %arg4: memref<32x32xbf16, #tpu.memory_space<vmem>>, %arg5: memref<32x32xbf16, #tpu.memory_space<vmem>>, %arg6: memref<8x32xf32, #tpu.memory_space<vmem>>, %arg7: memref<1x64x32xbf16, #tpu.memory_space<vmem>>, %arg8: memref<1x32x64xf32, #tpu.memory_space<vmem>>, %arg9: memref<1x64x32xbf16, #tpu.memory_space<vmem>>, %arg10: memref<1x64x32xbf16, #tpu.memory_space<vmem>>) attributes {dimension_semantics = [#tpu.dimension_semantics<parallel>], iteration_bounds = array<i64: 2>, scalar_prefetch = 0 : i64, scratch_operands = 2 : i64, tpu.core_type = #tpu.core_type<tc>, window_params = [{transform_indices = @transform_0, window_bounds = array<i64: 1, 64, 32>}, {pipeline_mode = #tpu.pipeline_mode<synchronous>, transform_indices = @transform_1, window_bounds = array<i64: 32, 96>}, {pipeline_mode = #tpu.pipeline_mode<synchronous>, transform_indices = @transform_2, window_bounds = array<i64: 32, 32>}, {pipeline_mode = #tpu.pipeline_mode<synchronous>, transform_indices = @transform_3, window_bounds = array<i64: 32, 32>}, {pipeline_mode = #tpu.pipeline_mode<synchronous>, transform_indices = @transform_4, window_bounds = array<i64: 32, 32>}, {pipeline_mode = #tpu.pipeline_mode<synchronous>, transform_indices = @transform_5, window_bounds = array<i64: 8, 32>}, {transform_indices = @transform_6, window_bounds = array<i64: 1, 64, 32>}, {transform_indices = @transform_7, window_bounds = array<i64: 1, 32, 64>}]} {
    %c0 = arith.constant 0 : index
    %c0_0 = arith.constant 0 : index
    %0 = vector.load %arg6[%c0, %c0_0] : memref<8x32xf32, #tpu.memory_space<vmem>>, vector<8x32xf32>
    %1 = vector.extract_strided_slice %0 {offsets = [0, 0], sizes = [1, 32], strides = [1, 1]} : vector<8x32xf32> to vector<1x32xf32>
    %2 = vector.extract_strided_slice %0 {offsets = [1, 0], sizes = [1, 32], strides = [1, 1]} : vector<8x32xf32> to vector<1x32xf32>
    %3 = vector.extract_strided_slice %0 {offsets = [2, 0], sizes = [1, 32], strides = [1, 1]} : vector<8x32xf32> to vector<1x32xf32>
    %4 = vector.extract_strided_slice %0 {offsets = [3, 0], sizes = [1, 32], strides = [1, 1]} : vector<8x32xf32> to vector<1x32xf32>
    %5 = vector.extract_strided_slice %0 {offsets = [4, 0], sizes = [1, 32], strides = [1, 1]} : vector<8x32xf32> to vector<1x32xf32>
    %6 = vector.extract_strided_slice %0 {offsets = [5, 0], sizes = [1, 32], strides = [1, 1]} : vector<8x32xf32> to vector<1x32xf32>
    %7 = vector.extract_strided_slice %0 {offsets = [6, 0], sizes = [1, 32], strides = [1, 1]} : vector<8x32xf32> to vector<1x32xf32>
    %c0_1 = arith.constant 0 : index
    %c0_2 = arith.constant 0 : index
    %c0_3 = arith.constant 0 : index
    %8 = vector.load %arg1[%c0_1, %c0_2, %c0_3] : memref<1x64x32xbf16, #tpu.memory_space<vmem>>, vector<1x64x32xbf16>
    %9 = arith.extf %8 : vector<1x64x32xbf16> to vector<1x64x32xf32>
    %10 = vector.shape_cast %9 : vector<1x64x32xf32> to vector<64x32xf32>
    %cst = arith.constant dense<0.000000e+00> : vector<64xf32>
    %11 = vector.multi_reduction <add>, %10, %cst [1] : vector<64x32xf32> to vector<64xf32>
    %12 = vector.shape_cast %11 : vector<64xf32> to vector<64x1xf32>
    %cst_4 = arith.constant 3.200000e+01 : f32
    %13 = vector.broadcast %cst_4 : f32 to vector<64x1xf32>
    %14 = arith.divf %12, %13 : vector<64x1xf32>
    %15 = vector.broadcast %14 : vector<64x1xf32> to vector<64x32xf32>
    %16 = arith.subf %10, %15 : vector<64x32xf32>
    %17 = arith.mulf %16, %16 : vector<64x32xf32>
    %cst_5 = arith.constant dense<0.000000e+00> : vector<64xf32>
    %18 = vector.multi_reduction <add>, %17, %cst_5 [1] : vector<64x32xf32> to vector<64xf32>
    %19 = vector.shape_cast %18 : vector<64xf32> to vector<64x1xf32>
    %cst_6 = arith.constant 3.200000e+01 : f32
    %20 = vector.broadcast %cst_6 : f32 to vector<64x1xf32>
    %21 = arith.divf %19, %20 : vector<64x1xf32>
    %cst_7 = arith.constant 9.99999974E-6 : f32
    %22 = vector.broadcast %cst_7 : f32 to vector<64x1xf32>
    %23 = arith.addf %21, %22 : vector<64x1xf32>
    %24 = math.rsqrt %23 : vector<64x1xf32>
    %25 = vector.broadcast %24 : vector<64x1xf32> to vector<64x32xf32>
    %26 = arith.mulf %16, %25 : vector<64x32xf32>
    %27 = vector.broadcast %1 : vector<1x32xf32> to vector<64x32xf32>
    %28 = arith.mulf %26, %27 : vector<64x32xf32>
    %29 = vector.broadcast %2 : vector<1x32xf32> to vector<64x32xf32>
    %30 = arith.addf %28, %29 : vector<64x32xf32>
    %31 = arith.truncf %30 : vector<64x32xf32> to vector<64x32xbf16>
    %c0_8 = arith.constant 0 : index
    %c0_9 = arith.constant 0 : index
    %32 = vector.load %arg2[%c0_8, %c0_9] : memref<32x96xbf16, #tpu.memory_space<vmem>>, vector<32x96xbf16>
    %cst_10 = arith.constant dense<0.000000e+00> : vector<64x96xf32>
    %33 = tpu.matmul %31, %32, %cst_10 {dimension_numbers = #tpu.dot_dimension_numbers<[1], [0], [0], [1], [0, 0, 1, 1], [], []>} : vector<64x32xbf16>, vector<32x96xbf16>, vector<64x96xf32> -> vector<64x96xf32>
    %34 = vector.extract_strided_slice %33 {offsets = [0, 0], sizes = [64, 32], strides = [1, 1]} : vector<64x96xf32> to vector<64x32xf32>
    %35 = vector.extract_strided_slice %33 {offsets = [0, 32], sizes = [64, 32], strides = [1, 1]} : vector<64x96xf32> to vector<64x32xf32>
    %36 = vector.extract_strided_slice %33 {offsets = [0, 64], sizes = [64, 32], strides = [1, 1]} : vector<64x96xf32> to vector<64x32xf32>
    %cst_11 = arith.constant 0.176776692 : f32
    %37 = vector.broadcast %cst_11 : f32 to vector<64x32xf32>
    %38 = arith.mulf %34, %37 : vector<64x32xf32>
    %39 = arith.truncf %38 : vector<64x32xf32> to vector<64x32xbf16>
    %40 = vector.shape_cast %39 : vector<64x32xbf16> to vector<1x64x32xbf16>
    %41 = arith.truncf %35 : vector<64x32xf32> to vector<64x32xbf16>
    %42 = vector.shape_cast %41 : vector<64x32xbf16> to vector<1x64x32xbf16>
    %43 = arith.truncf %36 : vector<64x32xf32> to vector<64x32xbf16>
    %44 = vector.shape_cast %43 : vector<64x32xbf16> to vector<1x64x32xbf16>
    %cst_12 = arith.constant 0xFF800000 : f32
    %45 = vector.broadcast %cst_12 : f32 to vector<1x64x1xf32>
    %cst_13 = arith.constant 0.000000e+00 : f32
    %46 = vector.broadcast %cst_13 : f32 to vector<1x64x1xf32>
    %cst_14 = arith.constant 0.000000e+00 : f32
    %47 = vector.broadcast %cst_14 : f32 to vector<1x64x32xf32>
    %c0_15 = arith.constant 0 : index
    %c0_16 = arith.constant 0 : index
    %c0_17 = arith.constant 0 : index
    %48 = vector.load %arg9[%c0_15, %c0_16, %c0_17] : memref<1x64x32xbf16, #tpu.memory_space<vmem>>, vector<1x64x32xbf16>
    tpu.vector_store %arg9[%c0_15, %c0_16, %c0_17], %42 {strides = array<i32>} : memref<1x64x32xbf16, #tpu.memory_space<vmem>>, vector<1x64x32xbf16>,
    %c0_18 = arith.constant 0 : index
    %c0_19 = arith.constant 0 : index
    %c0_20 = arith.constant 0 : index
    %49 = vector.load %arg10[%c0_18, %c0_19, %c0_20] : memref<1x64x32xbf16, #tpu.memory_space<vmem>>, vector<1x64x32xbf16>
    tpu.vector_store %arg10[%c0_18, %c0_19, %c0_20], %44 {strides = array<i32>} : memref<1x64x32xbf16, #tpu.memory_space<vmem>>, vector<1x64x32xbf16>,
    %c0_i32 = arith.constant 0 : i32
    %c64_i32 = arith.constant 64 : i32
    %50 = arith.muli %c0_i32, %c64_i32 : i32
    %51 = tpu.assume_multiple %50, 64 : i32
    %c0_21 = arith.constant 0 : index
    %52 = arith.index_cast %51 : i32 to index
    %c0_22 = arith.constant 0 : index
    %53 = vector.load %arg9[%c0_21, %52, %c0_22] : memref<1x64x32xbf16, #tpu.memory_space<vmem>>, vector<1x64x32xbf16>
    %c0_23 = arith.constant 0 : index
    %54 = arith.index_cast %51 : i32 to index
    %c0_24 = arith.constant 0 : index
    %55 = vector.load %arg10[%c0_23, %54, %c0_24] : memref<1x64x32xbf16, #tpu.memory_space<vmem>>, vector<1x64x32xbf16>
    "tpu.trace_start"() <{level = 10 : i32, message = "bqd,bkd->bqk"}> : () -> ()
    %cst_25 = arith.constant dense<0.000000e+00> : vector<1x64x64xf32>
    %56 = tpu.matmul %40, %53, %cst_25 {dimension_numbers = #tpu.dot_dimension_numbers<[2], [2], [1], [1], [0, 0, 0, 1, 1, 1], [0], [0]>} : vector<1x64x32xbf16>, vector<1x64x32xbf16>, vector<1x64x64xf32> -> vector<1x64x64xf32>
    "tpu.trace_stop"() : () -> ()
    %cst_26 = arith.constant dense<0xFF800000> : vector<1x64xf32>
    %57 = vector.multi_reduction <maximumf>, %56, %cst_26 [2] : vector<1x64x64xf32> to vector<1x64xf32>
    %58 = vector.shape_cast %57 : vector<1x64xf32> to vector<1x64x1xf32>
    %59 = arith.maximumf %45, %58 : vector<1x64x1xf32>
    %60 = arith.subf %45, %59 : vector<1x64x1xf32>
    %61 = math.exp %60 : vector<1x64x1xf32>
    %62 = vector.broadcast %59 : vector<1x64x1xf32> to vector<1x64x64xf32>
    %63 = arith.subf %56, %62 : vector<1x64x64xf32>
    %64 = math.exp %63 : vector<1x64x64xf32>
    %65 = arith.mulf %61, %46 : vector<1x64x1xf32>
    %cst_27 = arith.constant dense<0.000000e+00> : vector<1x64xf32>
    %66 = vector.multi_reduction <add>, %64, %cst_27 [2] : vector<1x64x64xf32> to vector<1x64xf32>
    %67 = vector.shape_cast %66 : vector<1x64xf32> to vector<1x64x1xf32>
    %68 = arith.addf %65, %67 : vector<1x64x1xf32>
    %69 = vector.broadcast %61 : vector<1x64x1xf32> to vector<1x64x32xf32>
    %70 = arith.mulf %69, %47 : vector<1x64x32xf32>
    %71 = arith.truncf %64 : vector<1x64x64xf32> to vector<1x64x64xbf16>
    "tpu.trace_start"() <{level = 10 : i32, message = "bqk,bkd->bqd"}> : () -> ()
    %cst_28 = arith.constant dense<0.000000e+00> : vector<1x64x32xf32>
    %72 = tpu.matmul %71, %55, %cst_28 {dimension_numbers = #tpu.dot_dimension_numbers<[2], [1], [1], [2], [0, 0, 0, 1, 1, 2], [0], [0]>} : vector<1x64x64xbf16>, vector<1x64x32xbf16>, vector<1x64x32xf32> -> vector<1x64x32xf32>
    "tpu.trace_stop"() : () -> ()
    %73 = arith.addf %70, %72 : vector<1x64x32xf32>
    %c1_i32 = arith.constant 1 : i32
    %74 = tpu.reciprocal %68 {approx = true} : vector<1x64x1xf32> -> vector<1x64x1xf32>
    %75 = vector.broadcast %74 : vector<1x64x1xf32> to vector<1x64x32xf32>
    %76 = arith.mulf %73, %75 : vector<1x64x32xf32>
    %77 = vector.shape_cast %76 : vector<1x64x32xf32> to vector<64x32xf32>
    %78 = arith.truncf %77 : vector<64x32xf32> to vector<64x32xbf16>
    %c0_29 = arith.constant 0 : index
    %c0_30 = arith.constant 0 : index
    %79 = vector.load %arg3[%c0_29, %c0_30] : memref<32x32xbf16, #tpu.memory_space<vmem>>, vector<32x32xbf16>
    %cst_31 = arith.constant dense<0.000000e+00> : vector<64x32xf32>
    %80 = tpu.matmul %78, %79, %cst_31 {dimension_numbers = #tpu.dot_dimension_numbers<[1], [0], [0], [1], [0, 0, 1, 1], [], []>} : vector<64x32xbf16>, vector<32x32xbf16>, vector<64x32xf32> -> vector<64x32xf32>
    %81 = vector.broadcast %3 : vector<1x32xf32> to vector<64x32xf32>
    %82 = arith.addf %80, %81 : vector<64x32xf32>
    %83 = arith.addf %36, %82 : vector<64x32xf32>
    %cst_32 = arith.constant dense<0.000000e+00> : vector<64xf32>
    %84 = vector.multi_reduction <add>, %83, %cst_32 [1] : vector<64x32xf32> to vector<64xf32>
    %85 = vector.shape_cast %84 : vector<64xf32> to vector<64x1xf32>
    %cst_33 = arith.constant 3.200000e+01 : f32
    %86 = vector.broadcast %cst_33 : f32 to vector<64x1xf32>
    %87 = arith.divf %85, %86 : vector<64x1xf32>
    %88 = vector.broadcast %87 : vector<64x1xf32> to vector<64x32xf32>
    %89 = arith.subf %83, %88 : vector<64x32xf32>
    %90 = arith.mulf %89, %89 : vector<64x32xf32>
    %cst_34 = arith.constant dense<0.000000e+00> : vector<64xf32>
    %91 = vector.multi_reduction <add>, %90, %cst_34 [1] : vector<64x32xf32> to vector<64xf32>
    %92 = vector.shape_cast %91 : vector<64xf32> to vector<64x1xf32>
    %cst_35 = arith.constant 3.200000e+01 : f32
    %93 = vector.broadcast %cst_35 : f32 to vector<64x1xf32>
    %94 = arith.divf %92, %93 : vector<64x1xf32>
    %cst_36 = arith.constant 9.99999974E-6 : f32
    %95 = vector.broadcast %cst_36 : f32 to vector<64x1xf32>
    %96 = arith.addf %94, %95 : vector<64x1xf32>
    %97 = math.rsqrt %96 : vector<64x1xf32>
    %98 = vector.broadcast %97 : vector<64x1xf32> to vector<64x32xf32>
    %99 = arith.mulf %89, %98 : vector<64x32xf32>
    %100 = vector.broadcast %4 : vector<1x32xf32> to vector<64x32xf32>
    %101 = arith.mulf %99, %100 : vector<64x32xf32>
    %102 = vector.broadcast %5 : vector<1x32xf32> to vector<64x32xf32>
    %103 = arith.addf %101, %102 : vector<64x32xf32>
    %104 = arith.truncf %103 : vector<64x32xf32> to vector<64x32xbf16>
    %c0_37 = arith.constant 0 : index
    %c0_38 = arith.constant 0 : index
    %105 = vector.load %arg4[%c0_37, %c0_38] : memref<32x32xbf16, #tpu.memory_space<vmem>>, vector<32x32xbf16>
    %cst_39 = arith.constant dense<0.000000e+00> : vector<64x32xf32>
    %106 = tpu.matmul %104, %105, %cst_39 {dimension_numbers = #tpu.dot_dimension_numbers<[1], [0], [0], [1], [0, 0, 1, 1], [], []>} : vector<64x32xbf16>, vector<32x32xbf16>, vector<64x32xf32> -> vector<64x32xf32>
    %107 = vector.broadcast %6 : vector<1x32xf32> to vector<64x32xf32>
    %108 = arith.addf %106, %107 : vector<64x32xf32>
    %cst_40 = arith.constant 5.000000e-01 : f32
    %109 = vector.broadcast %cst_40 : f32 to vector<64x32xf32>
    %110 = arith.mulf %109, %108 : vector<64x32xf32>
    %cst_41 = arith.constant 4.471500e-02 : f32
    %111 = vector.broadcast %cst_41 : f32 to vector<64x32xf32>
    %112 = arith.mulf %111, %108 : vector<64x32xf32>
    %113 = arith.mulf %112, %108 : vector<64x32xf32>
    %114 = arith.mulf %113, %108 : vector<64x32xf32>
    %115 = arith.addf %108, %114 : vector<64x32xf32>
    %cst_42 = arith.constant 0.797884583 : f32
    %116 = vector.broadcast %cst_42 : f32 to vector<64x32xf32>
    %117 = arith.mulf %116, %115 : vector<64x32xf32>
    %118 = math.tanh %117 : vector<64x32xf32>
    %cst_43 = arith.constant 1.000000e+00 : f32
    %119 = vector.broadcast %cst_43 : f32 to vector<64x32xf32>
    %120 = arith.addf %119, %118 : vector<64x32xf32>
    %121 = arith.mulf %110, %120 : vector<64x32xf32>
    %122 = arith.truncf %121 : vector<64x32xf32> to vector<64x32xbf16>
    %c0_44 = arith.constant 0 : index
    %c0_45 = arith.constant 0 : index
    %123 = vector.load %arg5[%c0_44, %c0_45] : memref<32x32xbf16, #tpu.memory_space<vmem>>, vector<32x32xbf16>
    %cst_46 = arith.constant dense<0.000000e+00> : vector<64x32xf32>
    %124 = tpu.matmul %122, %123, %cst_46 {dimension_numbers = #tpu.dot_dimension_numbers<[1], [0], [0], [1], [0, 0, 1, 1], [], []>} : vector<64x32xbf16>, vector<32x32xbf16>, vector<64x32xf32> -> vector<64x32xf32>
    %125 = vector.broadcast %7 : vector<1x32xf32> to vector<64x32xf32>
    %126 = arith.addf %124, %125 : vector<64x32xf32>
    %127 = arith.addf %83, %126 : vector<64x32xf32>
    %128 = vector.shape_cast %127 : vector<64x32xf32> to vector<1x64x32xf32>
    %129 = arith.truncf %128 : vector<1x64x32xf32> to vector<1x64x32xbf16>
    %c0_47 = arith.constant 0 : index
    %c0_48 = arith.constant 0 : index
    %c0_49 = arith.constant 0 : index
    %130 = vector.load %arg7[%c0_47, %c0_48, %c0_49] : memref<1x64x32xbf16, #tpu.memory_space<vmem>>, vector<1x64x32xbf16>
    tpu.vector_store %arg7[%c0_47, %c0_48, %c0_49], %129 {strides = array<i32>} : memref<1x64x32xbf16, #tpu.memory_space<vmem>>, vector<1x64x32xbf16>,
    %131 = tpu.transpose %128, [0, 2, 1] : vector<1x64x32xf32> -> vector<1x32x64xf32>
    %c0_50 = arith.constant 0 : index
    %c0_51 = arith.constant 0 : index
    %c0_52 = arith.constant 0 : index
    %132 = vector.load %arg8[%c0_50, %c0_51, %c0_52] : memref<1x32x64xf32, #tpu.memory_space<vmem>>, vector<1x32x64xf32>
    tpu.vector_store %arg8[%c0_50, %c0_51, %c0_52], %131 {strides = array<i32>} : memref<1x32x64xf32, #tpu.memory_space<vmem>>, vector<1x32x64xf32>,
    return
  }
  func.func @transform_0(%arg0: i32) -> (i32, i32, i32) {
    %c0_i32 = arith.constant 0 : i32
    %c0_i32_0 = arith.constant 0 : i32
    %c0_i32_1 = arith.constant 0 : i32
    return %arg0, %c0_i32, %c0_i32_0 : i32, i32, i32
  }
  func.func @transform_1(%arg0: i32) -> (i32, i32) {
    %c0_i32 = arith.constant 0 : i32
    %c0_i32_0 = arith.constant 0 : i32
    %c0_i32_1 = arith.constant 0 : i32
    return %c0_i32, %c0_i32_0 : i32, i32
  }
  func.func @transform_2(%arg0: i32) -> (i32, i32) {
    %c0_i32 = arith.constant 0 : i32
    %c0_i32_0 = arith.constant 0 : i32
    %c0_i32_1 = arith.constant 0 : i32
    return %c0_i32, %c0_i32_0 : i32, i32
  }
  func.func @transform_3(%arg0: i32) -> (i32, i32) {
    %c0_i32 = arith.constant 0 : i32
    %c0_i32_0 = arith.constant 0 : i32
    %c0_i32_1 = arith.constant 0 : i32
    return %c0_i32, %c0_i32_0 : i32, i32
  }
  func.func @transform_4(%arg0: i32) -> (i32, i32) {
    %c0_i32 = arith.constant 0 : i32
    %c0_i32_0 = arith.constant 0 : i32
    %c0_i32_1 = arith.constant 0 : i32
    return %c0_i32, %c0_i32_0 : i32, i32
  }
  func.func @transform_5(%arg0: i32) -> (i32, i32) {
    %c0_i32 = arith.constant 0 : i32
    %c0_i32_0 = arith.constant 0 : i32
    %c0_i32_1 = arith.constant 0 : i32
    return %c0_i32, %c0_i32_0 : i32, i32
  }
  func.func @transform_6(%arg0: i32) -> (i32, i32, i32) {
    %c0_i32 = arith.constant 0 : i32
    %c0_i32_0 = arith.constant 0 : i32
    %c0_i32_1 = arith.constant 0 : i32
    return %arg0, %c0_i32, %c0_i32_0 : i32, i32, i32
  }
  func.func @transform_7(%arg0: i32) -> (i32, i32, i32) {
    %c0_i32 = arith.constant 0 : i32
    %c0_i32_0 = arith.constant 0 : i32
    %c0_i32_1 = arith.constant 0 : i32
    return %arg0, %c0_i32, %c0_i32_0 : i32, i32, i32
  }
}

module attributes {stable_mosaic.version = 11 : i64} {
  func.func @_matmul_bias_kernel(%arg0: i32, %arg1: memref<32x288xbf16, #tpu.memory_space<vmem>>, %arg2: memref<288x32xbf16, #tpu.memory_space<vmem>>, %arg3: memref<1x32xf32, #tpu.memory_space<vmem>>, %arg4: memref<32x32xbf16, #tpu.memory_space<vmem>>) attributes {dimension_semantics = [#tpu.dimension_semantics<parallel>], iteration_bounds = array<i64: 1>, scalar_prefetch = 0 : i64, scratch_operands = 0 : i64, tpu.core_type = #tpu.core_type<tc>, window_params = [{transform_indices = @transform_0, window_bounds = array<i64: 32, 288>}, {pipeline_mode = #tpu.pipeline_mode<synchronous>, transform_indices = @transform_1, window_bounds = array<i64: 288, 32>}, {pipeline_mode = #tpu.pipeline_mode<synchronous>, transform_indices = @transform_2, window_bounds = array<i64: 1, 32>}, {transform_indices = @transform_3, window_bounds = array<i64: 32, 32>}]} {
    %c0 = arith.constant 0 : index
    %c0_0 = arith.constant 0 : index
    %0 = vector.load %arg1[%c0, %c0_0] : memref<32x288xbf16, #tpu.memory_space<vmem>>, vector<32x288xbf16>
    %c0_1 = arith.constant 0 : index
    %c0_2 = arith.constant 0 : index
    %1 = vector.load %arg2[%c0_1, %c0_2] : memref<288x32xbf16, #tpu.memory_space<vmem>>, vector<288x32xbf16>
    %cst = arith.constant dense<0.000000e+00> : vector<32x32xf32>
    %2 = tpu.matmul %0, %1, %cst {dimension_numbers = #tpu.dot_dimension_numbers<[1], [0], [0], [1], [0, 0, 1, 1], [], []>} : vector<32x288xbf16>, vector<288x32xbf16>, vector<32x32xf32> -> vector<32x32xf32>
    %c0_3 = arith.constant 0 : index
    %c0_4 = arith.constant 0 : index
    %3 = vector.load %arg3[%c0_3, %c0_4] : memref<1x32xf32, #tpu.memory_space<vmem>>, vector<1x32xf32>
    %4 = vector.broadcast %3 : vector<1x32xf32> to vector<32x32xf32>
    %5 = arith.addf %2, %4 : vector<32x32xf32>
    %6 = arith.truncf %5 : vector<32x32xf32> to vector<32x32xbf16>
    %c0_5 = arith.constant 0 : index
    %c0_6 = arith.constant 0 : index
    %7 = vector.load %arg4[%c0_5, %c0_6] : memref<32x32xbf16, #tpu.memory_space<vmem>>, vector<32x32xbf16>
    tpu.vector_store %arg4[%c0_5, %c0_6], %6 {strides = array<i32>} : memref<32x32xbf16, #tpu.memory_space<vmem>>, vector<32x32xbf16>,
    return
  }
  func.func @transform_0(%arg0: i32) -> (i32, i32) {
    %c0_i32 = arith.constant 0 : i32
    %c0_i32_0 = arith.constant 0 : i32
    return %arg0, %c0_i32 : i32, i32
  }
  func.func @transform_1(%arg0: i32) -> (i32, i32) {
    %c0_i32 = arith.constant 0 : i32
    %c0_i32_0 = arith.constant 0 : i32
    %c0_i32_1 = arith.constant 0 : i32
    return %c0_i32, %c0_i32_0 : i32, i32
  }
  func.func @transform_2(%arg0: i32) -> (i32, i32) {
    %c0_i32 = arith.constant 0 : i32
    %c0_i32_0 = arith.constant 0 : i32
    %c0_i32_1 = arith.constant 0 : i32
    return %c0_i32, %c0_i32_0 : i32, i32
  }
  func.func @transform_3(%arg0: i32) -> (i32, i32) {
    %c0_i32 = arith.constant 0 : i32
    %c0_i32_0 = arith.constant 0 : i32
    return %arg0, %c0_i32 : i32, i32
  }
}

module attributes {stable_mosaic.version = 11 : i64} {
  func.func @_spatial_transformer_kernel(%arg0: i32, %arg1: memref<1x16x32xbf16, #tpu.memory_space<vmem>>, %arg2: memref<32x96xbf16, #tpu.memory_space<vmem>>, %arg3: memref<32x32xbf16, #tpu.memory_space<vmem>>, %arg4: memref<32x32xbf16, #tpu.memory_space<vmem>>, %arg5: memref<32x32xbf16, #tpu.memory_space<vmem>>, %arg6: memref<8x32xf32, #tpu.memory_space<vmem>>, %arg7: memref<1x16x32xbf16, #tpu.memory_space<vmem>>, %arg8: memref<1x32x16xf32, #tpu.memory_space<vmem>>, %arg9: memref<1x16x32xbf16, #tpu.memory_space<vmem>>, %arg10: memref<1x16x32xbf16, #tpu.memory_space<vmem>>) attributes {dimension_semantics = [#tpu.dimension_semantics<parallel>], iteration_bounds = array<i64: 2>, scalar_prefetch = 0 : i64, scratch_operands = 2 : i64, tpu.core_type = #tpu.core_type<tc>, window_params = [{transform_indices = @transform_0, window_bounds = array<i64: 1, 16, 32>}, {pipeline_mode = #tpu.pipeline_mode<synchronous>, transform_indices = @transform_1, window_bounds = array<i64: 32, 96>}, {pipeline_mode = #tpu.pipeline_mode<synchronous>, transform_indices = @transform_2, window_bounds = array<i64: 32, 32>}, {pipeline_mode = #tpu.pipeline_mode<synchronous>, transform_indices = @transform_3, window_bounds = array<i64: 32, 32>}, {pipeline_mode = #tpu.pipeline_mode<synchronous>, transform_indices = @transform_4, window_bounds = array<i64: 32, 32>}, {pipeline_mode = #tpu.pipeline_mode<synchronous>, transform_indices = @transform_5, window_bounds = array<i64: 8, 32>}, {transform_indices = @transform_6, window_bounds = array<i64: 1, 16, 32>}, {transform_indices = @transform_7, window_bounds = array<i64: 1, 32, 16>}]} {
    %c0 = arith.constant 0 : index
    %c0_0 = arith.constant 0 : index
    %0 = vector.load %arg6[%c0, %c0_0] : memref<8x32xf32, #tpu.memory_space<vmem>>, vector<8x32xf32>
    %1 = vector.extract_strided_slice %0 {offsets = [0, 0], sizes = [1, 32], strides = [1, 1]} : vector<8x32xf32> to vector<1x32xf32>
    %2 = vector.extract_strided_slice %0 {offsets = [1, 0], sizes = [1, 32], strides = [1, 1]} : vector<8x32xf32> to vector<1x32xf32>
    %3 = vector.extract_strided_slice %0 {offsets = [2, 0], sizes = [1, 32], strides = [1, 1]} : vector<8x32xf32> to vector<1x32xf32>
    %4 = vector.extract_strided_slice %0 {offsets = [3, 0], sizes = [1, 32], strides = [1, 1]} : vector<8x32xf32> to vector<1x32xf32>
    %5 = vector.extract_strided_slice %0 {offsets = [4, 0], sizes = [1, 32], strides = [1, 1]} : vector<8x32xf32> to vector<1x32xf32>
    %6 = vector.extract_strided_slice %0 {offsets = [5, 0], sizes = [1, 32], strides = [1, 1]} : vector<8x32xf32> to vector<1x32xf32>
    %7 = vector.extract_strided_slice %0 {offsets = [6, 0], sizes = [1, 32], strides = [1, 1]} : vector<8x32xf32> to vector<1x32xf32>
    %c0_1 = arith.constant 0 : index
    %c0_2 = arith.constant 0 : index
    %c0_3 = arith.constant 0 : index
    %8 = vector.load %arg1[%c0_1, %c0_2, %c0_3] : memref<1x16x32xbf16, #tpu.memory_space<vmem>>, vector<1x16x32xbf16>
    %9 = arith.extf %8 : vector<1x16x32xbf16> to vector<1x16x32xf32>
    %10 = vector.shape_cast %9 : vector<1x16x32xf32> to vector<16x32xf32>
    %cst = arith.constant dense<0.000000e+00> : vector<16xf32>
    %11 = vector.multi_reduction <add>, %10, %cst [1] : vector<16x32xf32> to vector<16xf32>
    %12 = vector.shape_cast %11 : vector<16xf32> to vector<16x1xf32>
    %cst_4 = arith.constant 3.200000e+01 : f32
    %13 = vector.broadcast %cst_4 : f32 to vector<16x1xf32>
    %14 = arith.divf %12, %13 : vector<16x1xf32>
    %15 = vector.broadcast %14 : vector<16x1xf32> to vector<16x32xf32>
    %16 = arith.subf %10, %15 : vector<16x32xf32>
    %17 = arith.mulf %16, %16 : vector<16x32xf32>
    %cst_5 = arith.constant dense<0.000000e+00> : vector<16xf32>
    %18 = vector.multi_reduction <add>, %17, %cst_5 [1] : vector<16x32xf32> to vector<16xf32>
    %19 = vector.shape_cast %18 : vector<16xf32> to vector<16x1xf32>
    %cst_6 = arith.constant 3.200000e+01 : f32
    %20 = vector.broadcast %cst_6 : f32 to vector<16x1xf32>
    %21 = arith.divf %19, %20 : vector<16x1xf32>
    %cst_7 = arith.constant 9.99999974E-6 : f32
    %22 = vector.broadcast %cst_7 : f32 to vector<16x1xf32>
    %23 = arith.addf %21, %22 : vector<16x1xf32>
    %24 = math.rsqrt %23 : vector<16x1xf32>
    %25 = vector.broadcast %24 : vector<16x1xf32> to vector<16x32xf32>
    %26 = arith.mulf %16, %25 : vector<16x32xf32>
    %27 = vector.broadcast %1 : vector<1x32xf32> to vector<16x32xf32>
    %28 = arith.mulf %26, %27 : vector<16x32xf32>
    %29 = vector.broadcast %2 : vector<1x32xf32> to vector<16x32xf32>
    %30 = arith.addf %28, %29 : vector<16x32xf32>
    %31 = arith.truncf %30 : vector<16x32xf32> to vector<16x32xbf16>
    %c0_8 = arith.constant 0 : index
    %c0_9 = arith.constant 0 : index
    %32 = vector.load %arg2[%c0_8, %c0_9] : memref<32x96xbf16, #tpu.memory_space<vmem>>, vector<32x96xbf16>
    %cst_10 = arith.constant dense<0.000000e+00> : vector<16x96xf32>
    %33 = tpu.matmul %31, %32, %cst_10 {dimension_numbers = #tpu.dot_dimension_numbers<[1], [0], [0], [1], [0, 0, 1, 1], [], []>} : vector<16x32xbf16>, vector<32x96xbf16>, vector<16x96xf32> -> vector<16x96xf32>
    %34 = vector.extract_strided_slice %33 {offsets = [0, 0], sizes = [16, 32], strides = [1, 1]} : vector<16x96xf32> to vector<16x32xf32>
    %35 = vector.extract_strided_slice %33 {offsets = [0, 32], sizes = [16, 32], strides = [1, 1]} : vector<16x96xf32> to vector<16x32xf32>
    %36 = vector.extract_strided_slice %33 {offsets = [0, 64], sizes = [16, 32], strides = [1, 1]} : vector<16x96xf32> to vector<16x32xf32>
    %cst_11 = arith.constant 0.176776692 : f32
    %37 = vector.broadcast %cst_11 : f32 to vector<16x32xf32>
    %38 = arith.mulf %34, %37 : vector<16x32xf32>
    %39 = arith.truncf %38 : vector<16x32xf32> to vector<16x32xbf16>
    %40 = vector.shape_cast %39 : vector<16x32xbf16> to vector<1x16x32xbf16>
    %41 = arith.truncf %35 : vector<16x32xf32> to vector<16x32xbf16>
    %42 = vector.shape_cast %41 : vector<16x32xbf16> to vector<1x16x32xbf16>
    %43 = arith.truncf %36 : vector<16x32xf32> to vector<16x32xbf16>
    %44 = vector.shape_cast %43 : vector<16x32xbf16> to vector<1x16x32xbf16>
    %cst_12 = arith.constant 0xFF800000 : f32
    %45 = vector.broadcast %cst_12 : f32 to vector<1x16x1xf32>
    %cst_13 = arith.constant 0.000000e+00 : f32
    %46 = vector.broadcast %cst_13 : f32 to vector<1x16x1xf32>
    %cst_14 = arith.constant 0.000000e+00 : f32
    %47 = vector.broadcast %cst_14 : f32 to vector<1x16x32xf32>
    %c0_15 = arith.constant 0 : index
    %c0_16 = arith.constant 0 : index
    %c0_17 = arith.constant 0 : index
    %48 = vector.load %arg9[%c0_15, %c0_16, %c0_17] : memref<1x16x32xbf16, #tpu.memory_space<vmem>>, vector<1x16x32xbf16>
    tpu.vector_store %arg9[%c0_15, %c0_16, %c0_17], %42 {strides = array<i32>} : memref<1x16x32xbf16, #tpu.memory_space<vmem>>, vector<1x16x32xbf16>,
    %c0_18 = arith.constant 0 : index
    %c0_19 = arith.constant 0 : index
    %c0_20 = arith.constant 0 : index
    %49 = vector.load %arg10[%c0_18, %c0_19, %c0_20] : memref<1x16x32xbf16, #tpu.memory_space<vmem>>, vector<1x16x32xbf16>
    tpu.vector_store %arg10[%c0_18, %c0_19, %c0_20], %44 {strides = array<i32>} : memref<1x16x32xbf16, #tpu.memory_space<vmem>>, vector<1x16x32xbf16>,
    %c0_i32 = arith.constant 0 : i32
    %c16_i32 = arith.constant 16 : i32
    %50 = arith.muli %c0_i32, %c16_i32 : i32
    %51 = tpu.assume_multiple %50, 16 : i32
    %c0_21 = arith.constant 0 : index
    %52 = arith.index_cast %51 : i32 to index
    %c0_22 = arith.constant 0 : index
    %53 = vector.load %arg9[%c0_21, %52, %c0_22] : memref<1x16x32xbf16, #tpu.memory_space<vmem>>, vector<1x16x32xbf16>
    %c0_23 = arith.constant 0 : index
    %54 = arith.index_cast %51 : i32 to index
    %c0_24 = arith.constant 0 : index
    %55 = vector.load %arg10[%c0_23, %54, %c0_24] : memref<1x16x32xbf16, #tpu.memory_space<vmem>>, vector<1x16x32xbf16>
    "tpu.trace_start"() <{level = 10 : i32, message = "bqd,bkd->bqk"}> : () -> ()
    %cst_25 = arith.constant dense<0.000000e+00> : vector<1x16x16xf32>
    %56 = tpu.matmul %40, %53, %cst_25 {dimension_numbers = #tpu.dot_dimension_numbers<[2], [2], [1], [1], [0, 0, 0, 1, 1, 1], [0], [0]>} : vector<1x16x32xbf16>, vector<1x16x32xbf16>, vector<1x16x16xf32> -> vector<1x16x16xf32>
    "tpu.trace_stop"() : () -> ()
    %cst_26 = arith.constant dense<0xFF800000> : vector<1x16xf32>
    %57 = vector.multi_reduction <maximumf>, %56, %cst_26 [2] : vector<1x16x16xf32> to vector<1x16xf32>
    %58 = vector.shape_cast %57 : vector<1x16xf32> to vector<1x16x1xf32>
    %59 = arith.maximumf %45, %58 : vector<1x16x1xf32>
    %60 = arith.subf %45, %59 : vector<1x16x1xf32>
    %61 = math.exp %60 : vector<1x16x1xf32>
    %62 = vector.broadcast %59 : vector<1x16x1xf32> to vector<1x16x16xf32>
    %63 = arith.subf %56, %62 : vector<1x16x16xf32>
    %64 = math.exp %63 : vector<1x16x16xf32>
    %65 = arith.mulf %61, %46 : vector<1x16x1xf32>
    %cst_27 = arith.constant dense<0.000000e+00> : vector<1x16xf32>
    %66 = vector.multi_reduction <add>, %64, %cst_27 [2] : vector<1x16x16xf32> to vector<1x16xf32>
    %67 = vector.shape_cast %66 : vector<1x16xf32> to vector<1x16x1xf32>
    %68 = arith.addf %65, %67 : vector<1x16x1xf32>
    %69 = vector.broadcast %61 : vector<1x16x1xf32> to vector<1x16x32xf32>
    %70 = arith.mulf %69, %47 : vector<1x16x32xf32>
    %71 = arith.truncf %64 : vector<1x16x16xf32> to vector<1x16x16xbf16>
    "tpu.trace_start"() <{level = 10 : i32, message = "bqk,bkd->bqd"}> : () -> ()
    %cst_28 = arith.constant dense<0.000000e+00> : vector<1x16x32xf32>
    %72 = tpu.matmul %71, %55, %cst_28 {dimension_numbers = #tpu.dot_dimension_numbers<[2], [1], [1], [2], [0, 0, 0, 1, 1, 2], [0], [0]>} : vector<1x16x16xbf16>, vector<1x16x32xbf16>, vector<1x16x32xf32> -> vector<1x16x32xf32>
    "tpu.trace_stop"() : () -> ()
    %73 = arith.addf %70, %72 : vector<1x16x32xf32>
    %c1_i32 = arith.constant 1 : i32
    %74 = tpu.reciprocal %68 {approx = true} : vector<1x16x1xf32> -> vector<1x16x1xf32>
    %75 = vector.broadcast %74 : vector<1x16x1xf32> to vector<1x16x32xf32>
    %76 = arith.mulf %73, %75 : vector<1x16x32xf32>
    %77 = vector.shape_cast %76 : vector<1x16x32xf32> to vector<16x32xf32>
    %78 = arith.truncf %77 : vector<16x32xf32> to vector<16x32xbf16>
    %c0_29 = arith.constant 0 : index
    %c0_30 = arith.constant 0 : index
    %79 = vector.load %arg3[%c0_29, %c0_30] : memref<32x32xbf16, #tpu.memory_space<vmem>>, vector<32x32xbf16>
    %cst_31 = arith.constant dense<0.000000e+00> : vector<16x32xf32>
    %80 = tpu.matmul %78, %79, %cst_31 {dimension_numbers = #tpu.dot_dimension_numbers<[1], [0], [0], [1], [0, 0, 1, 1], [], []>} : vector<16x32xbf16>, vector<32x32xbf16>, vector<16x32xf32> -> vector<16x32xf32>
    %81 = vector.broadcast %3 : vector<1x32xf32> to vector<16x32xf32>
    %82 = arith.addf %80, %81 : vector<16x32xf32>
    %83 = arith.addf %36, %82 : vector<16x32xf32>
    %cst_32 = arith.constant dense<0.000000e+00> : vector<16xf32>
    %84 = vector.multi_reduction <add>, %83, %cst_32 [1] : vector<16x32xf32> to vector<16xf32>
    %85 = vector.shape_cast %84 : vector<16xf32> to vector<16x1xf32>
    %cst_33 = arith.constant 3.200000e+01 : f32
    %86 = vector.broadcast %cst_33 : f32 to vector<16x1xf32>
    %87 = arith.divf %85, %86 : vector<16x1xf32>
    %88 = vector.broadcast %87 : vector<16x1xf32> to vector<16x32xf32>
    %89 = arith.subf %83, %88 : vector<16x32xf32>
    %90 = arith.mulf %89, %89 : vector<16x32xf32>
    %cst_34 = arith.constant dense<0.000000e+00> : vector<16xf32>
    %91 = vector.multi_reduction <add>, %90, %cst_34 [1] : vector<16x32xf32> to vector<16xf32>
    %92 = vector.shape_cast %91 : vector<16xf32> to vector<16x1xf32>
    %cst_35 = arith.constant 3.200000e+01 : f32
    %93 = vector.broadcast %cst_35 : f32 to vector<16x1xf32>
    %94 = arith.divf %92, %93 : vector<16x1xf32>
    %cst_36 = arith.constant 9.99999974E-6 : f32
    %95 = vector.broadcast %cst_36 : f32 to vector<16x1xf32>
    %96 = arith.addf %94, %95 : vector<16x1xf32>
    %97 = math.rsqrt %96 : vector<16x1xf32>
    %98 = vector.broadcast %97 : vector<16x1xf32> to vector<16x32xf32>
    %99 = arith.mulf %89, %98 : vector<16x32xf32>
    %100 = vector.broadcast %4 : vector<1x32xf32> to vector<16x32xf32>
    %101 = arith.mulf %99, %100 : vector<16x32xf32>
    %102 = vector.broadcast %5 : vector<1x32xf32> to vector<16x32xf32>
    %103 = arith.addf %101, %102 : vector<16x32xf32>
    %104 = arith.truncf %103 : vector<16x32xf32> to vector<16x32xbf16>
    %c0_37 = arith.constant 0 : index
    %c0_38 = arith.constant 0 : index
    %105 = vector.load %arg4[%c0_37, %c0_38] : memref<32x32xbf16, #tpu.memory_space<vmem>>, vector<32x32xbf16>
    %cst_39 = arith.constant dense<0.000000e+00> : vector<16x32xf32>
    %106 = tpu.matmul %104, %105, %cst_39 {dimension_numbers = #tpu.dot_dimension_numbers<[1], [0], [0], [1], [0, 0, 1, 1], [], []>} : vector<16x32xbf16>, vector<32x32xbf16>, vector<16x32xf32> -> vector<16x32xf32>
    %107 = vector.broadcast %6 : vector<1x32xf32> to vector<16x32xf32>
    %108 = arith.addf %106, %107 : vector<16x32xf32>
    %cst_40 = arith.constant 5.000000e-01 : f32
    %109 = vector.broadcast %cst_40 : f32 to vector<16x32xf32>
    %110 = arith.mulf %109, %108 : vector<16x32xf32>
    %cst_41 = arith.constant 4.471500e-02 : f32
    %111 = vector.broadcast %cst_41 : f32 to vector<16x32xf32>
    %112 = arith.mulf %111, %108 : vector<16x32xf32>
    %113 = arith.mulf %112, %108 : vector<16x32xf32>
    %114 = arith.mulf %113, %108 : vector<16x32xf32>
    %115 = arith.addf %108, %114 : vector<16x32xf32>
    %cst_42 = arith.constant 0.797884583 : f32
    %116 = vector.broadcast %cst_42 : f32 to vector<16x32xf32>
    %117 = arith.mulf %116, %115 : vector<16x32xf32>
    %118 = math.tanh %117 : vector<16x32xf32>
    %cst_43 = arith.constant 1.000000e+00 : f32
    %119 = vector.broadcast %cst_43 : f32 to vector<16x32xf32>
    %120 = arith.addf %119, %118 : vector<16x32xf32>
    %121 = arith.mulf %110, %120 : vector<16x32xf32>
    %122 = arith.truncf %121 : vector<16x32xf32> to vector<16x32xbf16>
    %c0_44 = arith.constant 0 : index
    %c0_45 = arith.constant 0 : index
    %123 = vector.load %arg5[%c0_44, %c0_45] : memref<32x32xbf16, #tpu.memory_space<vmem>>, vector<32x32xbf16>
    %cst_46 = arith.constant dense<0.000000e+00> : vector<16x32xf32>
    %124 = tpu.matmul %122, %123, %cst_46 {dimension_numbers = #tpu.dot_dimension_numbers<[1], [0], [0], [1], [0, 0, 1, 1], [], []>} : vector<16x32xbf16>, vector<32x32xbf16>, vector<16x32xf32> -> vector<16x32xf32>
    %125 = vector.broadcast %7 : vector<1x32xf32> to vector<16x32xf32>
    %126 = arith.addf %124, %125 : vector<16x32xf32>
    %127 = arith.addf %83, %126 : vector<16x32xf32>
    %128 = vector.shape_cast %127 : vector<16x32xf32> to vector<1x16x32xf32>
    %129 = arith.truncf %128 : vector<1x16x32xf32> to vector<1x16x32xbf16>
    %c0_47 = arith.constant 0 : index
    %c0_48 = arith.constant 0 : index
    %c0_49 = arith.constant 0 : index
    %130 = vector.load %arg7[%c0_47, %c0_48, %c0_49] : memref<1x16x32xbf16, #tpu.memory_space<vmem>>, vector<1x16x32xbf16>
    tpu.vector_store %arg7[%c0_47, %c0_48, %c0_49], %129 {strides = array<i32>} : memref<1x16x32xbf16, #tpu.memory_space<vmem>>, vector<1x16x32xbf16>,
    %131 = tpu.transpose %128, [0, 2, 1] : vector<1x16x32xf32> -> vector<1x32x16xf32>
    %c0_50 = arith.constant 0 : index
    %c0_51 = arith.constant 0 : index
    %c0_52 = arith.constant 0 : index
    %132 = vector.load %arg8[%c0_50, %c0_51, %c0_52] : memref<1x32x16xf32, #tpu.memory_space<vmem>>, vector<1x32x16xf32>
    tpu.vector_store %arg8[%c0_50, %c0_51, %c0_52], %131 {strides = array<i32>} : memref<1x32x16xf32, #tpu.memory_space<vmem>>, vector<1x32x16xf32>,
    return
  }
  func.func @transform_0(%arg0: i32) -> (i32, i32, i32) {
    %c0_i32 = arith.constant 0 : i32
    %c0_i32_0 = arith.constant 0 : i32
    %c0_i32_1 = arith.constant 0 : i32
    return %arg0, %c0_i32, %c0_i32_0 : i32, i32, i32
  }
  func.func @transform_1(%arg0: i32) -> (i32, i32) {
    %c0_i32 = arith.constant 0 : i32
    %c0_i32_0 = arith.constant 0 : i32
    %c0_i32_1 = arith.constant 0 : i32
    return %c0_i32, %c0_i32_0 : i32, i32
  }
  func.func @transform_2(%arg0: i32) -> (i32, i32) {
    %c0_i32 = arith.constant 0 : i32
    %c0_i32_0 = arith.constant 0 : i32
    %c0_i32_1 = arith.constant 0 : i32
    return %c0_i32, %c0_i32_0 : i32, i32
  }
  func.func @transform_3(%arg0: i32) -> (i32, i32) {
    %c0_i32 = arith.constant 0 : i32
    %c0_i32_0 = arith.constant 0 : i32
    %c0_i32_1 = arith.constant 0 : i32
    return %c0_i32, %c0_i32_0 : i32, i32
  }
  func.func @transform_4(%arg0: i32) -> (i32, i32) {
    %c0_i32 = arith.constant 0 : i32
    %c0_i32_0 = arith.constant 0 : i32
    %c0_i32_1 = arith.constant 0 : i32
    return %c0_i32, %c0_i32_0 : i32, i32
  }
  func.func @transform_5(%arg0: i32) -> (i32, i32) {
    %c0_i32 = arith.constant 0 : i32
    %c0_i32_0 = arith.constant 0 : i32
    %c0_i32_1 = arith.constant 0 : i32
    return %c0_i32, %c0_i32_0 : i32, i32
  }
  func.func @transform_6(%arg0: i32) -> (i32, i32, i32) {
    %c0_i32 = arith.constant 0 : i32
    %c0_i32_0 = arith.constant 0 : i32
    %c0_i32_1 = arith.constant 0 : i32
    return %arg0, %c0_i32, %c0_i32_0 : i32, i32, i32
  }
  func.func @transform_7(%arg0: i32) -> (i32, i32, i32) {
    %c0_i32 = arith.constant 0 : i32
    %c0_i32_0 = arith.constant 0 : i32
    %c0_i32_1 = arith.constant 0 : i32
    return %arg0, %c0_i32, %c0_i32_0 : i32, i32, i32
  }
}

module attributes {stable_mosaic.version = 11 : i64} {
  func.func @_matmul_bias_kernel(%arg0: i32, %arg1: memref<16x288xbf16, #tpu.memory_space<vmem>>, %arg2: memref<288x64xbf16, #tpu.memory_space<vmem>>, %arg3: memref<1x64xf32, #tpu.memory_space<vmem>>, %arg4: memref<16x64xf32, #tpu.memory_space<vmem>>) attributes {dimension_semantics = [#tpu.dimension_semantics<parallel>], iteration_bounds = array<i64: 1>, scalar_prefetch = 0 : i64, scratch_operands = 0 : i64, tpu.core_type = #tpu.core_type<tc>, window_params = [{transform_indices = @transform_0, window_bounds = array<i64: 16, 288>}, {pipeline_mode = #tpu.pipeline_mode<synchronous>, transform_indices = @transform_1, window_bounds = array<i64: 288, 64>}, {pipeline_mode = #tpu.pipeline_mode<synchronous>, transform_indices = @transform_2, window_bounds = array<i64: 1, 64>}, {transform_indices = @transform_3, window_bounds = array<i64: 16, 64>}]} {
    %c0 = arith.constant 0 : index
    %c0_0 = arith.constant 0 : index
    %0 = vector.load %arg1[%c0, %c0_0] : memref<16x288xbf16, #tpu.memory_space<vmem>>, vector<16x288xbf16>
    %c0_1 = arith.constant 0 : index
    %c0_2 = arith.constant 0 : index
    %1 = vector.load %arg2[%c0_1, %c0_2] : memref<288x64xbf16, #tpu.memory_space<vmem>>, vector<288x64xbf16>
    %cst = arith.constant dense<0.000000e+00> : vector<16x64xf32>
    %2 = tpu.matmul %0, %1, %cst {dimension_numbers = #tpu.dot_dimension_numbers<[1], [0], [0], [1], [0, 0, 1, 1], [], []>} : vector<16x288xbf16>, vector<288x64xbf16>, vector<16x64xf32> -> vector<16x64xf32>
    %c0_3 = arith.constant 0 : index
    %c0_4 = arith.constant 0 : index
    %3 = vector.load %arg3[%c0_3, %c0_4] : memref<1x64xf32, #tpu.memory_space<vmem>>, vector<1x64xf32>
    %4 = vector.broadcast %3 : vector<1x64xf32> to vector<16x64xf32>
    %5 = arith.addf %2, %4 : vector<16x64xf32>
    %c0_5 = arith.constant 0 : index
    %c0_6 = arith.constant 0 : index
    %6 = vector.load %arg4[%c0_5, %c0_6] : memref<16x64xf32, #tpu.memory_space<vmem>>, vector<16x64xf32>
    tpu.vector_store %arg4[%c0_5, %c0_6], %5 {strides = array<i32>} : memref<16x64xf32, #tpu.memory_space<vmem>>, vector<16x64xf32>,
    return
  }
  func.func @transform_0(%arg0: i32) -> (i32, i32) {
    %c0_i32 = arith.constant 0 : i32
    %c0_i32_0 = arith.constant 0 : i32
    return %arg0, %c0_i32 : i32, i32
  }
  func.func @transform_1(%arg0: i32) -> (i32, i32) {
    %c0_i32 = arith.constant 0 : i32
    %c0_i32_0 = arith.constant 0 : i32
    %c0_i32_1 = arith.constant 0 : i32
    return %c0_i32, %c0_i32_0 : i32, i32
  }
  func.func @transform_2(%arg0: i32) -> (i32, i32) {
    %c0_i32 = arith.constant 0 : i32
    %c0_i32_0 = arith.constant 0 : i32
    %c0_i32_1 = arith.constant 0 : i32
    return %c0_i32, %c0_i32_0 : i32, i32
  }
  func.func @transform_3(%arg0: i32) -> (i32, i32) {
    %c0_i32 = arith.constant 0 : i32
    %c0_i32_0 = arith.constant 0 : i32
    return %arg0, %c0_i32 : i32, i32
  }
}

</mosaic_0001>

<llo_original>
// kernel: ftn_encoder_forward.5
$region0: #{ftn_encoder_forward.5}
  #allocation0 [shape = 'u32[]', space=smem, size = 0x4, offset = 0x4, fixed_abs, tag = 'smem constant byte address 0x4 - core index']
  #allocation1 [shape = 'u32[144,128]{1,0:T(1,128)}', space=vmem, size = 0x12000, scoped, tag = 'internal scratch']
  %s0 = inlined_call_operand.vmem [shape: bf16[128,147], index: 0, kind: input, shape index: {}]
  %s1 = inlined_call_operand.vmem [shape: bf16[147,32], index: 1, kind: input, shape index: {}]
  %s2 = inlined_call_operand.vmem [shape: f32[1,32], index: 2, kind: input, shape index: {}]
  %s3 = inlined_call_operand.vmem [shape: bf16[128,32], index: 3, kind: output, shape index: {}]
  %s4 = sld [smem:[#allocation0]]
  $region22: #{ftn_encoder_forward.5} parent=0
    _
  %s6 = ssub.s32 1, %s4
  %s7 = scalar_select 0, %s6, %s4
  // Predicated region
  $region2: #{ftn_encoder_forward.5} parent=0 // pred_check
    _
  $region3: #{ftn_encoder_forward.5} parent=0 // pred_check_branch
    %9 = sbr.rel (0) target = $region5
  $region4: #{ftn_encoder_forward.5} parent=0 // pred_region
    _
  $region5: #{ftn_encoder_forward.5} parent=0 // pred_fallthru
    _
  // Predicated region
  $region6: #{ftn_encoder_forward.5} parent=0 // pred_check
    _
  $region7: #{ftn_encoder_forward.5} parent=0 // pred_check_branch
    %11 = sbr.rel (0) target = $region9
  $region8: #{ftn_encoder_forward.5} parent=0 // pred_region
    _
  $region9: #{ftn_encoder_forward.5} parent=0 // pred_fallthru
    _
  // Predicated region
  $region10: #{ftn_encoder_forward.5} parent=0 // pred_check
    _
  $region11: #{ftn_encoder_forward.5} parent=0 // pred_check_branch
    %13 = sbr.rel (0) target = $region13
  $region12: #{ftn_encoder_forward.5} parent=0 // pred_region
    _
  $region13: #{ftn_encoder_forward.5} parent=0 // pred_fallthru
    _
  %v15 = vld [vmem:[%s0] sm:$0xff]
  %v16 = vld [vmem:[%s0 + $0x8] sm:$0xff]
  %v17 = vld [vmem:[%s0 + $0x10] sm:$0xff]
  %v18 = vld [vmem:[%s0 + $0x18] sm:$0xff]
  %v19 = vld [vmem:[%s0 + $0x20] sm:$0xff]
  %v20 = vld [vmem:[%s0 + $0x28] sm:$0xff]
  %v21 = vld [vmem:[%s0 + $0x30] sm:$0xff]
  %v22 = vld [vmem:[%s0 + $0x38] sm:$0xff]
  %v23 = vld [vmem:[%s0 + $0x40] sm:$0xff]
  %v24 = vld [vmem:[%s0 + $0x48] sm:$0xff]
  %v25 = vld [vmem:[%s0 + $0x50] sm:$0xff]
  %v26 = vld [vmem:[%s0 + $0x58] sm:$0xff]
  %v27 = vld [vmem:[%s0 + $0x60] sm:$0xff]
  %v28 = vld [vmem:[%s0 + $0x68] sm:$0xff]
  %v29 = vld [vmem:[%s0 + $0x70] sm:$0xff]
  %v30 = vld [vmem:[%s0 + $0x78] sm:$0xff]
  %v31 = vld [vmem:[%s1] sm:$0xf]
  %v32 = vld [vmem:[%s1 + $0x4] sm:$0xf]
  %v33 = vld [vmem:[%s1 + $0x8] sm:$0xf]
  %v34 = vld [vmem:[%s1 + $0xc] sm:$0xf]
  %v35 = vld [vmem:[%s1 + $0x10] sm:$0xf]
  %v36 = vld [vmem:[%s1 + $0x14] sm:$0xf]
  %v37 = vld [vmem:[%s1 + $0x18] sm:$0xf]
  %v38 = vld [vmem:[%s1 + $0x1c] sm:$0xf]
  %v39 = vld [vmem:[%s1 + $0x20] sm:$0xf]
  %v40 = vld [vmem:[%s1 + $0x24] sm:$0xf]
  %v41 = vld [vmem:[%s1 + $0x28] sm:$0xf]
  %v42 = vld [vmem:[%s1 + $0x2c] sm:$0xf]
  %v43 = vld [vmem:[%s1 + $0x30] sm:$0xf]
  %v44 = vld [vmem:[%s1 + $0x34] sm:$0xf]
  %v45 = vld [vmem:[%s1 + $0x38] sm:$0xf]
  %v46 = vld [vmem:[%s1 + $0x3c] sm:$0xf]
  %v47 = vld [vmem:[%s1 + $0x40] sm:$0xf]
  %v48 = vld [vmem:[%s1 + $0x44] sm:$0xf]
  %v49 = vld [vmem:[%s1 + $0x48] sm:$0x3]
  %v50 = vld [vmem:[%s2] sm:$0x1]
  %v52 = vlaneseq
  %v53 = vshrl.u32 %v52, 7
  %v54 = vsub.s32 0, %v53
  %v55 = vrot.slane %v50, %v54
  %v73 = vunpack.c.l.b16 %v15
  %v74 = vunpack.c.h.b16 %v15
  %v75 = vunpack.c.l.b16 %v16
  %v76 = vunpack.c.h.b16 %v16
  %v77 = vunpack.c.l.b16 %v17
  %v78 = vunpack.c.h.b16 %v17
  %v79 = vunpack.c.l.b16 %v18
  %v80 = vunpack.c.h.b16 %v18
  %v81 = vunpack.c.l.b16 %v19
  %v82 = vunpack.c.h.b16 %v19
  %v83 = vunpack.c.l.b16 %v20
  %v84 = vunpack.c.h.b16 %v20
  %v85 = vunpack.c.l.b16 %v21
  %v86 = vunpack.c.h.b16 %v21
  %v87 = vunpack.c.l.b16 %v22
  %v88 = vunpack.c.h.b16 %v22
  %v89 = vunpack.c.l.b16 %v23
  %v90 = vunpack.c.h.b16 %v23
  %v91 = vunpack.c.l.b16 %v24
  %v92 = vunpack.c.h.b16 %v24
  %v93 = vunpack.c.l.b16 %v25
  %v94 = vunpack.c.h.b16 %v25
  %v95 = vunpack.c.l.b16 %v26
  %v96 = vunpack.c.h.b16 %v26
  %v97 = vunpack.c.l.b16 %v27
  %v98 = vunpack.c.h.b16 %v27
  %v99 = vunpack.c.l.b16 %v28
  %v100 = vunpack.c.h.b16 %v28
  %v101 = vunpack.c.l.b16 %v29
  %v102 = vunpack.c.h.b16 %v29
  %v103 = vunpack.c.l.b16 %v30
  %v104 = vunpack.c.h.b16 %v30
  %v105 = vpack.c.b16 %v75, %v73
  %v106 = vpack.c.b16 %v76, %v74
  %v107 = vpack.c.b16 %v79, %v77
  %v108 = vpack.c.b16 %v80, %v78
  %v109 = vpack.c.b16 %v83, %v81
  %v110 = vpack.c.b16 %v84, %v82
  %v111 = vpack.c.b16 %v87, %v85
  %v112 = vpack.c.b16 %v88, %v86
  %v113 = vpack.c.b16 %v91, %v89
  %v114 = vpack.c.b16 %v92, %v90
  %v115 = vpack.c.b16 %v95, %v93
  %v116 = vpack.c.b16 %v96, %v94
  %v117 = vpack.c.b16 %v99, %v97
  %v118 = vpack.c.b16 %v100, %v98
  %v119 = vpack.c.b16 %v103, %v101
  %v120 = vpack.c.b16 %v104, %v102
  %v148 = vunpack.c.l.b16 %v31
  %v149 = vunpack.c.l.b16 %v32
  %v150 = vunpack.c.l.b16 %v33
  %v151 = vunpack.c.l.b16 %v34
  %v152 = vunpack.c.l.b16 %v35
  %v153 = vunpack.c.l.b16 %v36
  %v154 = vunpack.c.l.b16 %v37
  %v155 = vunpack.c.l.b16 %v38
  %v156 = vunpack.c.l.b16 %v39
  %v157 = vunpack.c.l.b16 %v40
  %v158 = vunpack.c.l.b16 %v41
  %v159 = vunpack.c.l.b16 %v42
  %v160 = vunpack.c.l.b16 %v43
  %v161 = vunpack.c.l.b16 %v44
  %v162 = vunpack.c.l.b16 %v45
  %v163 = vunpack.c.l.b16 %v46
  %v164 = vunpack.c.l.b16 %v47
  %v165 = vunpack.c.l.b16 %v48
  %v166 = vunpack.c.l.b16 %v49
  %v167 = vpack.c.b16 %v149, %v148
  %v168 = vpack.c.b16 %v151, %v150
  %v169 = vpack.c.b16 %v153, %v152
  %v170 = vpack.c.b16 %v155, %v154
  %v171 = vpack.c.b16 %v157, %v156
  %v172 = vpack.c.b16 %v159, %v158
  %v173 = vpack.c.b16 %v161, %v160
  %v174 = vpack.c.b16 %v163, %v162
  %v175 = vpack.c.b16 %v165, %v164
  %v176 = vpack.c.b16 %v166, %v166
  %vm186 = vcmask 154624
  %v188 = vsel %vm186, %v106, 0
  %v191 = vsel %vm186, %v108, 0
  %v194 = vsel %vm186, %v110, 0
  %v197 = vsel %vm186, %v112, 0
  %v200 = vsel %vm186, %v114, 0
  %v203 = vsel %vm186, %v116, 0
  %v206 = vsel %vm186, %v118, 0
  %v209 = vsel %vm186, %v120, 0
  %vm211 = vcmask 1040384
  %vm212 = vcmask 1041408
  %v213 = vsel %vm211, 4294967295, 65535
  %v214 = vsel %vm212, %v213, 0
  %v216 = vand.u32 %v176, %v214
  %218 = vmatprep.subr.bf16.mxu0 0
  %219 = vmatpush1.bf16.msra.mxu0 %v167
  %220 = vmatprep.subr.bf16.mxu0 0
  %221 = vmatpush1.bf16.msra.mxu0 %v168
  %222 = vmatprep.subr.bf16.mxu0 0
  %223 = vmatpush1.bf16.msra.mxu0 %v169
  %224 = vmatprep.subr.bf16.mxu0 0
  %225 = vmatpush1.bf16.msra.mxu0 %v170
  %226 = vmatprep.subr.bf16.mxu0 0
  %227 = vmatpush1.bf16.msra.mxu0 %v171
  %228 = vmatprep.subr.bf16.mxu0 0
  %229 = vmatpush1.bf16.msra.mxu0 %v172
  %230 = vmatprep.subr.bf16.mxu0 0
  %231 = vmatpush1.bf16.msra.mxu0 %v173
  %232 = vmatprep.subr.bf16.mxu0 0
  %233 = vmatpush1.bf16.msra.mxu0 %v174
  %234 = vmatprep.subr.bf16.mxu0 0
  %235 = vmatpush1.bf16.msra.mxu0 %v175
  %236 = vmatprep.subr.bf16.mxu0 0
  %237 = vmatpush1.bf16.msra.mxu0 %v216
  %238 = vmatprep.subr.bf16.mxu0 0
  %239 = vmatpush1.bf16.msra.mxu0 0
  %240 = vmatprep.subr.bf16.mxu0 0
  %241 = vmatpush1.bf16.msra.mxu0 0
  %242 = vmatprep.subr.bf16.mxu0 0
  %243 = vmatpush1.bf16.msra.mxu0 0
  %244 = vmatprep.subr.bf16.mxu0 0
  %245 = vmatpush1.bf16.msra.mxu0 0
  %246 = vmatprep.subr.bf16.mxu0 0
  %247 = vmatpush1.bf16.msra.mxu0 0
  %248 = vmatprep.subr.bf16.mxu0 0
  %249 = vmatpush1.bf16.msra.mxu0 0
  %250 = vmatprep.mubr.bf16.mxu0 %v188
  %251 = vmatmul.mubr.bf16.gmra.mrb[0].mxu0 %v105
  %v252 = vpop.f32.mrb[0].mxu0
  %v253 = vadd.f32 %v55, %v252
  %v254 = vpop.f32.mrb[0].mxu0
  %v255 = vpop.f32.mrb[0].mxu0
  %v256 = vadd.f32 %v55, %v255
  %v257 = vpop.f32.mrb[0].mxu0
  %258 = vmatprep.mubr.bf16.mxu0 %v191
  %259 = vmatmul.mubr.bf16.gmra.mrb[0].mxu0 %v107
  %v260 = vpop.f32.mrb[0].mxu0
  %v261 = vadd.f32 %v55, %v260
  %v262 = vpop.f32.mrb[0].mxu0
  %v263 = vpop.f32.mrb[0].mxu0
  %v264 = vadd.f32 %v55, %v263
  %v265 = vpop.f32.mrb[0].mxu0
  %266 = vmatprep.mubr.bf16.mxu0 %v194
  %267 = vmatmul.mubr.bf16.gmra.mrb[0].mxu0 %v109
  %v268 = vpop.f32.mrb[0].mxu0
  %v269 = vadd.f32 %v55, %v268
  %v270 = vpop.f32.mrb[0].mxu0
  %v271 = vpop.f32.mrb[0].mxu0
  %v272 = vadd.f32 %v55, %v271
  %v273 = vpop.f32.mrb[0].mxu0
  %274 = vmatprep.mubr.bf16.mxu0 %v197
  %275 = vmatmul.mubr.bf16.gmra.mrb[0].mxu0 %v111
  %v276 = vpop.f32.mrb[0].mxu0
  %v277 = vadd.f32 %v55, %v276
  %v278 = vpop.f32.mrb[0].mxu0
  %v279 = vpop.f32.mrb[0].mxu0
  %v280 = vadd.f32 %v55, %v279
  %v281 = vpop.f32.mrb[0].mxu0
  %282 = vmatprep.mubr.bf16.mxu0 %v200
  %283 = vmatmul.mubr.bf16.gmra.mrb[0].mxu0 %v113
  %v284 = vpop.f32.mrb[0].mxu0
  %v285 = vadd.f32 %v55, %v284
  %v286 = vpop.f32.mrb[0].mxu0
  %v287 = vpop.f32.mrb[0].mxu0
  %v288 = vadd.f32 %v55, %v287
  %v289 = vpop.f32.mrb[0].mxu0
  %290 = vmatprep.mubr.bf16.mxu0 %v203
  %291 = vmatmul.mubr.bf16.gmra.mrb[0].mxu0 %v115
  %v292 = vpop.f32.mrb[0].mxu0
  %v293 = vadd.f32 %v55, %v292
  %v294 = vpop.f32.mrb[0].mxu0
  %v295 = vpop.f32.mrb[0].mxu0
  %v296 = vadd.f32 %v55, %v295
  %v297 = vpop.f32.mrb[0].mxu0
  %298 = vmatprep.mubr.bf16.mxu0 %v206
  %299 = vmatmul.mubr.bf16.gmra.mrb[0].mxu0 %v117
  %v300 = vpop.f32.mrb[0].mxu0
  %v301 = vadd.f32 %v55, %v300
  %v302 = vpop.f32.mrb[0].mxu0
  %v303 = vpop.f32.mrb[0].mxu0
  %v304 = vadd.f32 %v55, %v303
  %v305 = vpop.f32.mrb[0].mxu0
  %306 = vmatprep.mubr.bf16.mxu0 %v209
  %307 = vmatmul.mubr.bf16.gmra.mrb[0].mxu0 %v119
  %v308 = vpop.f32.mrb[0].mxu0
  %v309 = vadd.f32 %v55, %v308
  %v310 = vpop.f32.mrb[0].mxu0
  %v311 = vpop.f32.mrb[0].mxu0
  %v312 = vadd.f32 %v55, %v311
  %v313 = vpop.f32.mrb[0].mxu0
  %314 = vdwg.mxu0
  %v315 = vpack.c.bf16 %v256, %v253
  %v316 = vpack.c.bf16 %v264, %v261
  %v317 = vpack.c.bf16 %v272, %v269
  %v318 = vpack.c.bf16 %v280, %v277
  %v319 = vpack.c.bf16 %v288, %v285
  %v320 = vpack.c.bf16 %v296, %v293
  %v321 = vpack.c.bf16 %v304, %v301
  %v322 = vpack.c.bf16 %v312, %v309
  %v331 = vunpack.c.l.b16 %v315
  %v332 = vunpack.c.h.b16 %v315
  %v333 = vunpack.c.l.b16 %v316
  %v334 = vunpack.c.h.b16 %v316
  %v335 = vunpack.c.l.b16 %v317
  %v336 = vunpack.c.h.b16 %v317
  %v337 = vunpack.c.l.b16 %v318
  %v338 = vunpack.c.h.b16 %v318
  %v339 = vunpack.c.l.b16 %v319
  %v340 = vunpack.c.h.b16 %v319
  %v341 = vunpack.c.l.b16 %v320
  %v342 = vunpack.c.h.b16 %v320
  %v343 = vunpack.c.l.b16 %v321
  %v344 = vunpack.c.h.b16 %v321
  %v345 = vunpack.c.l.b16 %v322
  %v346 = vunpack.c.h.b16 %v322
  %v347 = vpack.c.b16 %v331, %v331
  %v348 = vpack.c.b16 %v332, %v332
  %v349 = vpack.c.b16 %v333, %v333
  %v350 = vpack.c.b16 %v334, %v334
  %v351 = vpack.c.b16 %v335, %v335
  %v352 = vpack.c.b16 %v336, %v336
  %v353 = vpack.c.b16 %v337, %v337
  %v354 = vpack.c.b16 %v338, %v338
  %v355 = vpack.c.b16 %v339, %v339
  %v356 = vpack.c.b16 %v340, %v340
  %v357 = vpack.c.b16 %v341, %v341
  %v358 = vpack.c.b16 %v342, %v342
  %v359 = vpack.c.b16 %v343, %v343
  %v360 = vpack.c.b16 %v344, %v344
  %v361 = vpack.c.b16 %v345, %v345
  %v362 = vpack.c.b16 %v346, %v346
  %vm379 = vcmask 257024
  %380 = vst.msk [vmem:[%s3] sm:$0xf] %vm379, %v347
  %381 = vst.msk [vmem:[%s3 + $0x4] sm:$0xf] %vm379, %v348
  %382 = vst.msk [vmem:[%s3 + $0x8] sm:$0xf] %vm379, %v349
  %383 = vst.msk [vmem:[%s3 + $0xc] sm:$0xf] %vm379, %v350
  %384 = vst.msk [vmem:[%s3 + $0x10] sm:$0xf] %vm379, %v351
  %385 = vst.msk [vmem:[%s3 + $0x14] sm:$0xf] %vm379, %v352
  %386 = vst.msk [vmem:[%s3 + $0x18] sm:$0xf] %vm379, %v353
  %387 = vst.msk [vmem:[%s3 + $0x1c] sm:$0xf] %vm379, %v354
  %388 = vst.msk [vmem:[%s3 + $0x20] sm:$0xf] %vm379, %v355
  %389 = vst.msk [vmem:[%s3 + $0x24] sm:$0xf] %vm379, %v356
  %390 = vst.msk [vmem:[%s3 + $0x28] sm:$0xf] %vm379, %v357
  %391 = vst.msk [vmem:[%s3 + $0x2c] sm:$0xf] %vm379, %v358
  %392 = vst.msk [vmem:[%s3 + $0x30] sm:$0xf] %vm379, %v359
  %393 = vst.msk [vmem:[%s3 + $0x34] sm:$0xf] %vm379, %v360
  %394 = vst.msk [vmem:[%s3 + $0x38] sm:$0xf] %vm379, %v361
  %395 = vst.msk [vmem:[%s3 + $0x3c] sm:$0xf] %vm379, %v362
  // Predicated region
  $region14: #{ftn_encoder_forward.5} parent=0 // pred_check
    _
  $region15: #{ftn_encoder_forward.5} parent=0 // pred_check_branch
    %397 = sbr.rel (0) target = $region17
  $region16: #{ftn_encoder_forward.5} parent=0 // pred_region
    _
  $region17: #{ftn_encoder_forward.5} parent=0 // pred_fallthru
    _
  // Predicated region
  $region18: #{ftn_encoder_forward.5} parent=0 // pred_check
    _
  $region19: #{ftn_encoder_forward.5} parent=0 // pred_check_branch
    %399 = sbr.rel (0) target = $region21
  $region20: #{ftn_encoder_forward.5} parent=0 // pred_region
    _
  $region21: #{ftn_encoder_forward.5} parent=0 // pred_fallthru
    _

// kernel: ftn_encoder_forward.6
$region0: #{ftn_encoder_forward.6}
  #allocation0 [shape = 'u32[]', space=smem, size = 0x4, offset = 0x4, fixed_abs, tag = 'smem constant byte address 0x4 - core index']
  #allocation1 [shape = 'u32[144,128]{1,0:T(1,128)}', space=vmem, size = 0x12000, scoped, tag = 'internal scratch']
  #allocation2 [shape = 'bf16[1,64,32]{2,1,0:T(16,128)(2,1)}', space=vmem, size = 0x4000, scoped, tag = 'scratch operand']
  #allocation3 [shape = 'bf16[1,64,32]{2,1,0:T(16,128)(2,1)}', space=vmem, size = 0x4000, scoped, tag = 'scratch operand']
  %s0 = inlined_call_operand.vmem [shape: bf16[2,64,32], index: 0, kind: input, shape index: {}]
  %s1 = inlined_call_operand.vmem [shape: bf16[32,96], index: 1, kind: input, shape index: {}]
  %s2 = inlined_call_operand.vmem [shape: bf16[32,32], index: 2, kind: input, shape index: {}]
  %s3 = inlined_call_operand.vmem [shape: bf16[32,32], index: 3, kind: input, shape index: {}]
  %s4 = inlined_call_operand.vmem [shape: bf16[32,32], index: 4, kind: input, shape index: {}]
  %s5 = inlined_call_operand.vmem [shape: f32[8,32], index: 5, kind: input, shape index: {}]
  %s6 = inlined_call_operand.vmem [shape: bf16[2,64,32], index: 6, kind: output, shape index: {0}]
  %s7 = inlined_call_operand.vmem [shape: f32[2,32,64], index: 7, kind: output, shape index: {1}]
  %8 = xla_tuple %s6, %s7
  %s9 = sld [smem:[#allocation0]]
  $region65: #{ftn_encoder_forward.6} parent=0
    _
  %s11 = ssub.s32 1, %s9
  %s12 = scalar_select 0, %s11, %s9
  loop: start=0, step=1, limit=4
  $region2: #{ftn_encoder_forward.6} parent=0 // loop_pre_header
    _
  $region3: #{ftn_encoder_forward.6} parent=0 // loop_header
    %s14 = sphi 0, %s18
    %p15 = scmp.ge.s32.totalorder %s14, 4
    %s24 = sphi 0, %s26
    %s27 = sphi 0, %s24
    %s28 = sphi 0, %s27
    %s44 = sphi 0, %s28
    %s48 = sphi 0, %s48
    %s50 = sphi 0, %s48
    %s51 = sphi 0, %s50
    %s65 = sphi 0, %s51
    %s69 = sphi 0, %s69
    %s71 = sphi 0, %s69
    %s72 = sphi 0, %s71
    %s86 = sphi 0, %s72
    %s90 = sphi 0, %s90
    %s92 = sphi 0, %s90
    %s93 = sphi 0, %s92
    %s107 = sphi 0, %s93
    %s111 = sphi 0, %s111
    %s113 = sphi 0, %s111
    %s114 = sphi 0, %s113
    %s128 = sphi 0, %s114
    %s132 = sphi 0, %s132
    %s134 = sphi 0, %s132
    %s135 = sphi 0, %s134
    %s149 = sphi 0, %s135
    %s155 = sphi 0, %s157
    %s158 = sphi 0, %s155
    %s159 = sphi 0, %s158
    %s175 = sphi 0, %s159
    %s181 = sphi 0, %s183
    %s184 = sphi 0, %s181
    %s185 = sphi 0, %s184
    %s201 = sphi 0, %s185
  $region4: #{ftn_encoder_forward.6} parent=0 // loop_header_branch
    %17 = sbr.rel (%p15) target = $region8
  $region5: #{ftn_encoder_forward.6} parent=0 // loop_body
    %s19 = ssub.s32 %s14, 1
    %s20 = ssub.s32 %s14, 2
    %s21 = sadd.s32 %s14, 1
    %s22 = ssub.s32 %s14, %s21
    %p23 = scmp.eq.s32.totalorder %s22, 0
    %s25 = sadd.s32 %s24, 1
    %s26 = scalar_select %p23, %s24, %s25
    %p29 = pneg %p23
    %p30 = scmp.eq.s32.totalorder %s14, 1
    %p31 = por %p29, %p30
    %p32 = scmp.ne.s32.totalorder %s24, %s27
    %p33 = scmp.eq.s32.totalorder %s14, 0
    %p34 = por %p32, %p33
    %p35 = scmp.ne.s32.totalorder %s24, %s27
    %p36 = scmp.eq.s32.totalorder %s19, 1
    %p37 = por %p35, %p36
    %p38 = scmp.ne.s32.totalorder %s27, %s28
    %p39 = scmp.eq.s32.totalorder %s19, 0
    %p40 = por %p38, %p39
    %p41 = scmp.ne.s32.totalorder %s27, %s28
    %p42 = scmp.eq.s32.totalorder %s20, 1
    %p43 = por %p41, %p42
    %p45 = scmp.ne.s32.totalorder %s28, %s44
    %p46 = scmp.eq.s32.totalorder %s20, 0
    %p47 = por %p45, %p46
    %s49 = sadd.s32 %s48, 1
    %p52 = scmp.eq.s32.totalorder %s14, 1
    %p53 = scmp.ne.s32.totalorder %s48, %s50
    %p54 = scmp.eq.s32.totalorder %s14, 0
    %p55 = por %p53, %p54
    %p56 = scmp.ne.s32.totalorder %s48, %s50
    %p57 = scmp.eq.s32.totalorder %s19, 1
    %p58 = por %p56, %p57
    %p59 = scmp.ne.s32.totalorder %s50, %s51
    %p60 = scmp.eq.s32.totalorder %s19, 0
    %p61 = por %p59, %p60
    %p62 = scmp.ne.s32.totalorder %s50, %s51
    %p63 = scmp.eq.s32.totalorder %s20, 1
    %p64 = por %p62, %p63
    %p66 = scmp.ne.s32.totalorder %s51, %s65
    %p67 = scmp.eq.s32.totalorder %s20, 0
    %p68 = por %p66, %p67
    %s70 = sadd.s32 %s69, 1
    %p73 = scmp.eq.s32.totalorder %s14, 1
    %p74 = scmp.ne.s32.totalorder %s69, %s71
    %p75 = scmp.eq.s32.totalorder %s14, 0
    %p76 = por %p74, %p75
    %p77 = scmp.ne.s32.totalorder %s69, %s71
    %p78 = scmp.eq.s32.totalorder %s19, 1
    %p79 = por %p77, %p78
    %p80 = scmp.ne.s32.totalorder %s71, %s72
    %p81 = scmp.eq.s32.totalorder %s19, 0
    %p82 = por %p80, %p81
    %p83 = scmp.ne.s32.totalorder %s71, %s72
    %p84 = scmp.eq.s32.totalorder %s20, 1
    %p85 = por %p83, %p84
    %p87 = scmp.ne.s32.totalorder %s72, %s86
    %p88 = scmp.eq.s32.totalorder %s20, 0
    %p89 = por %p87, %p88
    %s91 = sadd.s32 %s90, 1
    %p94 = scmp.eq.s32.totalorder %s14, 1
    %p95 = scmp.ne.s32.totalorder %s90, %s92
    %p96 = scmp.eq.s32.totalorder %s14, 0
    %p97 = por %p95, %p96
    %p98 = scmp.ne.s32.totalorder %s90, %s92
    %p99 = scmp.eq.s32.totalorder %s19, 1
    %p100 = por %p98, %p99
    %p101 = scmp.ne.s32.totalorder %s92, %s93
    %p102 = scmp.eq.s32.totalorder %s19, 0
    %p103 = por %p101, %p102
    %p104 = scmp.ne.s32.totalorder %s92, %s93
    %p105 = scmp.eq.s32.totalorder %s20, 1
    %p106 = por %p104, %p105
    %p108 = scmp.ne.s32.totalorder %s93, %s107
    %p109 = scmp.eq.s32.totalorder %s20, 0
    %p110 = por %p108, %p109
    %s112 = sadd.s32 %s111, 1
    %p115 = scmp.eq.s32.totalorder %s14, 1
    %p116 = scmp.ne.s32.totalorder %s111, %s113
    %p117 = scmp.eq.s32.totalorder %s14, 0
    %p118 = por %p116, %p117
    %p119 = scmp.ne.s32.totalorder %s111, %s113
    %p120 = scmp.eq.s32.totalorder %s19, 1
    %p121 = por %p119, %p120
    %p122 = scmp.ne.s32.totalorder %s113, %s114
    %p123 = scmp.eq.s32.totalorder %s19, 0
    %p124 = por %p122, %p123
    %p125 = scmp.ne.s32.totalorder %s113, %s114
    %p126 = scmp.eq.s32.totalorder %s20, 1
    %p127 = por %p125, %p126
    %p129 = scmp.ne.s32.totalorder %s114, %s128
    %p130 = scmp.eq.s32.totalorder %s20, 0
    %p131 = por %p129, %p130
    %s133 = sadd.s32 %s132, 1
    %p136 = scmp.eq.s32.totalorder %s14, 1
    %p137 = scmp.ne.s32.totalorder %s132, %s134
    %p138 = scmp.eq.s32.totalorder %s14, 0
    %p139 = por %p137, %p138
    %p140 = scmp.ne.s32.totalorder %s132, %s134
    %p141 = scmp.eq.s32.totalorder %s19, 1
    %p142 = por %p140, %p141
    %p143 = scmp.ne.s32.totalorder %s134, %s135
    %p144 = scmp.eq.s32.totalorder %s19, 0
    %p145 = por %p143, %p144
    %p146 = scmp.ne.s32.totalorder %s134, %s135
    %p147 = scmp.eq.s32.totalorder %s20, 1
    %p148 = por %p146, %p147
    %p150 = scmp.ne.s32.totalorder %s135, %s149
    %p151 = scmp.eq.s32.totalorder %s20, 0
    %p152 = por %p150, %p151
    %s153 = ssub.s32 %s14, %s21
    %p154 = scmp.eq.s32.totalorder %s153, 0
    %s156 = sadd.s32 %s155, 1
    %s157 = scalar_select %p154, %s155, %s156
    %p160 = pneg %p154
    %p161 = scmp.eq.s32.totalorder %s14, 1
    %p162 = por %p160, %p161
    %p163 = scmp.ne.s32.totalorder %s155, %s158
    %p164 = scmp.eq.s32.totalorder %s14, 0
    %p165 = por %p163, %p164
    %p166 = scmp.ne.s32.totalorder %s155, %s158
    %p167 = scmp.eq.s32.totalorder %s19, 1
    %p168 = por %p166, %p167
    %p169 = scmp.ne.s32.totalorder %s158, %s159
    %p170 = scmp.eq.s32.totalorder %s19, 0
    %p171 = por %p169, %p170
    %p172 = scmp.ne.s32.totalorder %s158, %s159
    %p173 = scmp.eq.s32.totalorder %s20, 1
    %p174 = por %p172, %p173
    %p176 = scmp.ne.s32.totalorder %s159, %s175
    %p177 = scmp.eq.s32.totalorder %s20, 0
    %p178 = por %p176, %p177
    %s179 = ssub.s32 %s14, %s21
    %p180 = scmp.eq.s32.totalorder %s179, 0
    %s182 = sadd.s32 %s181, 1
    %s183 = scalar_select %p180, %s181, %s182
    %p186 = pneg %p180
    %p187 = scmp.eq.s32.totalorder %s14, 1
    %p188 = por %p186, %p187
    %p189 = scmp.ne.s32.totalorder %s181, %s184
    %p190 = scmp.eq.s32.totalorder %s14, 0
    %p191 = por %p189, %p190
    %p192 = scmp.ne.s32.totalorder %s181, %s184
    %p193 = scmp.eq.s32.totalorder %s19, 1
    %p194 = por %p192, %p193
    %p195 = scmp.ne.s32.totalorder %s184, %s185
    %p196 = scmp.eq.s32.totalorder %s19, 0
    %p197 = por %p195, %p196
    %p198 = scmp.ne.s32.totalorder %s184, %s185
    %p199 = scmp.eq.s32.totalorder %s20, 1
    %p200 = por %p198, %p199
    %p202 = scmp.ne.s32.totalorder %s185, %s201
    %p203 = scmp.eq.s32.totalorder %s20, 0
    %p204 = por %p202, %p203
    %p205 = scmp.le.s32.totalorder 1, %s14
    %p206 = scmp.lt.s32.totalorder %s14, 3
    %p207 = pnand %p205, %p206
    %p208 = pneg %p207
    // Predicated region
    $region9: #{ftn_encoder_forward.6} parent=5 // pred_check
      _
    $region10: #{ftn_encoder_forward.6} parent=5 // pred_check_branch
      %210 = sbr.rel (%p207) target = $region12
    $region11: #{ftn_encoder_forward.6} parent=5 // pred_region
      %s211 = ssub.s32 %s14, 1
      // Predicated region
      $region13: #{ftn_encoder_forward.6} parent=11 // pred_check
        %p212 = pneg %p61
      $region14: #{ftn_encoder_forward.6} parent=11 // pred_check_branch
        %214 = sbr.rel (%p212) target = $region16
      $region15: #{ftn_encoder_forward.6} parent=11 // pred_region
        _
      $region16: #{ftn_encoder_forward.6} parent=11 // pred_fallthru
        _
      // Predicated region
      $region17: #{ftn_encoder_forward.6} parent=11 // pred_check
        %p215 = pneg %p82
      $region18: #{ftn_encoder_forward.6} parent=11 // pred_check_branch
        %217 = sbr.rel (%p215) target = $region20
      $region19: #{ftn_encoder_forward.6} parent=11 // pred_region
        _
      $region20: #{ftn_encoder_forward.6} parent=11 // pred_fallthru
        _
      // Predicated region
      $region21: #{ftn_encoder_forward.6} parent=11 // pred_check
        %p218 = pneg %p103
      $region22: #{ftn_encoder_forward.6} parent=11 // pred_check_branch
        %220 = sbr.rel (%p218) target = $region24
      $region23: #{ftn_encoder_forward.6} parent=11 // pred_region
        _
      $region24: #{ftn_encoder_forward.6} parent=11 // pred_fallthru
        _
      // Predicated region
      $region25: #{ftn_encoder_forward.6} parent=11 // pred_check
        %p221 = pneg %p124
      $region26: #{ftn_encoder_forward.6} parent=11 // pred_check_branch
        %223 = sbr.rel (%p221) target = $region28
      $region27: #{ftn_encoder_forward.6} parent=11 // pred_region
        _
      $region28: #{ftn_encoder_forward.6} parent=11 // pred_fallthru
        _
      // Predicated region
      $region29: #{ftn_encoder_forward.6} parent=11 // pred_check
        %p224 = pneg %p145
      $region30: #{ftn_encoder_forward.6} parent=11 // pred_check_branch
        %226 = sbr.rel (%p224) target = $region32
      $region31: #{ftn_encoder_forward.6} parent=11 // pred_region
        _
      $region32: #{ftn_encoder_forward.6} parent=11 // pred_fallthru
        _
    $region12: #{ftn_encoder_forward.6} parent=5 // pred_fallthru
      _
    %p227 = scmp.lt.s32.totalorder %s14, 2
    // Predicated region
    $region33: #{ftn_encoder_forward.6} parent=5 // pred_check
      %p228 = pneg %p227
    $region34: #{ftn_encoder_forward.6} parent=5 // pred_check_branch
      %230 = sbr.rel (%p228) target = $region36
    $region35: #{ftn_encoder_forward.6} parent=5 // pred_region
      // Predicated region
      $region37: #{ftn_encoder_forward.6} parent=35 // pred_check
        %p231 = pneg %p34
      $region38: #{ftn_encoder_forward.6} parent=35 // pred_check_branch
        %233 = sbr.rel (%p231) target = $region40
      $region39: #{ftn_encoder_forward.6} parent=35 // pred_region
        %p234 = scmp.lt.s32.totalorder %s14, 1
        %s235 = scalar_select %p234, %s14, 1
        %s236 = smul.addr %s235, 8
        %s237 = smul.addr %s236, 4
        %s238 = scalar_lea.vmem %s0, %s237
      $region40: #{ftn_encoder_forward.6} parent=35 // pred_fallthru
        _
    $region36: #{ftn_encoder_forward.6} parent=5 // pred_fallthru
      _
    %p239 = scmp.le.s32.totalorder 1, %s14
    %p240 = scmp.lt.s32.totalorder %s14, 3
    %p241 = pnand %p239, %p240
    %p242 = pneg %p241
    // Predicated region
    $region41: #{ftn_encoder_forward.6} parent=5 // pred_check
      _
    $region42: #{ftn_encoder_forward.6} parent=5 // pred_check_branch
      %244 = sbr.rel (%p241) target = $region44
    $region43: #{ftn_encoder_forward.6} parent=5 // pred_region
      %s245 = ssub.s32 %s14, 1
      %p246 = scmp.lt.s32.totalorder %s19, 1
      %s247 = scalar_select %p246, %s19, 1
      %s248 = smul.addr %s247, 8
      %s249 = smul.addr %s248, 4
      %s250 = scalar_lea.vmem %s0, %s249
      %p251 = pneg %p40
      %p252 = pneg %p37
      %p253 = pneg %p61
      %p254 = pneg %p58
      %p255 = pneg %p82
      %p256 = pneg %p79
      %p257 = pneg %p103
      %p258 = pneg %p100
      %p259 = pneg %p124
      %p260 = pneg %p121
      %p261 = pneg %p145
      %p262 = pneg %p142
      %p263 = pneg %p171
      %p264 = pneg %p168
      %p265 = scmp.lt.s32.totalorder %s19, 1
      %s266 = scalar_select %p265, %s19, 1
      %s267 = smul.addr %s266, 8
      %s268 = smul.addr %s267, 4
      %s269 = scalar_lea.vmem %s6, %s268
      %p270 = pneg %p197
      %p271 = pneg %p194
      %p272 = scmp.lt.s32.totalorder %s19, 1
      %s273 = scalar_select %p272, %s19, 1
      %s274 = smul.addr %s273, 4
      %s275 = smul.addr %s274, 8
      %s276 = scalar_lea.vmem %s7, %s275
      %p277 = scmp.lt.s32.totalorder %s19, 1
      %s278 = scalar_select %p277, %s19, 1
      %s279 = smul.addr %s278, 8
      %s280 = smul.addr %s279, 4
      %s281 = scalar_lea.vmem %s0, %s280
      %p282 = scmp.lt.s32.totalorder %s19, 1
      %s283 = scalar_select %p282, %s19, 1
      %s284 = smul.addr %s283, 8
      %s285 = smul.addr %s284, 4
      %s286 = scalar_lea.vmem %s6, %s285
      %p287 = scmp.lt.s32.totalorder %s19, 1
      %s288 = scalar_select %p287, %s19, 1
      %s289 = smul.addr %s288, 4
      %s290 = smul.addr %s289, 8
      %s291 = scalar_lea.vmem %s7, %s290
      %v293 = vld [vmem:[%s5] sm:$0xff]
      %v294 = vld [vmem:[%s281] sm:$0xf]
      %v295 = vld [vmem:[%s281 + $0x4] sm:$0xf]
      %v296 = vld [vmem:[%s281 + $0x8] sm:$0xf]
      %v297 = vld [vmem:[%s281 + $0xc] sm:$0xf]
      %v298 = vld [vmem:[%s281 + $0x10] sm:$0xf]
      %v299 = vld [vmem:[%s281 + $0x14] sm:$0xf]
      %v300 = vld [vmem:[%s281 + $0x18] sm:$0xf]
      %v301 = vld [vmem:[%s281 + $0x1c] sm:$0xf]
      %v302 = vunpack.c.l.bf16 %v294
      %v303 = vunpack.c.l.bf16 %v295
      %v304 = vunpack.c.l.bf16 %v296
      %v305 = vunpack.c.l.bf16 %v297
      %v306 = vunpack.c.l.bf16 %v298
      %v307 = vunpack.c.l.bf16 %v299
      %v308 = vunpack.c.l.bf16 %v300
      %v309 = vunpack.c.l.bf16 %v301
      %vm310 = vcmask 261120
      %v311 = vsel %vm310, %v302, 0.0
      %312 = vadd.xlane.f32.xlu0 %v311
      %v313 = vpop.xlane.xlu0 %312
      %v314 = vsel %vm310, %v303, 0.0
      %315 = vadd.xlane.f32.xlu0 %v314
      %v316 = vpop.xlane.xlu0 %315
      %v317 = vsel %vm310, %v304, 0.0
      %318 = vadd.xlane.f32.xlu0 %v317
      %v319 = vpop.xlane.xlu0 %318
      %v320 = vsel %vm310, %v305, 0.0
      %321 = vadd.xlane.f32.xlu0 %v320
      %v322 = vpop.xlane.xlu0 %321
      %v323 = vsel %vm310, %v306, 0.0
      %324 = vadd.xlane.f32.xlu0 %v323
      %v325 = vpop.xlane.xlu0 %324
      %v326 = vsel %vm310, %v307, 0.0
      %327 = vadd.xlane.f32.xlu0 %v326
      %v328 = vpop.xlane.xlu0 %327
      %v329 = vsel %vm310, %v308, 0.0
      %330 = vadd.xlane.f32.xlu0 %v329
      %v331 = vpop.xlane.xlu0 %330
      %v332 = vsel %vm310, %v309, 0.0
      %333 = vadd.xlane.f32.xlu0 %v332
      %v334 = vpop.xlane.xlu0 %333
      %v335 = vrcp.pop 32.0
      %v336 = vmul.f32 %v313, %v335
      %v337 = vmul.f32 %v316, %v335
      %v338 = vmul.f32 %v319, %v335
      %v339 = vmul.f32 %v322, %v335
      %v340 = vmul.f32 %v325, %v335
      %v341 = vmul.f32 %v328, %v335
      %v342 = vmul.f32 %v331, %v335
      %v343 = vmul.f32 %v334, %v335
      %v344 = vsub.f32 %v302, %v336
      %v345 = vsub.f32 %v303, %v337
      %v346 = vsub.f32 %v304, %v338
      %v347 = vsub.f32 %v305, %v339
      %v348 = vsub.f32 %v306, %v340
      %v349 = vsub.f32 %v307, %v341
      %v350 = vsub.f32 %v308, %v342
      %v351 = vsub.f32 %v309, %v343
      %v352 = vmul.f32 %v344, %v344
      %v353 = vmul.f32 %v345, %v345
      %v354 = vmul.f32 %v346, %v346
      %v355 = vmul.f32 %v347, %v347
      %v356 = vmul.f32 %v348, %v348
      %v357 = vmul.f32 %v349, %v349
      %v358 = vmul.f32 %v350, %v350
      %v359 = vmul.f32 %v351, %v351
      %v360 = vsel %vm310, %v352, 0.0
      %361 = vadd.xlane.f32.xlu0 %v360
      %v362 = vpop.xlane.xlu0 %361
      %v363 = vsel %vm310, %v353, 0.0
      %364 = vadd.xlane.f32.xlu0 %v363
      %v365 = vpop.xlane.xlu0 %364
      %v366 = vsel %vm310, %v354, 0.0
      %367 = vadd.xlane.f32.xlu0 %v366
      %v368 = vpop.xlane.xlu0 %367
      %v369 = vsel %vm310, %v355, 0.0
      %370 = vadd.xlane.f32.xlu0 %v369
      %v371 = vpop.xlane.xlu0 %370
      %v372 = vsel %vm310, %v356, 0.0
      %373 = vadd.xlane.f32.xlu0 %v372
      %v374 = vpop.xlane.xlu0 %373
      %v375 = vsel %vm310, %v357, 0.0
      %376 = vadd.xlane.f32.xlu0 %v375
      %v377 = vpop.xlane.xlu0 %376
      %v378 = vsel %vm310, %v358, 0.0
      %379 = vadd.xlane.f32.xlu0 %v378
      %v380 = vpop.xlane.xlu0 %379
      %v381 = vsel %vm310, %v359, 0.0
      %382 = vadd.xlane.f32.xlu0 %v381
      %v383 = vpop.xlane.xlu0 %382
      %v384 = vmul.f32 %v362, %v335
      %v385 = vmul.f32 %v365, %v335
      %v386 = vmul.f32 %v368, %v335
      %v387 = vmul.f32 %v371, %v335
      %v388 = vmul.f32 %v374, %v335
      %v389 = vmul.f32 %v377, %v335
      %v390 = vmul.f32 %v380, %v335
      %v391 = vmul.f32 %v383, %v335
      %v392 = vadd.f32 %v384, 1e-05
      %v393 = vadd.f32 %v385, 1e-05
      %v394 = vadd.f32 %v386, 1e-05
      %v395 = vadd.f32 %v387, 1e-05
      %v396 = vadd.f32 %v388, 1e-05
      %v397 = vadd.f32 %v389, 1e-05
      %v398 = vadd.f32 %v390, 1e-05
      %v399 = vadd.f32 %v391, 1e-05
      %v400 = vrsqrt.pop %v392
      %v401 = vrsqrt.pop %v393
      %v402 = vrsqrt.pop %v394
      %v403 = vrsqrt.pop %v395
      %v404 = vrsqrt.pop %v396
      %v405 = vrsqrt.pop %v397
      %v406 = vrsqrt.pop %v398
      %v407 = vrsqrt.pop %v399
      %v408 = vmul.f32 %v344, %v400
      %v409 = vmul.f32 %v345, %v401
      %v410 = vmul.f32 %v346, %v402
      %v411 = vmul.f32 %v347, %v403
      %v412 = vmul.f32 %v348, %v404
      %v413 = vmul.f32 %v349, %v405
      %v414 = vmul.f32 %v350, %v406
      %v415 = vmul.f32 %v351, %v407
      %v416 = vlaneseq
      %v417 = vshrl.u32 %v416, 7
      %v418 = vsub.s32 0, %v417
      %v419 = vrot.slane %v293, %v418
      %v420 = vmul.f32 %v408, %v419
      %v421 = vmul.f32 %v409, %v419
      %v422 = vmul.f32 %v410, %v419
      %v423 = vmul.f32 %v411, %v419
      %v424 = vmul.f32 %v412, %v419
      %v425 = vmul.f32 %v413, %v419
      %v426 = vmul.f32 %v414, %v419
      %v427 = vmul.f32 %v415, %v419
      %v428 = vlaneseq
      %v429 = vshrl.u32 %v428, 7
      %v430 = vsub.s32 1, %v429
      %v431 = vrot.slane %v293, %v430
      %v432 = vadd.f32 %v420, %v431
      %v433 = vadd.f32 %v421, %v431
      %v434 = vadd.f32 %v422, %v431
      %v435 = vadd.f32 %v423, %v431
      %v436 = vadd.f32 %v424, %v431
      %v437 = vadd.f32 %v425, %v431
      %v438 = vadd.f32 %v426, %v431
      %v439 = vadd.f32 %v427, %v431
      %v440 = vpack.c.bf16 %v433, %v432
      %v441 = vpack.c.bf16 %v435, %v434
      %v442 = vpack.c.bf16 %v437, %v436
      %v443 = vpack.c.bf16 %v439, %v438
      %v444 = vld [vmem:[%s1] sm:$0xf]
      %v445 = vld [vmem:[%s1 + $0x4] sm:$0xf]
      %v446 = vld [vmem:[%s1 + $0x8] sm:$0xf]
      %v447 = vld [vmem:[%s1 + $0xc] sm:$0xf]
      %v452 = vunpack.c.l.b16 %v444
      %v453 = vunpack.c.l.b16 %v445
      %v454 = vunpack.c.l.b16 %v446
      %v455 = vunpack.c.l.b16 %v447
      %v456 = vpack.c.b16 %v453, %v452
      %v457 = vpack.c.b16 %v455, %v454
      %v461 = vsel %vm310, %v440, 0
      %v464 = vsel %vm310, %v441, 0
      %v467 = vsel %vm310, %v442, 0
      %v470 = vsel %vm310, %v443, 0
      %472 = vmatprep.subr.bf16.mxu0 0
      %473 = vmatpush1.bf16.msra.mxu0 %v456
      %474 = vmatprep.subr.bf16.mxu0 0
      %475 = vmatpush1.bf16.msra.mxu0 %v457
      %476 = vmatprep.subr.bf16.mxu0 0
      %477 = vmatpush1.bf16.msra.mxu0 0
      %478 = vmatprep.subr.bf16.mxu0 0
      %479 = vmatpush1.bf16.msra.mxu0 0
      %480 = vmatprep.subr.bf16.mxu0 0
      %481 = vmatpush1.bf16.msra.mxu0 0
      %482 = vmatprep.subr.bf16.mxu0 0
      %483 = vmatpush1.bf16.msra.mxu0 0
      %484 = vmatprep.subr.bf16.mxu0 0
      %485 = vmatpush1.bf16.msra.mxu0 0
      %486 = vmatprep.subr.bf16.mxu0 0
      %487 = vmatpush1.bf16.msra.mxu0 0
      %488 = vmatprep.subr.bf16.mxu0 0
      %489 = vmatpush1.bf16.msra.mxu0 0
      %490 = vmatprep.subr.bf16.mxu0 0
      %491 = vmatpush1.bf16.msra.mxu0 0
      %492 = vmatprep.subr.bf16.mxu0 0
      %493 = vmatpush1.bf16.msra.mxu0 0
      %494 = vmatprep.subr.bf16.mxu0 0
      %495 = vmatpush1.bf16.msra.mxu0 0
      %496 = vmatprep.subr.bf16.mxu0 0
      %497 = vmatpush1.bf16.msra.mxu0 0
      %498 = vmatprep.subr.bf16.mxu0 0
      %499 = vmatpush1.bf16.msra.mxu0 0
      %500 = vmatprep.subr.bf16.mxu0 0
      %501 = vmatpush1.bf16.msra.mxu0 0
      %502 = vmatprep.subr.bf16.mxu0 0
      %503 = vmatpush1.bf16.msra.mxu0 0
      %504 = vmatprep.mubr.bf16.mxu0 0
      %505 = vmatmul.mubr.bf16.gmra.mrb[0].mxu0 %v461
      %v506 = vpop.f32.mrb[0].mxu0
      %v507 = vadd.f32 0.0, %v506
      %v508 = vpop.f32.mrb[0].mxu0
      %v509 = vpop.f32.mrb[0].mxu0
      %v510 = vadd.f32 0.0, %v509
      %v511 = vpop.f32.mrb[0].mxu0
      %512 = vmatprep.mubr.bf16.mxu0 0
      %513 = vmatmul.mubr.bf16.gmra.mrb[0].mxu0 %v464
      %v514 = vpop.f32.mrb[0].mxu0
      %v515 = vadd.f32 0.0, %v514
      %v516 = vpop.f32.mrb[0].mxu0
      %v517 = vpop.f32.mrb[0].mxu0
      %v518 = vadd.f32 0.0, %v517
      %v519 = vpop.f32.mrb[0].mxu0
      %520 = vmatprep.mubr.bf16.mxu0 0
      %521 = vmatmul.mubr.bf16.gmra.mrb[0].mxu0 %v467
      %v522 = vpop.f32.mrb[0].mxu0
      %v523 = vadd.f32 0.0, %v522
      %v524 = vpop.f32.mrb[0].mxu0
      %v525 = vpop.f32.mrb[0].mxu0
      %v526 = vadd.f32 0.0, %v525
      %v527 = vpop.f32.mrb[0].mxu0
      %528 = vmatprep.mubr.bf16.mxu0 0
      %529 = vmatmul.mubr.bf16.gmra.mrb[0].mxu0 %v470
      %v530 = vpop.f32.mrb[0].mxu0
      %v531 = vadd.f32 0.0, %v530
      %v532 = vpop.f32.mrb[0].mxu0
      %v533 = vpop.f32.mrb[0].mxu0
      %v534 = vadd.f32 0.0, %v533
      %v535 = vpop.f32.mrb[0].mxu0
      %536 = vdwg.mxu0
      %v537 = vmul.f32 %v507, 0.17677669
      %v538 = vmul.f32 %v510, 0.17677669
      %v539 = vmul.f32 %v515, 0.17677669
      %v540 = vmul.f32 %v518, 0.17677669
      %v541 = vmul.f32 %v523, 0.17677669
      %v542 = vmul.f32 %v526, 0.17677669
      %v543 = vmul.f32 %v531, 0.17677669
      %v544 = vmul.f32 %v534, 0.17677669
      %v545 = vpack.c.bf16 %v538, %v537
      %v546 = vpack.c.bf16 %v540, %v539
      %v547 = vpack.c.bf16 %v542, %v541
      %v548 = vpack.c.bf16 %v544, %v543
      %v549 = vpack.c.bf16 %v510, %v507
      %v550 = vpack.c.bf16 %v518, %v515
      %v551 = vpack.c.bf16 %v526, %v523
      %v552 = vpack.c.bf16 %v534, %v531
      %557 = vrot.lane.b32.xlu0 %v549, 96
      %v558 = vpop.permute.xlu0 %557
      %559 = vrot.lane.b32.xlu0 %v550, 96
      %v560 = vpop.permute.xlu0 %559
      %561 = vrot.lane.b32.xlu0 %v551, 96
      %v562 = vpop.permute.xlu0 %561
      %563 = vrot.lane.b32.xlu0 %v552, 96
      %v564 = vpop.permute.xlu0 %563
      %569 = vst.msk [vmem:[#allocation2] sm:$0xff] %vm310, %v558
      %570 = vst.msk [vmem:[#allocation2 + $0x8] sm:$0xff] %vm310, %v560
      %571 = vst.msk [vmem:[#allocation2 + $0x10] sm:$0xff] %vm310, %v562
      %572 = vst.msk [vmem:[#allocation2 + $0x18] sm:$0xff] %vm310, %v564
      %573 = vrot.lane.b32.xlu0 %v549, 64
      %v574 = vpop.permute.xlu0 %573
      %575 = vrot.lane.b32.xlu0 %v550, 64
      %v576 = vpop.permute.xlu0 %575
      %577 = vrot.lane.b32.xlu0 %v551, 64
      %v578 = vpop.permute.xlu0 %577
      %579 = vrot.lane.b32.xlu0 %v552, 64
      %v580 = vpop.permute.xlu0 %579
      %585 = vst.msk [vmem:[#allocation3] sm:$0xff] %vm310, %v574
      %586 = vst.msk [vmem:[#allocation3 + $0x8] sm:$0xff] %vm310, %v576
      %587 = vst.msk [vmem:[#allocation3 + $0x10] sm:$0xff] %vm310, %v578
      %588 = vst.msk [vmem:[#allocation3 + $0x18] sm:$0xff] %vm310, %v580
      %v589 = vld [vmem:[#allocation2] sm:$0xff]
      %v590 = vld [vmem:[#allocation2 + $0x8] sm:$0xff]
      %v591 = vld [vmem:[#allocation2 + $0x10] sm:$0xff]
      %v592 = vld [vmem:[#allocation2 + $0x18] sm:$0xff]
      %v593 = vld [vmem:[#allocation3] sm:$0xff]
      %v594 = vld [vmem:[#allocation3 + $0x8] sm:$0xff]
      %v595 = vld [vmem:[#allocation3 + $0x10] sm:$0xff]
      %v596 = vld [vmem:[#allocation3 + $0x18] sm:$0xff]
      %v598 = vsel %vm310, %v545, 0
      %v601 = vsel %vm310, %v546, 0
      %v604 = vsel %vm310, %v547, 0
      %v607 = vsel %vm310, %v548, 0
      %v610 = vsel %vm310, %v589, 0
      %v613 = vsel %vm310, %v590, 0
      %v616 = vsel %vm310, %v591, 0
      %v619 = vsel %vm310, %v592, 0
      %621 = vmatprep.subr.bf16.mxu0 0
      %622 = vmatpush1.bf16.xpose.msra.mxu0 %v610
      %623 = vmatprep.subr.bf16.mxu0 0
      %624 = vmatpush1.bf16.xpose.msra.mxu0 %v613
      %625 = vmatprep.subr.bf16.mxu0 0
      %626 = vmatpush1.bf16.xpose.msra.mxu0 %v616
      %627 = vmatprep.subr.bf16.mxu0 0
      %628 = vmatpush1.bf16.xpose.msra.mxu0 %v619
      %629 = vmatprep.subr.bf16.mxu0 0
      %630 = vmatpush1.bf16.xpose.msra.mxu0 0
      %631 = vmatprep.subr.bf16.mxu0 0
      %632 = vmatpush1.bf16.xpose.msra.mxu0 0
      %633 = vmatprep.subr.bf16.mxu0 0
      %634 = vmatpush1.bf16.xpose.msra.mxu0 0
      %635 = vmatprep.subr.bf16.mxu0 0
      %636 = vmatpush1.bf16.xpose.msra.mxu0 0
      %637 = vmatprep.subr.bf16.mxu0 0
      %638 = vmatpush1.bf16.xpose.msra.mxu0 0
      %639 = vmatprep.subr.bf16.mxu0 0
      %640 = vmatpush1.bf16.xpose.msra.mxu0 0
      %641 = vmatprep.subr.bf16.mxu0 0
      %642 = vmatpush1.bf16.xpose.msra.mxu0 0
      %643 = vmatprep.subr.bf16.mxu0 0
      %644 = vmatpush1.bf16.xpose.msra.mxu0 0
      %645 = vmatprep.subr.bf16.mxu0 0
      %646 = vmatpush1.bf16.xpose.msra.mxu0 0
      %647 = vmatprep.subr.bf16.mxu0 0
      %648 = vmatpush1.bf16.xpose.msra.mxu0 0
      %649 = vmatprep.subr.bf16.mxu0 0
      %650 = vmatpush1.bf16.xpose.msra.mxu0 0
      %651 = vmatprep.subr.bf16.mxu0 0
      %652 = vmatpush1.bf16.xpose.msra.mxu0 0
      %653 = vmatprep.mubr.bf16.mxu0 0
      %654 = vmatmul.mubr.bf16.gmra.mrb[0].mxu0 %v598
      %v655 = vpop.f32.mrb[0].mxu0
      %v656 = vadd.f32 0.0, %v655
      %v657 = vpop.f32.mrb[0].mxu0
      %v658 = vpop.f32.mrb[0].mxu0
      %v659 = vadd.f32 0.0, %v658
      %v660 = vpop.f32.mrb[0].mxu0
      %661 = vmatprep.mubr.bf16.mxu0 0
      %662 = vmatmul.mubr.bf16.gmra.mrb[0].mxu0 %v601
      %v663 = vpop.f32.mrb[0].mxu0
      %v664 = vadd.f32 0.0, %v663
      %v665 = vpop.f32.mrb[0].mxu0
      %v666 = vpop.f32.mrb[0].mxu0
      %v667 = vadd.f32 0.0, %v666
      %v668 = vpop.f32.mrb[0].mxu0
      %669 = vmatprep.mubr.bf16.mxu0 0
      %670 = vmatmul.mubr.bf16.gmra.mrb[0].mxu0 %v604
      %v671 = vpop.f32.mrb[0].mxu0
      %v672 = vadd.f32 0.0, %v671
      %v673 = vpop.f32.mrb[0].mxu0
      %v674 = vpop.f32.mrb[0].mxu0
      %v675 = vadd.f32 0.0, %v674
      %v676 = vpop.f32.mrb[0].mxu0
      %677 = vmatprep.mubr.bf16.mxu0 0
      %678 = vmatmul.mubr.bf16.gmra.mrb[0].mxu0 %v607
      %v679 = vpop.f32.mrb[0].mxu0
      %v680 = vadd.f32 0.0, %v679
      %v681 = vpop.f32.mrb[0].mxu0
      %v682 = vpop.f32.mrb[0].mxu0
      %v683 = vadd.f32 0.0, %v682
      %v684 = vpop.f32.mrb[0].mxu0
      %685 = vdwg.mxu0
      %vm686 = vcmask 523264
      %v687 = vsel %vm686, %v656, -inf
      %688 = vmax.xlane.f32.xlu0 %v687
      %v689 = vpop.xlane.xlu0 %688
      %v690 = vsel %vm686, %v659, -inf
      %691 = vmax.xlane.f32.xlu0 %v690
      %v692 = vpop.xlane.xlu0 %691
      %v693 = vsel %vm686, %v664, -inf
      %694 = vmax.xlane.f32.xlu0 %v693
      %v695 = vpop.xlane.xlu0 %694
      %v696 = vsel %vm686, %v667, -inf
      %697 = vmax.xlane.f32.xlu0 %v696
      %v698 = vpop.xlane.xlu0 %697
      %v699 = vsel %vm686, %v672, -inf
      %700 = vmax.xlane.f32.xlu0 %v699
      %v701 = vpop.xlane.xlu0 %700
      %v702 = vsel %vm686, %v675, -inf
      %703 = vmax.xlane.f32.xlu0 %v702
      %v704 = vpop.xlane.xlu0 %703
      %v705 = vsel %vm686, %v680, -inf
      %706 = vmax.xlane.f32.xlu0 %v705
      %v707 = vpop.xlane.xlu0 %706
      %v708 = vsel %vm686, %v683, -inf
      %709 = vmax.xlane.f32.xlu0 %v708
      %v710 = vpop.xlane.xlu0 %709
      %v711 = vsub.f32 -inf, %v689
      %v712 = vsub.f32 -inf, %v692
      %v713 = vsub.f32 -inf, %v695
      %v714 = vsub.f32 -inf, %v698
      %v715 = vsub.f32 -inf, %v701
      %v716 = vsub.f32 -inf, %v704
      %v717 = vsub.f32 -inf, %v707
      %v718 = vsub.f32 -inf, %v710
      %v719 = vmul.f32 %v711, 1.442695
      %v720 = vpow.pop %v719
      %v721 = vmul.f32 %v712, 1.442695
      %v722 = vpow.pop %v721
      %v723 = vmul.f32 %v713, 1.442695
      %v724 = vpow.pop %v723
      %v725 = vmul.f32 %v714, 1.442695
      %v726 = vpow.pop %v725
      %v727 = vmul.f32 %v715, 1.442695
      %v728 = vpow.pop %v727
      %v729 = vmul.f32 %v716, 1.442695
      %v730 = vpow.pop %v729
      %v731 = vmul.f32 %v717, 1.442695
      %v732 = vpow.pop %v731
      %v733 = vmul.f32 %v718, 1.442695
      %v734 = vpow.pop %v733
      %v735 = vsub.f32 %v656, %v689
      %v736 = vsub.f32 %v659, %v692
      %v737 = vsub.f32 %v664, %v695
      %v738 = vsub.f32 %v667, %v698
      %v739 = vsub.f32 %v672, %v701
      %v740 = vsub.f32 %v675, %v704
      %v741 = vsub.f32 %v680, %v707
      %v742 = vsub.f32 %v683, %v710
      %v743 = vmul.f32 %v735, 1.442695
      %v744 = vpow.pop %v743
      %v745 = vmul.f32 %v736, 1.442695
      %v746 = vpow.pop %v745
      %v747 = vmul.f32 %v737, 1.442695
      %v748 = vpow.pop %v747
      %v749 = vmul.f32 %v738, 1.442695
      %v750 = vpow.pop %v749
      %v751 = vmul.f32 %v739, 1.442695
      %v752 = vpow.pop %v751
      %v753 = vmul.f32 %v740, 1.442695
      %v754 = vpow.pop %v753
      %v755 = vmul.f32 %v741, 1.442695
      %v756 = vpow.pop %v755
      %v757 = vmul.f32 %v742, 1.442695
      %v758 = vpow.pop %v757
      %v759 = vmul.f32 %v720, 0.0
      %v760 = vmul.f32 %v722, 0.0
      %v761 = vmul.f32 %v724, 0.0
      %v762 = vmul.f32 %v726, 0.0
      %v763 = vmul.f32 %v728, 0.0
      %v764 = vmul.f32 %v730, 0.0
      %v765 = vmul.f32 %v732, 0.0
      %v766 = vmul.f32 %v734, 0.0
      %v767 = vsel %vm686, %v744, 0.0
      %768 = vadd.xlane.f32.xlu0 %v767
      %v769 = vpop.xlane.xlu0 %768
      %v770 = vsel %vm686, %v746, 0.0
      %771 = vadd.xlane.f32.xlu0 %v770
      %v772 = vpop.xlane.xlu0 %771
      %v773 = vsel %vm686, %v748, 0.0
      %774 = vadd.xlane.f32.xlu0 %v773
      %v775 = vpop.xlane.xlu0 %774
      %v776 = vsel %vm686, %v750, 0.0
      %777 = vadd.xlane.f32.xlu0 %v776
      %v778 = vpop.xlane.xlu0 %777
      %v779 = vsel %vm686, %v752, 0.0
      %780 = vadd.xlane.f32.xlu0 %v779
      %v781 = vpop.xlane.xlu0 %780
      %v782 = vsel %vm686, %v754, 0.0
      %783 = vadd.xlane.f32.xlu0 %v782
      %v784 = vpop.xlane.xlu0 %783
      %v785 = vsel %vm686, %v756, 0.0
      %786 = vadd.xlane.f32.xlu0 %v785
      %v787 = vpop.xlane.xlu0 %786
      %v788 = vsel %vm686, %v758, 0.0
      %789 = vadd.xlane.f32.xlu0 %v788
      %v790 = vpop.xlane.xlu0 %789
      %v791 = vadd.f32 %v759, %v769
      %v792 = vadd.f32 %v760, %v772
      %v793 = vadd.f32 %v761, %v775
      %v794 = vadd.f32 %v762, %v778
      %v795 = vadd.f32 %v763, %v781
      %v796 = vadd.f32 %v764, %v784
      %v797 = vadd.f32 %v765, %v787
      %v798 = vadd.f32 %v766, %v790
      %v799 = vpack.c.bf16 %v746, %v744
      %v800 = vpack.c.bf16 %v750, %v748
      %v801 = vpack.c.bf16 %v754, %v752
      %v802 = vpack.c.bf16 %v758, %v756
      %v804 = vsel %vm686, %v799, 0
      %v807 = vsel %vm686, %v800, 0
      %v810 = vsel %vm686, %v801, 0
      %v813 = vsel %vm686, %v802, 0
      %815 = vmatprep.subr.bf16.mxu0 0
      %816 = vmatpush1.bf16.msra.mxu0 %v593
      %817 = vmatprep.subr.bf16.mxu0 0
      %818 = vmatpush1.bf16.msra.mxu0 %v594
      %819 = vmatprep.subr.bf16.mxu0 0
      %820 = vmatpush1.bf16.msra.mxu0 %v595
      %821 = vmatprep.subr.bf16.mxu0 0
      %822 = vmatpush1.bf16.msra.mxu0 %v596
      %823 = vmatprep.subr.bf16.mxu0 0
      %824 = vmatpush1.bf16.msra.mxu0 0
      %825 = vmatprep.subr.bf16.mxu0 0
      %826 = vmatpush1.bf16.msra.mxu0 0
      %827 = vmatprep.subr.bf16.mxu0 0
      %828 = vmatpush1.bf16.msra.mxu0 0
      %829 = vmatprep.subr.bf16.mxu0 0
      %830 = vmatpush1.bf16.msra.mxu0 0
      %831 = vmatprep.subr.bf16.mxu0 0
      %832 = vmatpush1.bf16.msra.mxu0 0
      %833 = vmatprep.subr.bf16.mxu0 0
      %834 = vmatpush1.bf16.msra.mxu0 0
      %835 = vmatprep.subr.bf16.mxu0 0
      %836 = vmatpush1.bf16.msra.mxu0 0
      %837 = vmatprep.subr.bf16.mxu0 0
      %838 = vmatpush1.bf16.msra.mxu0 0
      %839 = vmatprep.subr.bf16.mxu0 0
      %840 = vmatpush1.bf16.msra.mxu0 0
      %841 = vmatprep.subr.bf16.mxu0 0
      %842 = vmatpush1.bf16.msra.mxu0 0
      %843 = vmatprep.subr.bf16.mxu0 0
      %844 = vmatpush1.bf16.msra.mxu0 0
      %845 = vmatprep.subr.bf16.mxu0 0
      %846 = vmatpush1.bf16.msra.mxu0 0
      %847 = vmatprep.mubr.bf16.mxu0 0
      %848 = vmatmul.mubr.bf16.gmra.mrb[0].mxu0 %v804
      %v849 = vpop.f32.mrb[0].mxu0
      %v850 = vadd.f32 0.0, %v849
      %v851 = vpop.f32.mrb[0].mxu0
      %v852 = vpop.f32.mrb[0].mxu0
      %v853 = vadd.f32 0.0, %v852
      %v854 = vpop.f32.mrb[0].mxu0
      %855 = vmatprep.mubr.bf16.mxu0 0
      %856 = vmatmul.mubr.bf16.gmra.mrb[0].mxu0 %v807
      %v857 = vpop.f32.mrb[0].mxu0
      %v858 = vadd.f32 0.0, %v857
      %v859 = vpop.f32.mrb[0].mxu0
      %v860 = vpop.f32.mrb[0].mxu0
      %v861 = vadd.f32 0.0, %v860
      %v862 = vpop.f32.mrb[0].mxu0
      %863 = vmatprep.mubr.bf16.mxu0 0
      %864 = vmatmul.mubr.bf16.gmra.mrb[0].mxu0 %v810
      %v865 = vpop.f32.mrb[0].mxu0
      %v866 = vadd.f32 0.0, %v865
      %v867 = vpop.f32.mrb[0].mxu0
      %v868 = vpop.f32.mrb[0].mxu0
      %v869 = vadd.f32 0.0, %v868
      %v870 = vpop.f32.mrb[0].mxu0
      %871 = vmatprep.mubr.bf16.mxu0 0
      %872 = vmatmul.mubr.bf16.gmra.mrb[0].mxu0 %v813
      %v873 = vpop.f32.mrb[0].mxu0
      %v874 = vadd.f32 0.0, %v873
      %v875 = vpop.f32.mrb[0].mxu0
      %v876 = vpop.f32.mrb[0].mxu0
      %v877 = vadd.f32 0.0, %v876
      %v878 = vpop.f32.mrb[0].mxu0
      %879 = vdwg.mxu0
      %v880 = vadd.f32 %v759, %v850
      %v881 = vadd.f32 %v760, %v853
      %v882 = vadd.f32 %v761, %v858
      %v883 = vadd.f32 %v762, %v861
      %v884 = vadd.f32 %v763, %v866
      %v885 = vadd.f32 %v764, %v869
      %v886 = vadd.f32 %v765, %v874
      %v887 = vadd.f32 %v766, %v877
      %v888 = vrcp.pop %v791
      %v889 = vrcp.pop %v792
      %v890 = vrcp.pop %v793
      %v891 = vrcp.pop %v794
      %v892 = vrcp.pop %v795
      %v893 = vrcp.pop %v796
      %v894 = vrcp.pop %v797
      %v895 = vrcp.pop %v798
      %v896 = vmul.f32 %v880, %v888
      %v897 = vmul.f32 %v881, %v889
      %v898 = vmul.f32 %v882, %v890
      %v899 = vmul.f32 %v883, %v891
      %v900 = vmul.f32 %v884, %v892
      %v901 = vmul.f32 %v885, %v893
      %v902 = vmul.f32 %v886, %v894
      %v903 = vmul.f32 %v887, %v895
      %v904 = vpack.c.bf16 %v897, %v896
      %v905 = vpack.c.bf16 %v899, %v898
      %v906 = vpack.c.bf16 %v901, %v900
      %v907 = vpack.c.bf16 %v903, %v902
      %v908 = vld [vmem:[%s2] sm:$0xf]
      %v909 = vld [vmem:[%s2 + $0x4] sm:$0xf]
      %v910 = vld [vmem:[%s2 + $0x8] sm:$0xf]
      %v911 = vld [vmem:[%s2 + $0xc] sm:$0xf]
      %v912 = vlaneseq
      %v913 = vshrl.u32 %v912, 7
      %v914 = vsub.s32 2, %v913
      %v915 = vrot.slane %v293, %v914
      %v920 = vunpack.c.l.b16 %v908
      %v921 = vunpack.c.l.b16 %v909
      %v922 = vunpack.c.l.b16 %v910
      %v923 = vunpack.c.l.b16 %v911
      %v924 = vpack.c.b16 %v921, %v920
      %v925 = vpack.c.b16 %v923, %v922
      %v929 = vsel %vm310, %v904, 0
      %v932 = vsel %vm310, %v905, 0
      %v935 = vsel %vm310, %v906, 0
      %v938 = vsel %vm310, %v907, 0
      %940 = vmatprep.subr.bf16.mxu0 0
      %941 = vmatpush1.bf16.msra.mxu0 %v924
      %942 = vmatprep.subr.bf16.mxu0 0
      %943 = vmatpush1.bf16.msra.mxu0 %v925
      %944 = vmatprep.subr.bf16.mxu0 0
      %945 = vmatpush1.bf16.msra.mxu0 0
      %946 = vmatprep.subr.bf16.mxu0 0
      %947 = vmatpush1.bf16.msra.mxu0 0
      %948 = vmatprep.subr.bf16.mxu0 0
      %949 = vmatpush1.bf16.msra.mxu0 0
      %950 = vmatprep.subr.bf16.mxu0 0
      %951 = vmatpush1.bf16.msra.mxu0 0
      %952 = vmatprep.subr.bf16.mxu0 0
      %953 = vmatpush1.bf16.msra.mxu0 0
      %954 = vmatprep.subr.bf16.mxu0 0
      %955 = vmatpush1.bf16.msra.mxu0 0
      %956 = vmatprep.subr.bf16.mxu0 0
      %957 = vmatpush1.bf16.msra.mxu0 0
      %958 = vmatprep.subr.bf16.mxu0 0
      %959 = vmatpush1.bf16.msra.mxu0 0
      %960 = vmatprep.subr.bf16.mxu0 0
      %961 = vmatpush1.bf16.msra.mxu0 0
      %962 = vmatprep.subr.bf16.mxu0 0
      %963 = vmatpush1.bf16.msra.mxu0 0
      %964 = vmatprep.subr.bf16.mxu0 0
      %965 = vmatpush1.bf16.msra.mxu0 0
      %966 = vmatprep.subr.bf16.mxu0 0
      %967 = vmatpush1.bf16.msra.mxu0 0
      %968 = vmatprep.subr.bf16.mxu0 0
      %969 = vmatpush1.bf16.msra.mxu0 0
      %970 = vmatprep.subr.bf16.mxu0 0
      %971 = vmatpush1.bf16.msra.mxu0 0
      %972 = vmatprep.mubr.bf16.mxu0 0
      %973 = vmatmul.mubr.bf16.gmra.mrb[0].mxu0 %v929
      %v974 = vpop.f32.mrb[0].mxu0
      %v975 = vadd.f32 %v915, %v974
      %v976 = vpop.f32.mrb[0].mxu0
      %v977 = vpop.f32.mrb[0].mxu0
      %v978 = vadd.f32 %v915, %v977
      %v979 = vpop.f32.mrb[0].mxu0
      %980 = vmatprep.mubr.bf16.mxu0 0
      %981 = vmatmul.mubr.bf16.gmra.mrb[0].mxu0 %v932
      %v982 = vpop.f32.mrb[0].mxu0
      %v983 = vadd.f32 %v915, %v982
      %v984 = vpop.f32.mrb[0].mxu0
      %v985 = vpop.f32.mrb[0].mxu0
      %v986 = vadd.f32 %v915, %v985
      %v987 = vpop.f32.mrb[0].mxu0
      %988 = vmatprep.mubr.bf16.mxu0 0
      %989 = vmatmul.mubr.bf16.gmra.mrb[0].mxu0 %v935
      %v990 = vpop.f32.mrb[0].mxu0
      %v991 = vadd.f32 %v915, %v990
      %v992 = vpop.f32.mrb[0].mxu0
      %v993 = vpop.f32.mrb[0].mxu0
      %v994 = vadd.f32 %v915, %v993
      %v995 = vpop.f32.mrb[0].mxu0
      %996 = vmatprep.mubr.bf16.mxu0 0
      %997 = vmatmul.mubr.bf16.gmra.mrb[0].mxu0 %v938
      %v998 = vpop.f32.mrb[0].mxu0
      %v999 = vadd.f32 %v915, %v998
      %v1000 = vpop.f32.mrb[0].mxu0
      %v1001 = vpop.f32.mrb[0].mxu0
      %v1002 = vadd.f32 %v915, %v1001
      %v1003 = vpop.f32.mrb[0].mxu0
      %1004 = vdwg.mxu0
      %1013 = vrot.lane.b32.xlu0 %v975, 64
      %v1014 = vpop.permute.xlu0 %1013
      %1015 = vrot.lane.b32.xlu0 %v978, 64
      %v1016 = vpop.permute.xlu0 %1015
      %1017 = vrot.lane.b32.xlu0 %v983, 64
      %v1018 = vpop.permute.xlu0 %1017
      %1019 = vrot.lane.b32.xlu0 %v986, 64
      %v1020 = vpop.permute.xlu0 %1019
      %1021 = vrot.lane.b32.xlu0 %v991, 64
      %v1022 = vpop.permute.xlu0 %1021
      %1023 = vrot.lane.b32.xlu0 %v994, 64
      %v1024 = vpop.permute.xlu0 %1023
      %1025 = vrot.lane.b32.xlu0 %v999, 64
      %v1026 = vpop.permute.xlu0 %1025
      %1027 = vrot.lane.b32.xlu0 %v1002, 64
      %v1028 = vpop.permute.xlu0 %1027
      %v1037 = vadd.f32 %v507, %v1014
      %v1038 = vadd.f32 %v510, %v1016
      %v1039 = vadd.f32 %v515, %v1018
      %v1040 = vadd.f32 %v518, %v1020
      %v1041 = vadd.f32 %v523, %v1022
      %v1042 = vadd.f32 %v526, %v1024
      %v1043 = vadd.f32 %v531, %v1026
      %v1044 = vadd.f32 %v534, %v1028
      %1053 = vrot.lane.b32.xlu0 %v1037, 64
      %v1054 = vpop.permute.xlu0 %1053
      %1055 = vrot.lane.b32.xlu0 %v1038, 64
      %v1056 = vpop.permute.xlu0 %1055
      %1057 = vrot.lane.b32.xlu0 %v1039, 64
      %v1058 = vpop.permute.xlu0 %1057
      %1059 = vrot.lane.b32.xlu0 %v1040, 64
      %v1060 = vpop.permute.xlu0 %1059
      %1061 = vrot.lane.b32.xlu0 %v1041, 64
      %v1062 = vpop.permute.xlu0 %1061
      %1063 = vrot.lane.b32.xlu0 %v1042, 64
      %v1064 = vpop.permute.xlu0 %1063
      %1065 = vrot.lane.b32.xlu0 %v1043, 64
      %v1066 = vpop.permute.xlu0 %1065
      %1067 = vrot.lane.b32.xlu0 %v1044, 64
      %v1068 = vpop.permute.xlu0 %1067
      %v1077 = vsel %vm310, %v1054, 0.0
      %1078 = vadd.xlane.f32.xlu0 %v1077
      %v1079 = vpop.xlane.xlu0 %1078
      %v1080 = vsel %vm310, %v1056, 0.0
      %1081 = vadd.xlane.f32.xlu0 %v1080
      %v1082 = vpop.xlane.xlu0 %1081
      %v1083 = vsel %vm310, %v1058, 0.0
      %1084 = vadd.xlane.f32.xlu0 %v1083
      %v1085 = vpop.xlane.xlu0 %1084
      %v1086 = vsel %vm310, %v1060, 0.0
      %1087 = vadd.xlane.f32.xlu0 %v1086
      %v1088 = vpop.xlane.xlu0 %1087
      %v1089 = vsel %vm310, %v1062, 0.0
      %1090 = vadd.xlane.f32.xlu0 %v1089
      %v1091 = vpop.xlane.xlu0 %1090
      %v1092 = vsel %vm310, %v1064, 0.0
      %1093 = vadd.xlane.f32.xlu0 %v1092
      %v1094 = vpop.xlane.xlu0 %1093
      %v1095 = vsel %vm310, %v1066, 0.0
      %1096 = vadd.xlane.f32.xlu0 %v1095
      %v1097 = vpop.xlane.xlu0 %1096
      %v1098 = vsel %vm310, %v1068, 0.0
      %1099 = vadd.xlane.f32.xlu0 %v1098
      %v1100 = vpop.xlane.xlu0 %1099
      %v1101 = vmul.f32 %v1079, %v335
      %v1102 = vmul.f32 %v1082, %v335
      %v1103 = vmul.f32 %v1085, %v335
      %v1104 = vmul.f32 %v1088, %v335
      %v1105 = vmul.f32 %v1091, %v335
      %v1106 = vmul.f32 %v1094, %v335
      %v1107 = vmul.f32 %v1097, %v335
      %v1108 = vmul.f32 %v1100, %v335
      %v1109 = vsub.f32 %v1037, %v1101
      %v1110 = vsub.f32 %v1038, %v1102
      %v1111 = vsub.f32 %v1039, %v1103
      %v1112 = vsub.f32 %v1040, %v1104
      %v1113 = vsub.f32 %v1041, %v1105
      %v1114 = vsub.f32 %v1042, %v1106
      %v1115 = vsub.f32 %v1043, %v1107
      %v1116 = vsub.f32 %v1044, %v1108
      %v1117 = vmul.f32 %v1109, %v1109
      %v1118 = vmul.f32 %v1110, %v1110
      %v1119 = vmul.f32 %v1111, %v1111
      %v1120 = vmul.f32 %v1112, %v1112
      %v1121 = vmul.f32 %v1113, %v1113
      %v1122 = vmul.f32 %v1114, %v1114
      %v1123 = vmul.f32 %v1115, %v1115
      %v1124 = vmul.f32 %v1116, %v1116
      %1133 = vrot.lane.b32.xlu0 %v1117, 64
      %v1134 = vpop.permute.xlu0 %1133
      %1135 = vrot.lane.b32.xlu0 %v1118, 64
      %v1136 = vpop.permute.xlu0 %1135
      %1137 = vrot.lane.b32.xlu0 %v1119, 64
      %v1138 = vpop.permute.xlu0 %1137
      %1139 = vrot.lane.b32.xlu0 %v1120, 64
      %v1140 = vpop.permute.xlu0 %1139
      %1141 = vrot.lane.b32.xlu0 %v1121, 64
      %v1142 = vpop.permute.xlu0 %1141
      %1143 = vrot.lane.b32.xlu0 %v1122, 64
      %v1144 = vpop.permute.xlu0 %1143
      %1145 = vrot.lane.b32.xlu0 %v1123, 64
      %v1146 = vpop.permute.xlu0 %1145
      %1147 = vrot.lane.b32.xlu0 %v1124, 64
      %v1148 = vpop.permute.xlu0 %1147
      %v1157 = vsel %vm310, %v1134, 0.0
      %1158 = vadd.xlane.f32.xlu0 %v1157
      %v1159 = vpop.xlane.xlu0 %1158
      %v1160 = vsel %vm310, %v1136, 0.0
      %1161 = vadd.xlane.f32.xlu0 %v1160
      %v1162 = vpop.xlane.xlu0 %1161
      %v1163 = vsel %vm310, %v1138, 0.0
      %1164 = vadd.xlane.f32.xlu0 %v1163
      %v1165 = vpop.xlane.xlu0 %1164
      %v1166 = vsel %vm310, %v1140, 0.0
      %1167 = vadd.xlane.f32.xlu0 %v1166
      %v1168 = vpop.xlane.xlu0 %1167
      %v1169 = vsel %vm310, %v1142, 0.0
      %1170 = vadd.xlane.f32.xlu0 %v1169
      %v1171 = vpop.xlane.xlu0 %1170
      %v1172 = vsel %vm310, %v1144, 0.0
      %1173 = vadd.xlane.f32.xlu0 %v1172
      %v1174 = vpop.xlane.xlu0 %1173
      %v1175 = vsel %vm310, %v1146, 0.0
      %1176 = vadd.xlane.f32.xlu0 %v1175
      %v1177 = vpop.xlane.xlu0 %1176
      %v1178 = vsel %vm310, %v1148, 0.0
      %1179 = vadd.xlane.f32.xlu0 %v1178
      %v1180 = vpop.xlane.xlu0 %1179
      %v1181 = vmul.f32 %v1159, %v335
      %v1182 = vmul.f32 %v1162, %v335
      %v1183 = vmul.f32 %v1165, %v335
      %v1184 = vmul.f32 %v1168, %v335
      %v1185 = vmul.f32 %v1171, %v335
      %v1186 = vmul.f32 %v1174, %v335
      %v1187 = vmul.f32 %v1177, %v335
      %v1188 = vmul.f32 %v1180, %v335
      %v1189 = vadd.f32 %v1181, 1e-05
      %v1190 = vadd.f32 %v1182, 1e-05
      %v1191 = vadd.f32 %v1183, 1e-05
      %v1192 = vadd.f32 %v1184, 1e-05
      %v1193 = vadd.f32 %v1185, 1e-05
      %v1194 = vadd.f32 %v1186, 1e-05
      %v1195 = vadd.f32 %v1187, 1e-05
      %v1196 = vadd.f32 %v1188, 1e-05
      %v1197 = vrsqrt.pop %v1189
      %v1198 = vrsqrt.pop %v1190
      %v1199 = vrsqrt.pop %v1191
      %v1200 = vrsqrt.pop %v1192
      %v1201 = vrsqrt.pop %v1193
      %v1202 = vrsqrt.pop %v1194
      %v1203 = vrsqrt.pop %v1195
      %v1204 = vrsqrt.pop %v1196
      %v1205 = vmul.f32 %v1109, %v1197
      %v1206 = vmul.f32 %v1110, %v1198
      %v1207 = vmul.f32 %v1111, %v1199
      %v1208 = vmul.f32 %v1112, %v1200
      %v1209 = vmul.f32 %v1113, %v1201
      %v1210 = vmul.f32 %v1114, %v1202
      %v1211 = vmul.f32 %v1115, %v1203
      %v1212 = vmul.f32 %v1116, %v1204
      %v1213 = vlaneseq
      %v1214 = vshrl.u32 %v1213, 7
      %v1215 = vsub.s32 3, %v1214
      %v1216 = vrot.slane %v293, %v1215
      %1218 = vrot.lane.b32.xlu0 %v1216, 64
      %v1219 = vpop.permute.xlu0 %1218
      %v1221 = vmul.f32 %v1205, %v1219
      %v1222 = vmul.f32 %v1206, %v1219
      %v1223 = vmul.f32 %v1207, %v1219
      %v1224 = vmul.f32 %v1208, %v1219
      %v1225 = vmul.f32 %v1209, %v1219
      %v1226 = vmul.f32 %v1210, %v1219
      %v1227 = vmul.f32 %v1211, %v1219
      %v1228 = vmul.f32 %v1212, %v1219
      %v1229 = vlaneseq
      %v1230 = vshrl.u32 %v1229, 7
      %v1231 = vsub.s32 4, %v1230
      %v1232 = vrot.slane %v293, %v1231
      %1234 = vrot.lane.b32.xlu0 %v1232, 64
      %v1235 = vpop.permute.xlu0 %1234
      %v1237 = vadd.f32 %v1221, %v1235
      %v1238 = vadd.f32 %v1222, %v1235
      %v1239 = vadd.f32 %v1223, %v1235
      %v1240 = vadd.f32 %v1224, %v1235
      %v1241 = vadd.f32 %v1225, %v1235
      %v1242 = vadd.f32 %v1226, %v1235
      %v1243 = vadd.f32 %v1227, %v1235
      %v1244 = vadd.f32 %v1228, %v1235
      %v1245 = vpack.c.bf16 %v1238, %v1237
      %v1246 = vpack.c.bf16 %v1240, %v1239
      %v1247 = vpack.c.bf16 %v1242, %v1241
      %v1248 = vpack.c.bf16 %v1244, %v1243
      %v1249 = vld [vmem:[%s3] sm:$0xf]
      %v1250 = vld [vmem:[%s3 + $0x4] sm:$0xf]
      %v1251 = vld [vmem:[%s3 + $0x8] sm:$0xf]
      %v1252 = vld [vmem:[%s3 + $0xc] sm:$0xf]
      %v1253 = vlaneseq
      %v1254 = vshrl.u32 %v1253, 7
      %v1255 = vsub.s32 5, %v1254
      %v1256 = vrot.slane %v293, %v1255
      %1261 = vrot.lane.b32.xlu0 %v1245, 64
      %v1262 = vpop.permute.xlu0 %1261
      %1263 = vrot.lane.b32.xlu0 %v1246, 64
      %v1264 = vpop.permute.xlu0 %1263
      %1265 = vrot.lane.b32.xlu0 %v1247, 64
      %v1266 = vpop.permute.xlu0 %1265
      %1267 = vrot.lane.b32.xlu0 %v1248, 64
      %v1268 = vpop.permute.xlu0 %1267
      %v1273 = vunpack.c.l.b16 %v1249
      %v1274 = vunpack.c.l.b16 %v1250
      %v1275 = vunpack.c.l.b16 %v1251
      %v1276 = vunpack.c.l.b16 %v1252
      %v1277 = vpack.c.b16 %v1274, %v1273
      %v1278 = vpack.c.b16 %v1276, %v1275
      %v1282 = vsel %vm310, %v1262, 0
      %v1285 = vsel %vm310, %v1264, 0
      %v1288 = vsel %vm310, %v1266, 0
      %v1291 = vsel %vm310, %v1268, 0
      %1293 = vmatprep.subr.bf16.mxu0 0
      %1294 = vmatpush1.bf16.msra.mxu0 %v1277
      %1295 = vmatprep.subr.bf16.mxu0 0
      %1296 = vmatpush1.bf16.msra.mxu0 %v1278
      %1297 = vmatprep.subr.bf16.mxu0 0
      %1298 = vmatpush1.bf16.msra.mxu0 0
      %1299 = vmatprep.subr.bf16.mxu0 0
      %1300 = vmatpush1.bf16.msra.mxu0 0
      %1301 = vmatprep.subr.bf16.mxu0 0
      %1302 = vmatpush1.bf16.msra.mxu0 0
      %1303 = vmatprep.subr.bf16.mxu0 0
      %1304 = vmatpush1.bf16.msra.mxu0 0
      %1305 = vmatprep.subr.bf16.mxu0 0
      %1306 = vmatpush1.bf16.msra.mxu0 0
      %1307 = vmatprep.subr.bf16.mxu0 0
      %1308 = vmatpush1.bf16.msra.mxu0 0
      %1309 = vmatprep.subr.bf16.mxu0 0
      %1310 = vmatpush1.bf16.msra.mxu0 0
      %1311 = vmatprep.subr.bf16.mxu0 0
      %1312 = vmatpush1.bf16.msra.mxu0 0
      %1313 = vmatprep.subr.bf16.mxu0 0
      %1314 = vmatpush1.bf16.msra.mxu0 0
      %1315 = vmatprep.subr.bf16.mxu0 0
      %1316 = vmatpush1.bf16.msra.mxu0 0
      %1317 = vmatprep.subr.bf16.mxu0 0
      %1318 = vmatpush1.bf16.msra.mxu0 0
      %1319 = vmatprep.subr.bf16.mxu0 0
      %1320 = vmatpush1.bf16.msra.mxu0 0
      %1321 = vmatprep.subr.bf16.mxu0 0
      %1322 = vmatpush1.bf16.msra.mxu0 0
      %1323 = vmatprep.subr.bf16.mxu0 0
      %1324 = vmatpush1.bf16.msra.mxu0 0
      %1325 = vmatprep.mubr.bf16.mxu0 0
      %1326 = vmatmul.mubr.bf16.gmra.mrb[0].mxu0 %v1282
      %v1327 = vpop.f32.mrb[0].mxu0
      %v1328 = vadd.f32 %v1256, %v1327
      %v1329 = vpop.f32.mrb[0].mxu0
      %v1330 = vpop.f32.mrb[0].mxu0
      %v1331 = vadd.f32 %v1256, %v1330
      %v1332 = vpop.f32.mrb[0].mxu0
      %1333 = vmatprep.mubr.bf16.mxu0 0
      %1334 = vmatmul.mubr.bf16.gmra.mrb[0].mxu0 %v1285
      %v1335 = vpop.f32.mrb[0].mxu0
      %v1336 = vadd.f32 %v1256, %v1335
      %v1337 = vpop.f32.mrb[0].mxu0
      %v1338 = vpop.f32.mrb[0].mxu0
      %v1339 = vadd.f32 %v1256, %v1338
      %v1340 = vpop.f32.mrb[0].mxu0
      %1341 = vmatprep.mubr.bf16.mxu0 0
      %1342 = vmatmul.mubr.bf16.gmra.mrb[0].mxu0 %v1288
      %v1343 = vpop.f32.mrb[0].mxu0
      %v1344 = vadd.f32 %v1256, %v1343
      %v1345 = vpop.f32.mrb[0].mxu0
      %v1346 = vpop.f32.mrb[0].mxu0
      %v1347 = vadd.f32 %v1256, %v1346
      %v1348 = vpop.f32.mrb[0].mxu0
      %1349 = vmatprep.mubr.bf16.mxu0 0
      %1350 = vmatmul.mubr.bf16.gmra.mrb[0].mxu0 %v1291
      %v1351 = vpop.f32.mrb[0].mxu0
      %v1352 = vadd.f32 %v1256, %v1351
      %v1353 = vpop.f32.mrb[0].mxu0
      %v1354 = vpop.f32.mrb[0].mxu0
      %v1355 = vadd.f32 %v1256, %v1354
      %v1356 = vpop.f32.mrb[0].mxu0
      %1357 = vdwg.mxu0
      %v1358 = vmul.f32 %v1328, 0.5
      %v1359 = vmul.f32 %v1331, 0.5
      %v1360 = vmul.f32 %v1336, 0.5
      %v1361 = vmul.f32 %v1339, 0.5
      %v1362 = vmul.f32 %v1344, 0.5
      %v1363 = vmul.f32 %v1347, 0.5
      %v1364 = vmul.f32 %v1352, 0.5
      %v1365 = vmul.f32 %v1355, 0.5
      %v1366 = vmul.f32 %v1328, 0.044715
      %v1367 = vmul.f32 %v1331, 0.044715
      %v1368 = vmul.f32 %v1336, 0.044715
      %v1369 = vmul.f32 %v1339, 0.044715
      %v1370 = vmul.f32 %v1344, 0.044715
      %v1371 = vmul.f32 %v1347, 0.044715
      %v1372 = vmul.f32 %v1352, 0.044715
      %v1373 = vmul.f32 %v1355, 0.044715
      %v1374 = vmul.f32 %v1366, %v1328
      %v1375 = vmul.f32 %v1367, %v1331
      %v1376 = vmul.f32 %v1368, %v1336
      %v1377 = vmul.f32 %v1369, %v1339
      %v1378 = vmul.f32 %v1370, %v1344
      %v1379 = vmul.f32 %v1371, %v1347
      %v1380 = vmul.f32 %v1372, %v1352
      %v1381 = vmul.f32 %v1373, %v1355
      %v1382 = vmul.f32 %v1374, %v1328
      %v1383 = vmul.f32 %v1375, %v1331
      %v1384 = vmul.f32 %v1376, %v1336
      %v1385 = vmul.f32 %v1377, %v1339
      %v1386 = vmul.f32 %v1378, %v1344
      %v1387 = vmul.f32 %v1379, %v1347
      %v1388 = vmul.f32 %v1380, %v1352
      %v1389 = vmul.f32 %v1381, %v1355
      %v1390 = vadd.f32 %v1328, %v1382
      %v1391 = vadd.f32 %v1331, %v1383
      %v1392 = vadd.f32 %v1336, %v1384
      %v1393 = vadd.f32 %v1339, %v1385
      %v1394 = vadd.f32 %v1344, %v1386
      %v1395 = vadd.f32 %v1347, %v1387
      %v1396 = vadd.f32 %v1352, %v1388
      %v1397 = vadd.f32 %v1355, %v1389
      %v1398 = vmul.f32 %v1390, 0.7978846
      %v1399 = vmul.f32 %v1391, 0.7978846
      %v1400 = vmul.f32 %v1392, 0.7978846
      %v1401 = vmul.f32 %v1393, 0.7978846
      %v1402 = vmul.f32 %v1394, 0.7978846
      %v1403 = vmul.f32 %v1395, 0.7978846
      %v1404 = vmul.f32 %v1396, 0.7978846
      %v1405 = vmul.f32 %v1397, 0.7978846
      %v1406 = vtanh.pop %v1398
      %v1407 = vtanh.pop %v1399
      %v1408 = vtanh.pop %v1400
      %v1409 = vtanh.pop %v1401
      %v1410 = vtanh.pop %v1402
      %v1411 = vtanh.pop %v1403
      %v1412 = vtanh.pop %v1404
      %v1413 = vtanh.pop %v1405
      %v1414 = vadd.f32 %v1406, 1.0
      %v1415 = vadd.f32 %v1407, 1.0
      %v1416 = vadd.f32 %v1408, 1.0
      %v1417 = vadd.f32 %v1409, 1.0
      %v1418 = vadd.f32 %v1410, 1.0
      %v1419 = vadd.f32 %v1411, 1.0
      %v1420 = vadd.f32 %v1412, 1.0
      %v1421 = vadd.f32 %v1413, 1.0
      %v1422 = vmul.f32 %v1358, %v1414
      %v1423 = vmul.f32 %v1359, %v1415
      %v1424 = vmul.f32 %v1360, %v1416
      %v1425 = vmul.f32 %v1361, %v1417
      %v1426 = vmul.f32 %v1362, %v1418
      %v1427 = vmul.f32 %v1363, %v1419
      %v1428 = vmul.f32 %v1364, %v1420
      %v1429 = vmul.f32 %v1365, %v1421
      %v1430 = vpack.c.bf16 %v1423, %v1422
      %v1431 = vpack.c.bf16 %v1425, %v1424
      %v1432 = vpack.c.bf16 %v1427, %v1426
      %v1433 = vpack.c.bf16 %v1429, %v1428
      %v1434 = vld [vmem:[%s4] sm:$0xf]
      %v1435 = vld [vmem:[%s4 + $0x4] sm:$0xf]
      %v1436 = vld [vmem:[%s4 + $0x8] sm:$0xf]
      %v1437 = vld [vmem:[%s4 + $0xc] sm:$0xf]
      %v1438 = vlaneseq
      %v1439 = vshrl.u32 %v1438, 7
      %v1440 = vsub.s32 6, %v1439
      %v1441 = vrot.slane %v293, %v1440
      %v1446 = vunpack.c.l.b16 %v1434
      %v1447 = vunpack.c.l.b16 %v1435
      %v1448 = vunpack.c.l.b16 %v1436
      %v1449 = vunpack.c.l.b16 %v1437
      %v1450 = vpack.c.b16 %v1447, %v1446
      %v1451 = vpack.c.b16 %v1449, %v1448
      %v1455 = vsel %vm310, %v1430, 0
      %v1458 = vsel %vm310, %v1431, 0
      %v1461 = vsel %vm310, %v1432, 0
      %v1464 = vsel %vm310, %v1433, 0
      %1466 = vmatprep.subr.bf16.mxu0 0
      %1467 = vmatpush1.bf16.msra.mxu0 %v1450
      %1468 = vmatprep.subr.bf16.mxu0 0
      %1469 = vmatpush1.bf16.msra.mxu0 %v1451
      %1470 = vmatprep.subr.bf16.mxu0 0
      %1471 = vmatpush1.bf16.msra.mxu0 0
      %1472 = vmatprep.subr.bf16.mxu0 0
      %1473 = vmatpush1.bf16.msra.mxu0 0
      %1474 = vmatprep.subr.bf16.mxu0 0
      %1475 = vmatpush1.bf16.msra.mxu0 0
      %1476 = vmatprep.subr.bf16.mxu0 0
      %1477 = vmatpush1.bf16.msra.mxu0 0
      %1478 = vmatprep.subr.bf16.mxu0 0
      %1479 = vmatpush1.bf16.msra.mxu0 0
      %1480 = vmatprep.subr.bf16.mxu0 0
      %1481 = vmatpush1.bf16.msra.mxu0 0
      %1482 = vmatprep.subr.bf16.mxu0 0
      %1483 = vmatpush1.bf16.msra.mxu0 0
      %1484 = vmatprep.subr.bf16.mxu0 0
      %1485 = vmatpush1.bf16.msra.mxu0 0
      %1486 = vmatprep.subr.bf16.mxu0 0
      %1487 = vmatpush1.bf16.msra.mxu0 0
      %1488 = vmatprep.subr.bf16.mxu0 0
      %1489 = vmatpush1.bf16.msra.mxu0 0
      %1490 = vmatprep.subr.bf16.mxu0 0
      %1491 = vmatpush1.bf16.msra.mxu0 0
      %1492 = vmatprep.subr.bf16.mxu0 0
      %1493 = vmatpush1.bf16.msra.mxu0 0
      %1494 = vmatprep.subr.bf16.mxu0 0
      %1495 = vmatpush1.bf16.msra.mxu0 0
      %1496 = vmatprep.subr.bf16.mxu0 0
      %1497 = vmatpush1.bf16.msra.mxu0 0
      %1498 = vmatprep.mubr.bf16.mxu0 0
      %1499 = vmatmul.mubr.bf16.gmra.mrb[0].mxu0 %v1455
      %v1500 = vpop.f32.mrb[0].mxu0
      %v1501 = vadd.f32 %v1441, %v1500
      %v1502 = vpop.f32.mrb[0].mxu0
      %v1503 = vpop.f32.mrb[0].mxu0
      %v1504 = vadd.f32 %v1441, %v1503
      %v1505 = vpop.f32.mrb[0].mxu0
      %1506 = vmatprep.mubr.bf16.mxu0 0
      %1507 = vmatmul.mubr.bf16.gmra.mrb[0].mxu0 %v1458
      %v1508 = vpop.f32.mrb[0].mxu0
      %v1509 = vadd.f32 %v1441, %v1508
      %v1510 = vpop.f32.mrb[0].mxu0
      %v1511 = vpop.f32.mrb[0].mxu0
      %v1512 = vadd.f32 %v1441, %v1511
      %v1513 = vpop.f32.mrb[0].mxu0
      %1514 = vmatprep.mubr.bf16.mxu0 0
      %1515 = vmatmul.mubr.bf16.gmra.mrb[0].mxu0 %v1461
      %v1516 = vpop.f32.mrb[0].mxu0
      %v1517 = vadd.f32 %v1441, %v1516
      %v1518 = vpop.f32.mrb[0].mxu0
      %v1519 = vpop.f32.mrb[0].mxu0
      %v1520 = vadd.f32 %v1441, %v1519
      %v1521 = vpop.f32.mrb[0].mxu0
      %1522 = vmatprep.mubr.bf16.mxu0 0
      %1523 = vmatmul.mubr.bf16.gmra.mrb[0].mxu0 %v1464
      %v1524 = vpop.f32.mrb[0].mxu0
      %v1525 = vadd.f32 %v1441, %v1524
      %v1526 = vpop.f32.mrb[0].mxu0
      %v1527 = vpop.f32.mrb[0].mxu0
      %v1528 = vadd.f32 %v1441, %v1527
      %v1529 = vpop.f32.mrb[0].mxu0
      %1530 = vdwg.mxu0
      %1539 = vrot.lane.b32.xlu0 %v1501, 64
      %v1540 = vpop.permute.xlu0 %1539
      %1541 = vrot.lane.b32.xlu0 %v1504, 64
      %v1542 = vpop.permute.xlu0 %1541
      %1543 = vrot.lane.b32.xlu0 %v1509, 64
      %v1544 = vpop.permute.xlu0 %1543
      %1545 = vrot.lane.b32.xlu0 %v1512, 64
      %v1546 = vpop.permute.xlu0 %1545
      %1547 = vrot.lane.b32.xlu0 %v1517, 64
      %v1548 = vpop.permute.xlu0 %1547
      %1549 = vrot.lane.b32.xlu0 %v1520, 64
      %v1550 = vpop.permute.xlu0 %1549
      %1551 = vrot.lane.b32.xlu0 %v1525, 64
      %v1552 = vpop.permute.xlu0 %1551
      %1553 = vrot.lane.b32.xlu0 %v1528, 64
      %v1554 = vpop.permute.xlu0 %1553
      %v1563 = vadd.f32 %v1037, %v1540
      %v1564 = vadd.f32 %v1038, %v1542
      %v1565 = vadd.f32 %v1039, %v1544
      %v1566 = vadd.f32 %v1040, %v1546
      %v1567 = vadd.f32 %v1041, %v1548
      %v1568 = vadd.f32 %v1042, %v1550
      %v1569 = vadd.f32 %v1043, %v1552
      %v1570 = vadd.f32 %v1044, %v1554
      %v1571 = vpack.c.bf16 %v1564, %v1563
      %v1572 = vpack.c.bf16 %v1566, %v1565
      %v1573 = vpack.c.bf16 %v1568, %v1567
      %v1574 = vpack.c.bf16 %v1570, %v1569
      %v1579 = vunpack.c.l.b16 %v1571
      %v1580 = vunpack.c.h.b16 %v1571
      %v1581 = vunpack.c.l.b16 %v1572
      %v1582 = vunpack.c.h.b16 %v1572
      %v1583 = vunpack.c.l.b16 %v1573
      %v1584 = vunpack.c.h.b16 %v1573
      %v1585 = vunpack.c.l.b16 %v1574
      %v1586 = vunpack.c.h.b16 %v1574
      %v1587 = vpack.c.b16 %v1579, %v1579
      %v1588 = vpack.c.b16 %v1580, %v1580
      %v1589 = vpack.c.b16 %v1581, %v1581
      %v1590 = vpack.c.b16 %v1582, %v1582
      %v1591 = vpack.c.b16 %v1583, %v1583
      %v1592 = vpack.c.b16 %v1584, %v1584
      %v1593 = vpack.c.b16 %v1585, %v1585
      %v1594 = vpack.c.b16 %v1586, %v1586
      %1595 = vrot.lane.b32.xlu0 %v1587, 64
      %v1596 = vpop.permute.xlu0 %1595
      %1597 = vrot.lane.b32.xlu0 %v1588, 64
      %v1598 = vpop.permute.xlu0 %1597
      %1599 = vrot.lane.b32.xlu0 %v1589, 64
      %v1600 = vpop.permute.xlu0 %1599
      %1601 = vrot.lane.b32.xlu0 %v1590, 64
      %v1602 = vpop.permute.xlu0 %1601
      %1603 = vrot.lane.b32.xlu0 %v1591, 64
      %v1604 = vpop.permute.xlu0 %1603
      %1605 = vrot.lane.b32.xlu0 %v1592, 64
      %v1606 = vpop.permute.xlu0 %1605
      %1607 = vrot.lane.b32.xlu0 %v1593, 64
      %v1608 = vpop.permute.xlu0 %1607
      %1609 = vrot.lane.b32.xlu0 %v1594, 64
      %v1610 = vpop.permute.xlu0 %1609
      %vm1619 = vcmask 257024
      %1620 = vst.msk [vmem:[%s286] sm:$0xf] %vm1619, %v1596
      %1621 = vst.msk [vmem:[%s286 + $0x4] sm:$0xf] %vm1619, %v1598
      %1622 = vst.msk [vmem:[%s286 + $0x8] sm:$0xf] %vm1619, %v1600
      %1623 = vst.msk [vmem:[%s286 + $0xc] sm:$0xf] %vm1619, %v1602
      %1624 = vst.msk [vmem:[%s286 + $0x10] sm:$0xf] %vm1619, %v1604
      %1625 = vst.msk [vmem:[%s286 + $0x14] sm:$0xf] %vm1619, %v1606
      %1626 = vst.msk [vmem:[%s286 + $0x18] sm:$0xf] %vm1619, %v1608
      %1627 = vst.msk [vmem:[%s286 + $0x1c] sm:$0xf] %vm1619, %v1610
      %1636 = vrot.lane.b32.xlu0 %v1563, 64
      %v1637 = vpop.permute.xlu0 %1636
      %1638 = vrot.lane.b32.xlu0 %v1564, 64
      %v1639 = vpop.permute.xlu0 %1638
      %1640 = vrot.lane.b32.xlu0 %v1565, 64
      %v1641 = vpop.permute.xlu0 %1640
      %1642 = vrot.lane.b32.xlu0 %v1566, 64
      %v1643 = vpop.permute.xlu0 %1642
      %1644 = vrot.lane.b32.xlu0 %v1567, 64
      %v1645 = vpop.permute.xlu0 %1644
      %1646 = vrot.lane.b32.xlu0 %v1568, 64
      %v1647 = vpop.permute.xlu0 %1646
      %1648 = vrot.lane.b32.xlu0 %v1569, 64
      %v1649 = vpop.permute.xlu0 %1648
      %1650 = vrot.lane.b32.xlu0 %v1570, 64
      %v1651 = vpop.permute.xlu0 %1650
      %1660 = vxpose.xlu0.b32.start [1/16] %v1637, 128
      %1661 = vxpose.xlu0.b32.cont [2/16] %v1639, 128
      %1662 = vxpose.xlu0.b32.cont [3/16] %v1641, 128
      %1663 = vxpose.xlu0.b32.cont [4/16] %v1643, 128
      %1664 = vxpose.xlu0.b32.cont [5/16] %v1645, 128
      %1665 = vxpose.xlu0.b32.cont [6/16] %v1647, 128
      %1666 = vxpose.xlu0.b32.cont [7/16] %v1649, 128
      %1667 = vxpose.xlu0.b32.cont [8/16] %v1651, 128
      %1668 = vxpose.xlu0.b32.cont [9/16] 0.0, 128
      %1669 = vxpose.xlu0.b32.cont [10/16] 0.0, 128
      %1670 = vxpose.xlu0.b32.cont [11/16] 0.0, 128
      %1671 = vxpose.xlu0.b32.cont [12/16] 0.0, 128
      %1672 = vxpose.xlu0.b32.cont [13/16] 0.0, 128
      %1673 = vxpose.xlu0.b32.cont [14/16] 0.0, 128
      %1674 = vxpose.xlu0.b32.cont [15/16] 0.0, 128
      %1675 = vxpose.xlu0.b32.end [16/16] 0.0, 128
      %v1676 = vpop.trf.xlu0
      %v1677 = vpop.trf.xlu0
      %v1678 = vpop.trf.xlu0
      %v1679 = vpop.trf.xlu0
      %v1680 = vpop.trf.xlu0
      %v1681 = vpop.trf.xlu0
      %v1682 = vpop.trf.xlu0
      %v1683 = vpop.trf.xlu0
      %v1684 = vpop.trf.xlu0
      %v1685 = vpop.trf.xlu0
      %v1686 = vpop.trf.xlu0
      %v1687 = vpop.trf.xlu0
      %v1688 = vpop.trf.xlu0
      %v1689 = vpop.trf.xlu0
      %v1690 = vpop.trf.xlu0
      %v1691 = vpop.trf.xlu0
      %1692 = vst.msk [vmem:[%s291] sm:$0xff] %vm686, %v1676
      %1693 = vst.msk [vmem:[%s291 + $0x8] sm:$0xff] %vm686, %v1677
      %1694 = vst.msk [vmem:[%s291 + $0x10] sm:$0xff] %vm686, %v1678
      %1695 = vst.msk [vmem:[%s291 + $0x18] sm:$0xff] %vm686, %v1679
      %p1696 = scmp.lt.s32.totalorder %s19, 1
      %s1697 = scalar_select %p1696, %s19, 1
      %s1698 = smul.addr %s1697, 8
      %s1699 = smul.addr %s1698, 4
      %s1700 = scalar_lea.vmem %s6, %s1699
      %p1701 = scmp.lt.s32.totalorder %s19, 1
      %s1702 = scalar_select %p1701, %s19, 1
      %s1703 = smul.addr %s1702, 4
      %s1704 = smul.addr %s1703, 8
      %s1705 = scalar_lea.vmem %s7, %s1704
      // Predicated region
      $region45: #{ftn_encoder_forward.6} parent=43 // pred_check
        %p1706 = pneg %p168
      $region46: #{ftn_encoder_forward.6} parent=43 // pred_check_branch
        %1708 = sbr.rel (%p1706) target = $region48
      $region47: #{ftn_encoder_forward.6} parent=43 // pred_region
        _
      $region48: #{ftn_encoder_forward.6} parent=43 // pred_fallthru
        _
      // Predicated region
      $region49: #{ftn_encoder_forward.6} parent=43 // pred_check
        %p1709 = pneg %p194
      $region50: #{ftn_encoder_forward.6} parent=43 // pred_check_branch
        %1711 = sbr.rel (%p1709) target = $region52
      $region51: #{ftn_encoder_forward.6} parent=43 // pred_region
        _
      $region52: #{ftn_encoder_forward.6} parent=43 // pred_fallthru
        _
    $region44: #{ftn_encoder_forward.6} parent=5 // pred_fallthru
      _
    %p1712 = scmp.le.s32.totalorder 2, %s14
    // Predicated region
    $region53: #{ftn_encoder_forward.6} parent=5 // pred_check
      %p1713 = pneg %p1712
    $region54: #{ftn_encoder_forward.6} parent=5 // pred_check_branch
      %1715 = sbr.rel (%p1713) target = $region56
    $region55: #{ftn_encoder_forward.6} parent=5 // pred_region
      %s1716 = ssub.s32 %s14, 2
      // Predicated region
      $region57: #{ftn_encoder_forward.6} parent=55 // pred_check
        %p1717 = pneg %p174
      $region58: #{ftn_encoder_forward.6} parent=55 // pred_check_branch
        %1719 = sbr.rel (%p1717) target = $region60
      $region59: #{ftn_encoder_forward.6} parent=55 // pred_region
        %p1720 = scmp.lt.s32.totalorder %s20, 1
        %s1721 = scalar_select %p1720, %s20, 1
        %s1722 = smul.addr %s1721, 8
        %s1723 = smul.addr %s1722, 4
        %s1724 = scalar_lea.vmem %s6, %s1723
      $region60: #{ftn_encoder_forward.6} parent=55 // pred_fallthru
        _
      // Predicated region
      $region61: #{ftn_encoder_forward.6} parent=55 // pred_check
        %p1725 = pneg %p200
      $region62: #{ftn_encoder_forward.6} parent=55 // pred_check_branch
        %1727 = sbr.rel (%p1725) target = $region64
      $region63: #{ftn_encoder_forward.6} parent=55 // pred_region
        %p1728 = scmp.lt.s32.totalorder %s20, 1
        %s1729 = scalar_select %p1728, %s20, 1
        %s1730 = smul.addr %s1729, 4
        %s1731 = smul.addr %s1730, 8
        %s1732 = scalar_lea.vmem %s7, %s1731
      $region64: #{ftn_encoder_forward.6} parent=55 // pred_fallthru
        _
    $region56: #{ftn_encoder_forward.6} parent=5 // pred_fallthru
      _
  $region6: #{ftn_encoder_forward.6} parent=0 // loop_footer
    %s18 = sadd.s32 1, %s14
  $region7: #{ftn_encoder_forward.6} parent=0 // loop_footer_branch
    %13 = sbr.rel target = $region3
  $region8: #{ftn_encoder_forward.6} parent=0 // loop_exit
    _

// kernel: ftn_encoder_forward.7
$region0: #{ftn_encoder_forward.7}
  #allocation0 [shape = 'u32[]', space=smem, size = 0x4, offset = 0x4, fixed_abs, tag = 'smem constant byte address 0x4 - core index']
  #allocation1 [shape = 'u32[144,128]{1,0:T(1,128)}', space=vmem, size = 0x12000, scoped, tag = 'internal scratch']
  %s0 = inlined_call_operand.vmem [shape: bf16[32,288], index: 0, kind: input, shape index: {}]
  %s1 = inlined_call_operand.vmem [shape: bf16[288,32], index: 1, kind: input, shape index: {}]
  %s2 = inlined_call_operand.vmem [shape: f32[1,32], index: 2, kind: input, shape index: {}]
  %s3 = inlined_call_operand.vmem [shape: bf16[32,32], index: 3, kind: output, shape index: {}]
  %s4 = sld [smem:[#allocation0]]
  $region22: #{ftn_encoder_forward.7} parent=0
    _
  %s6 = ssub.s32 1, %s4
  %s7 = scalar_select 0, %s6, %s4
  // Predicated region
  $region2: #{ftn_encoder_forward.7} parent=0 // pred_check
    _
  $region3: #{ftn_encoder_forward.7} parent=0 // pred_check_branch
    %9 = sbr.rel (0) target = $region5
  $region4: #{ftn_encoder_forward.7} parent=0 // pred_region
    _
  $region5: #{ftn_encoder_forward.7} parent=0 // pred_fallthru
    _
  // Predicated region
  $region6: #{ftn_encoder_forward.7} parent=0 // pred_check
    _
  $region7: #{ftn_encoder_forward.7} parent=0 // pred_check_branch
    %11 = sbr.rel (0) target = $region9
  $region8: #{ftn_encoder_forward.7} parent=0 // pred_region
    _
  $region9: #{ftn_encoder_forward.7} parent=0 // pred_fallthru
    _
  // Predicated region
  $region10: #{ftn_encoder_forward.7} parent=0 // pred_check
    _
  $region11: #{ftn_encoder_forward.7} parent=0 // pred_check_branch
    %13 = sbr.rel (0) target = $region13
  $region12: #{ftn_encoder_forward.7} parent=0 // pred_region
    _
  $region13: #{ftn_encoder_forward.7} parent=0 // pred_fallthru
    _
  %v15 = vld [vmem:[%s0] sm:$0xff]
  %v16 = vld [vmem:[%s0 + $0x8] sm:$0xf]
  %v17 = vld [vmem:[%s0 + $0xc] sm:$0xff]
  %v18 = vld [vmem:[%s0 + $0x14] sm:$0xf]
  %v19 = vld [vmem:[%s0 + $0x18] sm:$0xff]
  %v20 = vld [vmem:[%s0 + $0x20] sm:$0xf]
  %v21 = vld [vmem:[%s0 + $0x24] sm:$0xff]
  %v22 = vld [vmem:[%s0 + $0x2c] sm:$0xf]
  %v23 = vld [vmem:[%s1] sm:$0xf]
  %v24 = vld [vmem:[%s1 + $0x4] sm:$0xf]
  %v25 = vld [vmem:[%s1 + $0x8] sm:$0xf]
  %v26 = vld [vmem:[%s1 + $0xc] sm:$0xf]
  %v27 = vld [vmem:[%s1 + $0x10] sm:$0xf]
  %v28 = vld [vmem:[%s1 + $0x14] sm:$0xf]
  %v29 = vld [vmem:[%s1 + $0x18] sm:$0xf]
  %v30 = vld [vmem:[%s1 + $0x1c] sm:$0xf]
  %v31 = vld [vmem:[%s1 + $0x20] sm:$0xf]
  %v32 = vld [vmem:[%s1 + $0x24] sm:$0xf]
  %v33 = vld [vmem:[%s1 + $0x28] sm:$0xf]
  %v34 = vld [vmem:[%s1 + $0x2c] sm:$0xf]
  %v35 = vld [vmem:[%s1 + $0x30] sm:$0xf]
  %v36 = vld [vmem:[%s1 + $0x34] sm:$0xf]
  %v37 = vld [vmem:[%s1 + $0x38] sm:$0xf]
  %v38 = vld [vmem:[%s1 + $0x3c] sm:$0xf]
  %v39 = vld [vmem:[%s1 + $0x40] sm:$0xf]
  %v40 = vld [vmem:[%s1 + $0x44] sm:$0xf]
  %v41 = vld [vmem:[%s1 + $0x48] sm:$0xf]
  %v42 = vld [vmem:[%s1 + $0x4c] sm:$0xf]
  %v43 = vld [vmem:[%s1 + $0x50] sm:$0xf]
  %v44 = vld [vmem:[%s1 + $0x54] sm:$0xf]
  %v45 = vld [vmem:[%s1 + $0x58] sm:$0xf]
  %v46 = vld [vmem:[%s1 + $0x5c] sm:$0xf]
  %v47 = vld [vmem:[%s1 + $0x60] sm:$0xf]
  %v48 = vld [vmem:[%s1 + $0x64] sm:$0xf]
  %v49 = vld [vmem:[%s1 + $0x68] sm:$0xf]
  %v50 = vld [vmem:[%s1 + $0x6c] sm:$0xf]
  %v51 = vld [vmem:[%s1 + $0x70] sm:$0xf]
  %v52 = vld [vmem:[%s1 + $0x74] sm:$0xf]
  %v53 = vld [vmem:[%s1 + $0x78] sm:$0xf]
  %v54 = vld [vmem:[%s1 + $0x7c] sm:$0xf]
  %v55 = vld [vmem:[%s1 + $0x80] sm:$0xf]
  %v56 = vld [vmem:[%s1 + $0x84] sm:$0xf]
  %v57 = vld [vmem:[%s1 + $0x88] sm:$0xf]
  %v58 = vld [vmem:[%s1 + $0x8c] sm:$0xf]
  %v59 = vld [vmem:[%s2] sm:$0x1]
  %v61 = vlaneseq
  %v62 = vshrl.u32 %v61, 7
  %v63 = vsub.s32 0, %v62
  %v64 = vrot.slane %v59, %v63
  %v74 = vunpack.c.l.b16 %v15
  %v75 = vunpack.c.h.b16 %v15
  %v76 = vunpack.c.l.b16 %v16
  %v77 = vunpack.c.l.b16 %v17
  %v78 = vunpack.c.h.b16 %v17
  %v79 = vunpack.c.l.b16 %v18
  %v80 = vunpack.c.l.b16 %v19
  %v81 = vunpack.c.h.b16 %v19
  %v82 = vunpack.c.l.b16 %v20
  %v83 = vunpack.c.l.b16 %v21
  %v84 = vunpack.c.h.b16 %v21
  %v85 = vunpack.c.l.b16 %v22
  %v86 = vpack.c.b16 %v77, %v74
  %v87 = vpack.c.b16 %v78, %v75
  %v88 = vpack.c.b16 %v79, %v76
  %v89 = vpack.c.b16 %v83, %v80
  %v90 = vpack.c.b16 %v84, %v81
  %v91 = vpack.c.b16 %v85, %v82
  %v132 = vunpack.c.l.b16 %v23
  %v133 = vunpack.c.l.b16 %v24
  %v134 = vunpack.c.l.b16 %v25
  %v135 = vunpack.c.l.b16 %v26
  %v136 = vunpack.c.l.b16 %v27
  %v137 = vunpack.c.l.b16 %v28
  %v138 = vunpack.c.l.b16 %v29
  %v139 = vunpack.c.l.b16 %v30
  %v140 = vunpack.c.l.b16 %v31
  %v141 = vunpack.c.l.b16 %v32
  %v142 = vunpack.c.l.b16 %v33
  %v143 = vunpack.c.l.b16 %v34
  %v144 = vunpack.c.l.b16 %v35
  %v145 = vunpack.c.l.b16 %v36
  %v146 = vunpack.c.l.b16 %v37
  %v147 = vunpack.c.l.b16 %v38
  %v148 = vunpack.c.l.b16 %v39
  %v149 = vunpack.c.l.b16 %v40
  %v150 = vunpack.c.l.b16 %v41
  %v151 = vunpack.c.l.b16 %v42
  %v152 = vunpack.c.l.b16 %v43
  %v153 = vunpack.c.l.b16 %v44
  %v154 = vunpack.c.l.b16 %v45
  %v155 = vunpack.c.l.b16 %v46
  %v156 = vunpack.c.l.b16 %v47
  %v157 = vunpack.c.l.b16 %v48
  %v158 = vunpack.c.l.b16 %v49
  %v159 = vunpack.c.l.b16 %v50
  %v160 = vunpack.c.l.b16 %v51
  %v161 = vunpack.c.l.b16 %v52
  %v162 = vunpack.c.l.b16 %v53
  %v163 = vunpack.c.l.b16 %v54
  %v164 = vunpack.c.l.b16 %v55
  %v165 = vunpack.c.l.b16 %v56
  %v166 = vunpack.c.l.b16 %v57
  %v167 = vunpack.c.l.b16 %v58
  %v168 = vpack.c.b16 %v133, %v132
  %v169 = vpack.c.b16 %v135, %v134
  %v170 = vpack.c.b16 %v137, %v136
  %v171 = vpack.c.b16 %v139, %v138
  %v172 = vpack.c.b16 %v141, %v140
  %v173 = vpack.c.b16 %v143, %v142
  %v174 = vpack.c.b16 %v145, %v144
  %v175 = vpack.c.b16 %v147, %v146
  %v176 = vpack.c.b16 %v149, %v148
  %v177 = vpack.c.b16 %v151, %v150
  %v178 = vpack.c.b16 %v153, %v152
  %v179 = vpack.c.b16 %v155, %v154
  %v180 = vpack.c.b16 %v157, %v156
  %v181 = vpack.c.b16 %v159, %v158
  %v182 = vpack.c.b16 %v161, %v160
  %v183 = vpack.c.b16 %v163, %v162
  %v184 = vpack.c.b16 %v165, %v164
  %v185 = vpack.c.b16 %v167, %v166
  %vm204 = vcmask 261120
  %v206 = vsel %vm204, %v88, 0
  %v209 = vsel %vm204, %v91, 0
  %211 = vmatprep.subr.bf16.mxu0 0
  %212 = vmatpush1.bf16.msra.mxu0 %v168
  %213 = vmatprep.subr.bf16.mxu0 0
  %214 = vmatpush1.bf16.msra.mxu0 %v169
  %215 = vmatprep.subr.bf16.mxu0 0
  %216 = vmatpush1.bf16.msra.mxu0 %v170
  %217 = vmatprep.subr.bf16.mxu0 0
  %218 = vmatpush1.bf16.msra.mxu0 %v171
  %219 = vmatprep.subr.bf16.mxu0 0
  %220 = vmatpush1.bf16.msra.mxu0 %v172
  %221 = vmatprep.subr.bf16.mxu0 0
  %222 = vmatpush1.bf16.msra.mxu0 %v173
  %223 = vmatprep.subr.bf16.mxu0 0
  %224 = vmatpush1.bf16.msra.mxu0 %v174
  %225 = vmatprep.subr.bf16.mxu0 0
  %226 = vmatpush1.bf16.msra.mxu0 %v175
  %227 = vmatprep.subr.bf16.mxu0 0
  %228 = vmatpush1.bf16.msra.mxu0 %v176
  %229 = vmatprep.subr.bf16.mxu0 0
  %230 = vmatpush1.bf16.msra.mxu0 %v177
  %231 = vmatprep.subr.bf16.mxu0 0
  %232 = vmatpush1.bf16.msra.mxu0 %v178
  %233 = vmatprep.subr.bf16.mxu0 0
  %234 = vmatpush1.bf16.msra.mxu0 %v179
  %235 = vmatprep.subr.bf16.mxu0 0
  %236 = vmatpush1.bf16.msra.mxu0 %v180
  %237 = vmatprep.subr.bf16.mxu0 0
  %238 = vmatpush1.bf16.msra.mxu0 %v181
  %239 = vmatprep.subr.bf16.mxu0 0
  %240 = vmatpush1.bf16.msra.mxu0 %v182
  %241 = vmatprep.subr.bf16.mxu0 0
  %242 = vmatpush1.bf16.msra.mxu0 %v183
  %243 = vmatprep.mubr.bf16.mxu0 %v87
  %244 = vmatmul.mubr.bf16.gmra.mrb[0].mxu0 %v86
  %v245 = vpop.f32.mrb[0].mxu0
  %v246 = vadd.f32 %v64, %v245
  %v247 = vpop.f32.mrb[0].mxu0
  %v248 = vpop.f32.mrb[0].mxu0
  %v249 = vadd.f32 %v64, %v248
  %v250 = vpop.f32.mrb[0].mxu0
  %251 = vmatprep.mubr.bf16.mxu0 %v90
  %252 = vmatmul.mubr.bf16.gmra.mrb[0].mxu0 %v89
  %v253 = vpop.f32.mrb[0].mxu0
  %v254 = vadd.f32 %v64, %v253
  %v255 = vpop.f32.mrb[0].mxu0
  %v256 = vpop.f32.mrb[0].mxu0
  %v257 = vadd.f32 %v64, %v256
  %v258 = vpop.f32.mrb[0].mxu0
  %259 = vdwg.mxu0
  %260 = vmatprep.subr.bf16.mxu0 0
  %261 = vmatpush1.bf16.msra.mxu0 %v184
  %262 = vmatprep.subr.bf16.mxu0 0
  %263 = vmatpush1.bf16.msra.mxu0 %v185
  %264 = vmatprep.subr.bf16.mxu0 0
  %265 = vmatpush1.bf16.msra.mxu0 0
  %266 = vmatprep.subr.bf16.mxu0 0
  %267 = vmatpush1.bf16.msra.mxu0 0
  %268 = vmatprep.subr.bf16.mxu0 0
  %269 = vmatpush1.bf16.msra.mxu0 0
  %270 = vmatprep.subr.bf16.mxu0 0
  %271 = vmatpush1.bf16.msra.mxu0 0
  %272 = vmatprep.subr.bf16.mxu0 0
  %273 = vmatpush1.bf16.msra.mxu0 0
  %274 = vmatprep.subr.bf16.mxu0 0
  %275 = vmatpush1.bf16.msra.mxu0 0
  %276 = vmatprep.subr.bf16.mxu0 0
  %277 = vmatpush1.bf16.msra.mxu0 0
  %278 = vmatprep.subr.bf16.mxu0 0
  %279 = vmatpush1.bf16.msra.mxu0 0
  %280 = vmatprep.subr.bf16.mxu0 0
  %281 = vmatpush1.bf16.msra.mxu0 0
  %282 = vmatprep.subr.bf16.mxu0 0
  %283 = vmatpush1.bf16.msra.mxu0 0
  %284 = vmatprep.subr.bf16.mxu0 0
  %285 = vmatpush1.bf16.msra.mxu0 0
  %286 = vmatprep.subr.bf16.mxu0 0
  %287 = vmatpush1.bf16.msra.mxu0 0
  %288 = vmatprep.subr.bf16.mxu0 0
  %289 = vmatpush1.bf16.msra.mxu0 0
  %290 = vmatprep.subr.bf16.mxu0 0
  %291 = vmatpush1.bf16.msra.mxu0 0
  %292 = vmatprep.mubr.bf16.mxu0 0
  %293 = vmatmul.mubr.bf16.gmra.mrb[0].mxu0 %v206
  %v294 = vpop.f32.mrb[0].mxu0
  %v295 = vadd.f32 %v246, %v294
  %v296 = vpop.f32.mrb[0].mxu0
  %v297 = vpop.f32.mrb[0].mxu0
  %v298 = vadd.f32 %v249, %v297
  %v299 = vpop.f32.mrb[0].mxu0
  %300 = vmatprep.mubr.bf16.mxu0 0
  %301 = vmatmul.mubr.bf16.gmra.mrb[0].mxu0 %v209
  %v302 = vpop.f32.mrb[0].mxu0
  %v303 = vadd.f32 %v254, %v302
  %v304 = vpop.f32.mrb[0].mxu0
  %v305 = vpop.f32.mrb[0].mxu0
  %v306 = vadd.f32 %v257, %v305
  %v307 = vpop.f32.mrb[0].mxu0
  %308 = vdwg.mxu0
  %v309 = vpack.c.bf16 %v298, %v295
  %v310 = vpack.c.bf16 %v306, %v303
  %v313 = vunpack.c.l.b16 %v309
  %v314 = vunpack.c.h.b16 %v309
  %v315 = vunpack.c.l.b16 %v310
  %v316 = vunpack.c.h.b16 %v310
  %v317 = vpack.c.b16 %v313, %v313
  %v318 = vpack.c.b16 %v314, %v314
  %v319 = vpack.c.b16 %v315, %v315
  %v320 = vpack.c.b16 %v316, %v316
  %vm325 = vcmask 257024
  %326 = vst.msk [vmem:[%s3] sm:$0xf] %vm325, %v317
  %327 = vst.msk [vmem:[%s3 + $0x4] sm:$0xf] %vm325, %v318
  %328 = vst.msk [vmem:[%s3 + $0x8] sm:$0xf] %vm325, %v319
  %329 = vst.msk [vmem:[%s3 + $0xc] sm:$0xf] %vm325, %v320
  // Predicated region
  $region14: #{ftn_encoder_forward.7} parent=0 // pred_check
    _
  $region15: #{ftn_encoder_forward.7} parent=0 // pred_check_branch
    %331 = sbr.rel (0) target = $region17
  $region16: #{ftn_encoder_forward.7} parent=0 // pred_region
    _
  $region17: #{ftn_encoder_forward.7} parent=0 // pred_fallthru
    _
  // Predicated region
  $region18: #{ftn_encoder_forward.7} parent=0 // pred_check
    _
  $region19: #{ftn_encoder_forward.7} parent=0 // pred_check_branch
    %333 = sbr.rel (0) target = $region21
  $region20: #{ftn_encoder_forward.7} parent=0 // pred_region
    _
  $region21: #{ftn_encoder_forward.7} parent=0 // pred_fallthru
    _

// kernel: ftn_encoder_forward.8
$region0: #{ftn_encoder_forward.8}
  #allocation0 [shape = 'u32[]', space=smem, size = 0x4, offset = 0x4, fixed_abs, tag = 'smem constant byte address 0x4 - core index']
  #allocation1 [shape = 'u32[144,128]{1,0:T(1,128)}', space=vmem, size = 0x12000, scoped, tag = 'internal scratch']
  #allocation2 [shape = 'bf16[1,16,32]{2,1,0:T(16,128)(2,1)}', space=vmem, size = 0x1000, scoped, tag = 'scratch operand']
  #allocation3 [shape = 'bf16[1,16,32]{2,1,0:T(16,128)(2,1)}', space=vmem, size = 0x1000, scoped, tag = 'scratch operand']
  %s0 = inlined_call_operand.vmem [shape: bf16[2,16,32], index: 0, kind: input, shape index: {}]
  %s1 = inlined_call_operand.vmem [shape: bf16[32,96], index: 1, kind: input, shape index: {}]
  %s2 = inlined_call_operand.vmem [shape: bf16[32,32], index: 2, kind: input, shape index: {}]
  %s3 = inlined_call_operand.vmem [shape: bf16[32,32], index: 3, kind: input, shape index: {}]
  %s4 = inlined_call_operand.vmem [shape: bf16[32,32], index: 4, kind: input, shape index: {}]
  %s5 = inlined_call_operand.vmem [shape: f32[8,32], index: 5, kind: input, shape index: {}]
  %s6 = inlined_call_operand.vmem [shape: bf16[2,16,32], index: 6, kind: output, shape index: {0}]
  %s7 = inlined_call_operand.vmem [shape: f32[2,32,16], index: 7, kind: output, shape index: {1}]
  %8 = xla_tuple %s6, %s7
  %s9 = sld [smem:[#allocation0]]
  $region65: #{ftn_encoder_forward.8} parent=0
    _
  %s11 = ssub.s32 1, %s9
  %s12 = scalar_select 0, %s11, %s9
  loop: start=0, step=1, limit=4
  $region2: #{ftn_encoder_forward.8} parent=0 // loop_pre_header
    _
  $region3: #{ftn_encoder_forward.8} parent=0 // loop_header
    %s14 = sphi 0, %s18
    %p15 = scmp.ge.s32.totalorder %s14, 4
    %s24 = sphi 0, %s26
    %s27 = sphi 0, %s24
    %s28 = sphi 0, %s27
    %s44 = sphi 0, %s28
    %s48 = sphi 0, %s48
    %s50 = sphi 0, %s48
    %s51 = sphi 0, %s50
    %s65 = sphi 0, %s51
    %s69 = sphi 0, %s69
    %s71 = sphi 0, %s69
    %s72 = sphi 0, %s71
    %s86 = sphi 0, %s72
    %s90 = sphi 0, %s90
    %s92 = sphi 0, %s90
    %s93 = sphi 0, %s92
    %s107 = sphi 0, %s93
    %s111 = sphi 0, %s111
    %s113 = sphi 0, %s111
    %s114 = sphi 0, %s113
    %s128 = sphi 0, %s114
    %s132 = sphi 0, %s132
    %s134 = sphi 0, %s132
    %s135 = sphi 0, %s134
    %s149 = sphi 0, %s135
    %s155 = sphi 0, %s157
    %s158 = sphi 0, %s155
    %s159 = sphi 0, %s158
    %s175 = sphi 0, %s159
    %s181 = sphi 0, %s183
    %s184 = sphi 0, %s181
    %s185 = sphi 0, %s184
    %s201 = sphi 0, %s185
  $region4: #{ftn_encoder_forward.8} parent=0 // loop_header_branch
    %17 = sbr.rel (%p15) target = $region8
  $region5: #{ftn_encoder_forward.8} parent=0 // loop_body
    %s19 = ssub.s32 %s14, 1
    %s20 = ssub.s32 %s14, 2
    %s21 = sadd.s32 %s14, 1
    %s22 = ssub.s32 %s14, %s21
    %p23 = scmp.eq.s32.totalorder %s22, 0
    %s25 = sadd.s32 %s24, 1
    %s26 = scalar_select %p23, %s24, %s25
    %p29 = pneg %p23
    %p30 = scmp.eq.s32.totalorder %s14, 1
    %p31 = por %p29, %p30
    %p32 = scmp.ne.s32.totalorder %s24, %s27
    %p33 = scmp.eq.s32.totalorder %s14, 0
    %p34 = por %p32, %p33
    %p35 = scmp.ne.s32.totalorder %s24, %s27
    %p36 = scmp.eq.s32.totalorder %s19, 1
    %p37 = por %p35, %p36
    %p38 = scmp.ne.s32.totalorder %s27, %s28
    %p39 = scmp.eq.s32.totalorder %s19, 0
    %p40 = por %p38, %p39
    %p41 = scmp.ne.s32.totalorder %s27, %s28
    %p42 = scmp.eq.s32.totalorder %s20, 1
    %p43 = por %p41, %p42
    %p45 = scmp.ne.s32.totalorder %s28, %s44
    %p46 = scmp.eq.s32.totalorder %s20, 0
    %p47 = por %p45, %p46
    %s49 = sadd.s32 %s48, 1
    %p52 = scmp.eq.s32.totalorder %s14, 1
    %p53 = scmp.ne.s32.totalorder %s48, %s50
    %p54 = scmp.eq.s32.totalorder %s14, 0
    %p55 = por %p53, %p54
    %p56 = scmp.ne.s32.totalorder %s48, %s50
    %p57 = scmp.eq.s32.totalorder %s19, 1
    %p58 = por %p56, %p57
    %p59 = scmp.ne.s32.totalorder %s50, %s51
    %p60 = scmp.eq.s32.totalorder %s19, 0
    %p61 = por %p59, %p60
    %p62 = scmp.ne.s32.totalorder %s50, %s51
    %p63 = scmp.eq.s32.totalorder %s20, 1
    %p64 = por %p62, %p63
    %p66 = scmp.ne.s32.totalorder %s51, %s65
    %p67 = scmp.eq.s32.totalorder %s20, 0
    %p68 = por %p66, %p67
    %s70 = sadd.s32 %s69, 1
    %p73 = scmp.eq.s32.totalorder %s14, 1
    %p74 = scmp.ne.s32.totalorder %s69, %s71
    %p75 = scmp.eq.s32.totalorder %s14, 0
    %p76 = por %p74, %p75
    %p77 = scmp.ne.s32.totalorder %s69, %s71
    %p78 = scmp.eq.s32.totalorder %s19, 1
    %p79 = por %p77, %p78
    %p80 = scmp.ne.s32.totalorder %s71, %s72
    %p81 = scmp.eq.s32.totalorder %s19, 0
    %p82 = por %p80, %p81
    %p83 = scmp.ne.s32.totalorder %s71, %s72
    %p84 = scmp.eq.s32.totalorder %s20, 1
    %p85 = por %p83, %p84
    %p87 = scmp.ne.s32.totalorder %s72, %s86
    %p88 = scmp.eq.s32.totalorder %s20, 0
    %p89 = por %p87, %p88
    %s91 = sadd.s32 %s90, 1
    %p94 = scmp.eq.s32.totalorder %s14, 1
    %p95 = scmp.ne.s32.totalorder %s90, %s92
    %p96 = scmp.eq.s32.totalorder %s14, 0
    %p97 = por %p95, %p96
    %p98 = scmp.ne.s32.totalorder %s90, %s92
    %p99 = scmp.eq.s32.totalorder %s19, 1
    %p100 = por %p98, %p99
    %p101 = scmp.ne.s32.totalorder %s92, %s93
    %p102 = scmp.eq.s32.totalorder %s19, 0
    %p103 = por %p101, %p102
    %p104 = scmp.ne.s32.totalorder %s92, %s93
    %p105 = scmp.eq.s32.totalorder %s20, 1
    %p106 = por %p104, %p105
    %p108 = scmp.ne.s32.totalorder %s93, %s107
    %p109 = scmp.eq.s32.totalorder %s20, 0
    %p110 = por %p108, %p109
    %s112 = sadd.s32 %s111, 1
    %p115 = scmp.eq.s32.totalorder %s14, 1
    %p116 = scmp.ne.s32.totalorder %s111, %s113
    %p117 = scmp.eq.s32.totalorder %s14, 0
    %p118 = por %p116, %p117
    %p119 = scmp.ne.s32.totalorder %s111, %s113
    %p120 = scmp.eq.s32.totalorder %s19, 1
    %p121 = por %p119, %p120
    %p122 = scmp.ne.s32.totalorder %s113, %s114
    %p123 = scmp.eq.s32.totalorder %s19, 0
    %p124 = por %p122, %p123
    %p125 = scmp.ne.s32.totalorder %s113, %s114
    %p126 = scmp.eq.s32.totalorder %s20, 1
    %p127 = por %p125, %p126
    %p129 = scmp.ne.s32.totalorder %s114, %s128
    %p130 = scmp.eq.s32.totalorder %s20, 0
    %p131 = por %p129, %p130
    %s133 = sadd.s32 %s132, 1
    %p136 = scmp.eq.s32.totalorder %s14, 1
    %p137 = scmp.ne.s32.totalorder %s132, %s134
    %p138 = scmp.eq.s32.totalorder %s14, 0
    %p139 = por %p137, %p138
    %p140 = scmp.ne.s32.totalorder %s132, %s134
    %p141 = scmp.eq.s32.totalorder %s19, 1
    %p142 = por %p140, %p141
    %p143 = scmp.ne.s32.totalorder %s134, %s135
    %p144 = scmp.eq.s32.totalorder %s19, 0
    %p145 = por %p143, %p144
    %p146 = scmp.ne.s32.totalorder %s134, %s135
    %p147 = scmp.eq.s32.totalorder %s20, 1
    %p148 = por %p146, %p147
    %p150 = scmp.ne.s32.totalorder %s135, %s149
    %p151 = scmp.eq.s32.totalorder %s20, 0
    %p152 = por %p150, %p151
    %s153 = ssub.s32 %s14, %s21
    %p154 = scmp.eq.s32.totalorder %s153, 0
    %s156 = sadd.s32 %s155, 1
    %s157 = scalar_select %p154, %s155, %s156
    %p160 = pneg %p154
    %p161 = scmp.eq.s32.totalorder %s14, 1
    %p162 = por %p160, %p161
    %p163 = scmp.ne.s32.totalorder %s155, %s158
    %p164 = scmp.eq.s32.totalorder %s14, 0
    %p165 = por %p163, %p164
    %p166 = scmp.ne.s32.totalorder %s155, %s158
    %p167 = scmp.eq.s32.totalorder %s19, 1
    %p168 = por %p166, %p167
    %p169 = scmp.ne.s32.totalorder %s158, %s159
    %p170 = scmp.eq.s32.totalorder %s19, 0
    %p171 = por %p169, %p170
    %p172 = scmp.ne.s32.totalorder %s158, %s159
    %p173 = scmp.eq.s32.totalorder %s20, 1
    %p174 = por %p172, %p173
    %p176 = scmp.ne.s32.totalorder %s159, %s175
    %p177 = scmp.eq.s32.totalorder %s20, 0
    %p178 = por %p176, %p177
    %s179 = ssub.s32 %s14, %s21
    %p180 = scmp.eq.s32.totalorder %s179, 0
    %s182 = sadd.s32 %s181, 1
    %s183 = scalar_select %p180, %s181, %s182
    %p186 = pneg %p180
    %p187 = scmp.eq.s32.totalorder %s14, 1
    %p188 = por %p186, %p187
    %p189 = scmp.ne.s32.totalorder %s181, %s184
    %p190 = scmp.eq.s32.totalorder %s14, 0
    %p191 = por %p189, %p190
    %p192 = scmp.ne.s32.totalorder %s181, %s184
    %p193 = scmp.eq.s32.totalorder %s19, 1
    %p194 = por %p192, %p193
    %p195 = scmp.ne.s32.totalorder %s184, %s185
    %p196 = scmp.eq.s32.totalorder %s19, 0
    %p197 = por %p195, %p196
    %p198 = scmp.ne.s32.totalorder %s184, %s185
    %p199 = scmp.eq.s32.totalorder %s20, 1
    %p200 = por %p198, %p199
    %p202 = scmp.ne.s32.totalorder %s185, %s201
    %p203 = scmp.eq.s32.totalorder %s20, 0
    %p204 = por %p202, %p203
    %p205 = scmp.le.s32.totalorder 1, %s14
    %p206 = scmp.lt.s32.totalorder %s14, 3
    %p207 = pnand %p205, %p206
    %p208 = pneg %p207
    // Predicated region
    $region9: #{ftn_encoder_forward.8} parent=5 // pred_check
      _
    $region10: #{ftn_encoder_forward.8} parent=5 // pred_check_branch
      %210 = sbr.rel (%p207) target = $region12
    $region11: #{ftn_encoder_forward.8} parent=5 // pred_region
      %s211 = ssub.s32 %s14, 1
      // Predicated region
      $region13: #{ftn_encoder_forward.8} parent=11 // pred_check
        %p212 = pneg %p61
      $region14: #{ftn_encoder_forward.8} parent=11 // pred_check_branch
        %214 = sbr.rel (%p212) target = $region16
      $region15: #{ftn_encoder_forward.8} parent=11 // pred_region
        _
      $region16: #{ftn_encoder_forward.8} parent=11 // pred_fallthru
        _
      // Predicated region
      $region17: #{ftn_encoder_forward.8} parent=11 // pred_check
        %p215 = pneg %p82
      $region18: #{ftn_encoder_forward.8} parent=11 // pred_check_branch
        %217 = sbr.rel (%p215) target = $region20
      $region19: #{ftn_encoder_forward.8} parent=11 // pred_region
        _
      $region20: #{ftn_encoder_forward.8} parent=11 // pred_fallthru
        _
      // Predicated region
      $region21: #{ftn_encoder_forward.8} parent=11 // pred_check
        %p218 = pneg %p103
      $region22: #{ftn_encoder_forward.8} parent=11 // pred_check_branch
        %220 = sbr.rel (%p218) target = $region24
      $region23: #{ftn_encoder_forward.8} parent=11 // pred_region
        _
      $region24: #{ftn_encoder_forward.8} parent=11 // pred_fallthru
        _
      // Predicated region
      $region25: #{ftn_encoder_forward.8} parent=11 // pred_check
        %p221 = pneg %p124
      $region26: #{ftn_encoder_forward.8} parent=11 // pred_check_branch
        %223 = sbr.rel (%p221) target = $region28
      $region27: #{ftn_encoder_forward.8} parent=11 // pred_region
        _
      $region28: #{ftn_encoder_forward.8} parent=11 // pred_fallthru
        _
      // Predicated region
      $region29: #{ftn_encoder_forward.8} parent=11 // pred_check
        %p224 = pneg %p145
      $region30: #{ftn_encoder_forward.8} parent=11 // pred_check_branch
        %226 = sbr.rel (%p224) target = $region32
      $region31: #{ftn_encoder_forward.8} parent=11 // pred_region
        _
      $region32: #{ftn_encoder_forward.8} parent=11 // pred_fallthru
        _
    $region12: #{ftn_encoder_forward.8} parent=5 // pred_fallthru
      _
    %p227 = scmp.lt.s32.totalorder %s14, 2
    // Predicated region
    $region33: #{ftn_encoder_forward.8} parent=5 // pred_check
      %p228 = pneg %p227
    $region34: #{ftn_encoder_forward.8} parent=5 // pred_check_branch
      %230 = sbr.rel (%p228) target = $region36
    $region35: #{ftn_encoder_forward.8} parent=5 // pred_region
      // Predicated region
      $region37: #{ftn_encoder_forward.8} parent=35 // pred_check
        %p231 = pneg %p34
      $region38: #{ftn_encoder_forward.8} parent=35 // pred_check_branch
        %233 = sbr.rel (%p231) target = $region40
      $region39: #{ftn_encoder_forward.8} parent=35 // pred_region
        %p234 = scmp.lt.s32.totalorder %s14, 1
        %s235 = scalar_select %p234, %s14, 1
        %s236 = smul.addr %s235, 2
        %s237 = smul.addr %s236, 4
        %s238 = scalar_lea.vmem %s0, %s237
      $region40: #{ftn_encoder_forward.8} parent=35 // pred_fallthru
        _
    $region36: #{ftn_encoder_forward.8} parent=5 // pred_fallthru
      _
    %p239 = scmp.le.s32.totalorder 1, %s14
    %p240 = scmp.lt.s32.totalorder %s14, 3
    %p241 = pnand %p239, %p240
    %p242 = pneg %p241
    // Predicated region
    $region41: #{ftn_encoder_forward.8} parent=5 // pred_check
      _
    $region42: #{ftn_encoder_forward.8} parent=5 // pred_check_branch
      %244 = sbr.rel (%p241) target = $region44
    $region43: #{ftn_encoder_forward.8} parent=5 // pred_region
      %s245 = ssub.s32 %s14, 1
      %p246 = scmp.lt.s32.totalorder %s19, 1
      %s247 = scalar_select %p246, %s19, 1
      %s248 = smul.addr %s247, 2
      %s249 = smul.addr %s248, 4
      %s250 = scalar_lea.vmem %s0, %s249
      %p251 = pneg %p40
      %p252 = pneg %p37
      %p253 = pneg %p61
      %p254 = pneg %p58
      %p255 = pneg %p82
      %p256 = pneg %p79
      %p257 = pneg %p103
      %p258 = pneg %p100
      %p259 = pneg %p124
      %p260 = pneg %p121
      %p261 = pneg %p145
      %p262 = pneg %p142
      %p263 = pneg %p171
      %p264 = pneg %p168
      %p265 = scmp.lt.s32.totalorder %s19, 1
      %s266 = scalar_select %p265, %s19, 1
      %s267 = smul.addr %s266, 2
      %s268 = smul.addr %s267, 4
      %s269 = scalar_lea.vmem %s6, %s268
      %p270 = pneg %p197
      %p271 = pneg %p194
      %p272 = scmp.lt.s32.totalorder %s19, 1
      %s273 = scalar_select %p272, %s19, 1
      %s274 = smul.addr %s273, 4
      %s275 = smul.addr %s274, 8
      %s276 = scalar_lea.vmem %s7, %s275
      %p277 = scmp.lt.s32.totalorder %s19, 1
      %s278 = scalar_select %p277, %s19, 1
      %s279 = smul.addr %s278, 2
      %s280 = smul.addr %s279, 4
      %s281 = scalar_lea.vmem %s0, %s280
      %p282 = scmp.lt.s32.totalorder %s19, 1
      %s283 = scalar_select %p282, %s19, 1
      %s284 = smul.addr %s283, 2
      %s285 = smul.addr %s284, 4
      %s286 = scalar_lea.vmem %s6, %s285
      %p287 = scmp.lt.s32.totalorder %s19, 1
      %s288 = scalar_select %p287, %s19, 1
      %s289 = smul.addr %s288, 4
      %s290 = smul.addr %s289, 8
      %s291 = scalar_lea.vmem %s7, %s290
      %v293 = vld [vmem:[%s5] sm:$0xff]
      %v294 = vld [vmem:[%s281] sm:$0xf]
      %v295 = vld [vmem:[%s281 + $0x4] sm:$0xf]
      %v296 = vunpack.c.l.bf16 %v294
      %v297 = vunpack.c.l.bf16 %v295
      %vm298 = vcmask 261120
      %v299 = vsel %vm298, %v296, 0.0
      %300 = vadd.xlane.f32.xlu0 %v299
      %v301 = vpop.xlane.xlu0 %300
      %v302 = vsel %vm298, %v297, 0.0
      %303 = vadd.xlane.f32.xlu0 %v302
      %v304 = vpop.xlane.xlu0 %303
      %v305 = vrcp.pop 32.0
      %v306 = vmul.f32 %v301, %v305
      %v307 = vmul.f32 %v304, %v305
      %v308 = vsub.f32 %v296, %v306
      %v309 = vsub.f32 %v297, %v307
      %v310 = vmul.f32 %v308, %v308
      %v311 = vmul.f32 %v309, %v309
      %v312 = vsel %vm298, %v310, 0.0
      %313 = vadd.xlane.f32.xlu0 %v312
      %v314 = vpop.xlane.xlu0 %313
      %v315 = vsel %vm298, %v311, 0.0
      %316 = vadd.xlane.f32.xlu0 %v315
      %v317 = vpop.xlane.xlu0 %316
      %v318 = vmul.f32 %v314, %v305
      %v319 = vmul.f32 %v317, %v305
      %v320 = vadd.f32 %v318, 1e-05
      %v321 = vadd.f32 %v319, 1e-05
      %v322 = vrsqrt.pop %v320
      %v323 = vrsqrt.pop %v321
      %v324 = vmul.f32 %v308, %v322
      %v325 = vmul.f32 %v309, %v323
      %v326 = vlaneseq
      %v327 = vshrl.u32 %v326, 7
      %v328 = vsub.s32 0, %v327
      %v329 = vrot.slane %v293, %v328
      %v330 = vmul.f32 %v324, %v329
      %v331 = vmul.f32 %v325, %v329
      %v332 = vlaneseq
      %v333 = vshrl.u32 %v332, 7
      %v334 = vsub.s32 1, %v333
      %v335 = vrot.slane %v293, %v334
      %v336 = vadd.f32 %v330, %v335
      %v337 = vadd.f32 %v331, %v335
      %v338 = vpack.c.bf16 %v337, %v336
      %v339 = vld [vmem:[%s1] sm:$0xf]
      %v340 = vld [vmem:[%s1 + $0x4] sm:$0xf]
      %v341 = vld [vmem:[%s1 + $0x8] sm:$0xf]
      %v342 = vld [vmem:[%s1 + $0xc] sm:$0xf]
      %v347 = vunpack.c.l.b16 %v339
      %v348 = vunpack.c.l.b16 %v340
      %v349 = vunpack.c.l.b16 %v341
      %v350 = vunpack.c.l.b16 %v342
      %v351 = vpack.c.b16 %v348, %v347
      %v352 = vpack.c.b16 %v350, %v349
      %v356 = vsel %vm298, %v338, 0
      %358 = vmatprep.subr.bf16.mxu0 0
      %359 = vmatpush1.bf16.msra.mxu0 %v351
      %360 = vmatprep.subr.bf16.mxu0 0
      %361 = vmatpush1.bf16.msra.mxu0 %v352
      %362 = vmatprep.subr.bf16.mxu0 0
      %363 = vmatpush1.bf16.msra.mxu0 0
      %364 = vmatprep.subr.bf16.mxu0 0
      %365 = vmatpush1.bf16.msra.mxu0 0
      %366 = vmatprep.subr.bf16.mxu0 0
      %367 = vmatpush1.bf16.msra.mxu0 0
      %368 = vmatprep.subr.bf16.mxu0 0
      %369 = vmatpush1.bf16.msra.mxu0 0
      %370 = vmatprep.subr.bf16.mxu0 0
      %371 = vmatpush1.bf16.msra.mxu0 0
      %372 = vmatprep.subr.bf16.mxu0 0
      %373 = vmatpush1.bf16.msra.mxu0 0
      %374 = vmatprep.subr.bf16.mxu0 0
      %375 = vmatpush1.bf16.msra.mxu0 0
      %376 = vmatprep.subr.bf16.mxu0 0
      %377 = vmatpush1.bf16.msra.mxu0 0
      %378 = vmatprep.subr.bf16.mxu0 0
      %379 = vmatpush1.bf16.msra.mxu0 0
      %380 = vmatprep.subr.bf16.mxu0 0
      %381 = vmatpush1.bf16.msra.mxu0 0
      %382 = vmatprep.subr.bf16.mxu0 0
      %383 = vmatpush1.bf16.msra.mxu0 0
      %384 = vmatprep.subr.bf16.mxu0 0
      %385 = vmatpush1.bf16.msra.mxu0 0
      %386 = vmatprep.subr.bf16.mxu0 0
      %387 = vmatpush1.bf16.msra.mxu0 0
      %388 = vmatprep.subr.bf16.mxu0 0
      %389 = vmatpush1.bf16.msra.mxu0 0
      %390 = vmatprep.mubr.bf16.mxu0 0
      %391 = vmatmul.mubr.bf16.gmra.mrb[0].mxu0 %v356
      %v392 = vpop.f32.mrb[0].mxu0
      %v393 = vadd.f32 0.0, %v392
      %v394 = vpop.f32.mrb[0].mxu0
      %v395 = vpop.f32.mrb[0].mxu0
      %v396 = vadd.f32 0.0, %v395
      %v397 = vpop.f32.mrb[0].mxu0
      %398 = vdwg.mxu0
      %v399 = vmul.f32 %v393, 0.17677669
      %v400 = vmul.f32 %v396, 0.17677669
      %v401 = vpack.c.bf16 %v400, %v399
      %v402 = vpack.c.bf16 %v396, %v393
      %404 = vrot.lane.b32.xlu0 %v402, 96
      %v405 = vpop.permute.xlu0 %404
      %407 = vst.msk [vmem:[#allocation2] sm:$0xff] %vm298, %v405
      %408 = vrot.lane.b32.xlu0 %v402, 64
      %v409 = vpop.permute.xlu0 %408
      %411 = vst.msk [vmem:[#allocation3] sm:$0xff] %vm298, %v409
      %v412 = vld [vmem:[#allocation2] sm:$0xff]
      %v413 = vld [vmem:[#allocation3] sm:$0xff]
      %v415 = vsel %vm298, %v401, 0
      %v418 = vsel %vm298, %v412, 0
      %420 = vmatprep.subr.bf16.mxu0 0
      %421 = vmatpush1.bf16.xpose.msra.mxu0 %v418
      %422 = vmatprep.subr.bf16.mxu0 0
      %423 = vmatpush1.bf16.xpose.msra.mxu0 0
      %424 = vmatprep.subr.bf16.mxu0 0
      %425 = vmatpush1.bf16.xpose.msra.mxu0 0
      %426 = vmatprep.subr.bf16.mxu0 0
      %427 = vmatpush1.bf16.xpose.msra.mxu0 0
      %428 = vmatprep.subr.bf16.mxu0 0
      %429 = vmatpush1.bf16.xpose.msra.mxu0 0
      %430 = vmatprep.subr.bf16.mxu0 0
      %431 = vmatpush1.bf16.xpose.msra.mxu0 0
      %432 = vmatprep.subr.bf16.mxu0 0
      %433 = vmatpush1.bf16.xpose.msra.mxu0 0
      %434 = vmatprep.subr.bf16.mxu0 0
      %435 = vmatpush1.bf16.xpose.msra.mxu0 0
      %436 = vmatprep.subr.bf16.mxu0 0
      %437 = vmatpush1.bf16.xpose.msra.mxu0 0
      %438 = vmatprep.subr.bf16.mxu0 0
      %439 = vmatpush1.bf16.xpose.msra.mxu0 0
      %440 = vmatprep.subr.bf16.mxu0 0
      %441 = vmatpush1.bf16.xpose.msra.mxu0 0
      %442 = vmatprep.subr.bf16.mxu0 0
      %443 = vmatpush1.bf16.xpose.msra.mxu0 0
      %444 = vmatprep.subr.bf16.mxu0 0
      %445 = vmatpush1.bf16.xpose.msra.mxu0 0
      %446 = vmatprep.subr.bf16.mxu0 0
      %447 = vmatpush1.bf16.xpose.msra.mxu0 0
      %448 = vmatprep.subr.bf16.mxu0 0
      %449 = vmatpush1.bf16.xpose.msra.mxu0 0
      %450 = vmatprep.subr.bf16.mxu0 0
      %451 = vmatpush1.bf16.xpose.msra.mxu0 0
      %452 = vmatprep.mubr.bf16.mxu0 0
      %453 = vmatmul.mubr.bf16.gmra.mrb[0].mxu0 %v415
      %v454 = vpop.f32.mrb[0].mxu0
      %v455 = vadd.f32 0.0, %v454
      %v456 = vpop.f32.mrb[0].mxu0
      %v457 = vpop.f32.mrb[0].mxu0
      %v458 = vadd.f32 0.0, %v457
      %v459 = vpop.f32.mrb[0].mxu0
      %460 = vdwg.mxu0
      %vm461 = vcmask 130048
      %v462 = vsel %vm461, %v455, -inf
      %463 = vmax.xlane.f32.xlu0 %v462
      %v464 = vpop.xlane.xlu0 %463
      %v465 = vsel %vm461, %v458, -inf
      %466 = vmax.xlane.f32.xlu0 %v465
      %v467 = vpop.xlane.xlu0 %466
      %v468 = vsub.f32 -inf, %v464
      %v469 = vsub.f32 -inf, %v467
      %v470 = vmul.f32 %v468, 1.442695
      %v471 = vpow.pop %v470
      %v472 = vmul.f32 %v469, 1.442695
      %v473 = vpow.pop %v472
      %v474 = vsub.f32 %v455, %v464
      %v475 = vsub.f32 %v458, %v467
      %v476 = vmul.f32 %v474, 1.442695
      %v477 = vpow.pop %v476
      %v478 = vmul.f32 %v475, 1.442695
      %v479 = vpow.pop %v478
      %v480 = vmul.f32 %v471, 0.0
      %v481 = vmul.f32 %v473, 0.0
      %v482 = vsel %vm461, %v477, 0.0
      %483 = vadd.xlane.f32.xlu0 %v482
      %v484 = vpop.xlane.xlu0 %483
      %v485 = vsel %vm461, %v479, 0.0
      %486 = vadd.xlane.f32.xlu0 %v485
      %v487 = vpop.xlane.xlu0 %486
      %v488 = vadd.f32 %v480, %v484
      %v489 = vadd.f32 %v481, %v487
      %v490 = vpack.c.bf16 %v479, %v477
      %v492 = vsel %vm461, %v490, 0
      %494 = vmatprep.subr.bf16.mxu0 0
      %495 = vmatpush1.bf16.msra.mxu0 %v413
      %496 = vmatprep.subr.bf16.mxu0 0
      %497 = vmatpush1.bf16.msra.mxu0 0
      %498 = vmatprep.subr.bf16.mxu0 0
      %499 = vmatpush1.bf16.msra.mxu0 0
      %500 = vmatprep.subr.bf16.mxu0 0
      %501 = vmatpush1.bf16.msra.mxu0 0
      %502 = vmatprep.subr.bf16.mxu0 0
      %503 = vmatpush1.bf16.msra.mxu0 0
      %504 = vmatprep.subr.bf16.mxu0 0
      %505 = vmatpush1.bf16.msra.mxu0 0
      %506 = vmatprep.subr.bf16.mxu0 0
      %507 = vmatpush1.bf16.msra.mxu0 0
      %508 = vmatprep.subr.bf16.mxu0 0
      %509 = vmatpush1.bf16.msra.mxu0 0
      %510 = vmatprep.subr.bf16.mxu0 0
      %511 = vmatpush1.bf16.msra.mxu0 0
      %512 = vmatprep.subr.bf16.mxu0 0
      %513 = vmatpush1.bf16.msra.mxu0 0
      %514 = vmatprep.subr.bf16.mxu0 0
      %515 = vmatpush1.bf16.msra.mxu0 0
      %516 = vmatprep.subr.bf16.mxu0 0
      %517 = vmatpush1.bf16.msra.mxu0 0
      %518 = vmatprep.subr.bf16.mxu0 0
      %519 = vmatpush1.bf16.msra.mxu0 0
      %520 = vmatprep.subr.bf16.mxu0 0
      %521 = vmatpush1.bf16.msra.mxu0 0
      %522 = vmatprep.subr.bf16.mxu0 0
      %523 = vmatpush1.bf16.msra.mxu0 0
      %524 = vmatprep.subr.bf16.mxu0 0
      %525 = vmatpush1.bf16.msra.mxu0 0
      %526 = vmatprep.mubr.bf16.mxu0 0
      %527 = vmatmul.mubr.bf16.gmra.mrb[0].mxu0 %v492
      %v528 = vpop.f32.mrb[0].mxu0
      %v529 = vadd.f32 0.0, %v528
      %v530 = vpop.f32.mrb[0].mxu0
      %v531 = vpop.f32.mrb[0].mxu0
      %v532 = vadd.f32 0.0, %v531
      %v533 = vpop.f32.mrb[0].mxu0
      %534 = vdwg.mxu0
      %v535 = vadd.f32 %v480, %v529
      %v536 = vadd.f32 %v481, %v532
      %v537 = vrcp.pop %v488
      %v538 = vrcp.pop %v489
      %v539 = vmul.f32 %v535, %v537
      %v540 = vmul.f32 %v536, %v538
      %v541 = vpack.c.bf16 %v540, %v539
      %v542 = vld [vmem:[%s2] sm:$0xf]
      %v543 = vld [vmem:[%s2 + $0x4] sm:$0xf]
      %v544 = vld [vmem:[%s2 + $0x8] sm:$0xf]
      %v545 = vld [vmem:[%s2 + $0xc] sm:$0xf]
      %v546 = vlaneseq
      %v547 = vshrl.u32 %v546, 7
      %v548 = vsub.s32 2, %v547
      %v549 = vrot.slane %v293, %v548
      %v554 = vunpack.c.l.b16 %v542
      %v555 = vunpack.c.l.b16 %v543
      %v556 = vunpack.c.l.b16 %v544
      %v557 = vunpack.c.l.b16 %v545
      %v558 = vpack.c.b16 %v555, %v554
      %v559 = vpack.c.b16 %v557, %v556
      %v563 = vsel %vm298, %v541, 0
      %565 = vmatprep.subr.bf16.mxu0 0
      %566 = vmatpush1.bf16.msra.mxu0 %v558
      %567 = vmatprep.subr.bf16.mxu0 0
      %568 = vmatpush1.bf16.msra.mxu0 %v559
      %569 = vmatprep.subr.bf16.mxu0 0
      %570 = vmatpush1.bf16.msra.mxu0 0
      %571 = vmatprep.subr.bf16.mxu0 0
      %572 = vmatpush1.bf16.msra.mxu0 0
      %573 = vmatprep.subr.bf16.mxu0 0
      %574 = vmatpush1.bf16.msra.mxu0 0
      %575 = vmatprep.subr.bf16.mxu0 0
      %576 = vmatpush1.bf16.msra.mxu0 0
      %577 = vmatprep.subr.bf16.mxu0 0
      %578 = vmatpush1.bf16.msra.mxu0 0
      %579 = vmatprep.subr.bf16.mxu0 0
      %580 = vmatpush1.bf16.msra.mxu0 0
      %581 = vmatprep.subr.bf16.mxu0 0
      %582 = vmatpush1.bf16.msra.mxu0 0
      %583 = vmatprep.subr.bf16.mxu0 0
      %584 = vmatpush1.bf16.msra.mxu0 0
      %585 = vmatprep.subr.bf16.mxu0 0
      %586 = vmatpush1.bf16.msra.mxu0 0
      %587 = vmatprep.subr.bf16.mxu0 0
      %588 = vmatpush1.bf16.msra.mxu0 0
      %589 = vmatprep.subr.bf16.mxu0 0
      %590 = vmatpush1.bf16.msra.mxu0 0
      %591 = vmatprep.subr.bf16.mxu0 0
      %592 = vmatpush1.bf16.msra.mxu0 0
      %593 = vmatprep.subr.bf16.mxu0 0
      %594 = vmatpush1.bf16.msra.mxu0 0
      %595 = vmatprep.subr.bf16.mxu0 0
      %596 = vmatpush1.bf16.msra.mxu0 0
      %597 = vmatprep.mubr.bf16.mxu0 0
      %598 = vmatmul.mubr.bf16.gmra.mrb[0].mxu0 %v563
      %v599 = vpop.f32.mrb[0].mxu0
      %v600 = vadd.f32 %v549, %v599
      %v601 = vpop.f32.mrb[0].mxu0
      %v602 = vpop.f32.mrb[0].mxu0
      %v603 = vadd.f32 %v549, %v602
      %v604 = vpop.f32.mrb[0].mxu0
      %605 = vdwg.mxu0
      %608 = vrot.lane.b32.xlu0 %v600, 64
      %v609 = vpop.permute.xlu0 %608
      %610 = vrot.lane.b32.xlu0 %v603, 64
      %v611 = vpop.permute.xlu0 %610
      %v614 = vadd.f32 %v393, %v609
      %v615 = vadd.f32 %v396, %v611
      %618 = vrot.lane.b32.xlu0 %v614, 64
      %v619 = vpop.permute.xlu0 %618
      %620 = vrot.lane.b32.xlu0 %v615, 64
      %v621 = vpop.permute.xlu0 %620
      %v624 = vsel %vm298, %v619, 0.0
      %625 = vadd.xlane.f32.xlu0 %v624
      %v626 = vpop.xlane.xlu0 %625
      %v627 = vsel %vm298, %v621, 0.0
      %628 = vadd.xlane.f32.xlu0 %v627
      %v629 = vpop.xlane.xlu0 %628
      %v630 = vmul.f32 %v626, %v305
      %v631 = vmul.f32 %v629, %v305
      %v632 = vsub.f32 %v614, %v630
      %v633 = vsub.f32 %v615, %v631
      %v634 = vmul.f32 %v632, %v632
      %v635 = vmul.f32 %v633, %v633
      %638 = vrot.lane.b32.xlu0 %v634, 64
      %v639 = vpop.permute.xlu0 %638
      %640 = vrot.lane.b32.xlu0 %v635, 64
      %v641 = vpop.permute.xlu0 %640
      %v644 = vsel %vm298, %v639, 0.0
      %645 = vadd.xlane.f32.xlu0 %v644
      %v646 = vpop.xlane.xlu0 %645
      %v647 = vsel %vm298, %v641, 0.0
      %648 = vadd.xlane.f32.xlu0 %v647
      %v649 = vpop.xlane.xlu0 %648
      %v650 = vmul.f32 %v646, %v305
      %v651 = vmul.f32 %v649, %v305
      %v652 = vadd.f32 %v650, 1e-05
      %v653 = vadd.f32 %v651, 1e-05
      %v654 = vrsqrt.pop %v652
      %v655 = vrsqrt.pop %v653
      %v656 = vmul.f32 %v632, %v654
      %v657 = vmul.f32 %v633, %v655
      %v658 = vlaneseq
      %v659 = vshrl.u32 %v658, 7
      %v660 = vsub.s32 3, %v659
      %v661 = vrot.slane %v293, %v660
      %663 = vrot.lane.b32.xlu0 %v661, 64
      %v664 = vpop.permute.xlu0 %663
      %v666 = vmul.f32 %v656, %v664
      %v667 = vmul.f32 %v657, %v664
      %v668 = vlaneseq
      %v669 = vshrl.u32 %v668, 7
      %v670 = vsub.s32 4, %v669
      %v671 = vrot.slane %v293, %v670
      %673 = vrot.lane.b32.xlu0 %v671, 64
      %v674 = vpop.permute.xlu0 %673
      %v676 = vadd.f32 %v666, %v674
      %v677 = vadd.f32 %v667, %v674
      %v678 = vpack.c.bf16 %v677, %v676
      %v679 = vld [vmem:[%s3] sm:$0xf]
      %v680 = vld [vmem:[%s3 + $0x4] sm:$0xf]
      %v681 = vld [vmem:[%s3 + $0x8] sm:$0xf]
      %v682 = vld [vmem:[%s3 + $0xc] sm:$0xf]
      %v683 = vlaneseq
      %v684 = vshrl.u32 %v683, 7
      %v685 = vsub.s32 5, %v684
      %v686 = vrot.slane %v293, %v685
      %688 = vrot.lane.b32.xlu0 %v678, 64
      %v689 = vpop.permute.xlu0 %688
      %v694 = vunpack.c.l.b16 %v679
      %v695 = vunpack.c.l.b16 %v680
      %v696 = vunpack.c.l.b16 %v681
      %v697 = vunpack.c.l.b16 %v682
      %v698 = vpack.c.b16 %v695, %v694
      %v699 = vpack.c.b16 %v697, %v696
      %v703 = vsel %vm298, %v689, 0
      %705 = vmatprep.subr.bf16.mxu0 0
      %706 = vmatpush1.bf16.msra.mxu0 %v698
      %707 = vmatprep.subr.bf16.mxu0 0
      %708 = vmatpush1.bf16.msra.mxu0 %v699
      %709 = vmatprep.subr.bf16.mxu0 0
      %710 = vmatpush1.bf16.msra.mxu0 0
      %711 = vmatprep.subr.bf16.mxu0 0
      %712 = vmatpush1.bf16.msra.mxu0 0
      %713 = vmatprep.subr.bf16.mxu0 0
      %714 = vmatpush1.bf16.msra.mxu0 0
      %715 = vmatprep.subr.bf16.mxu0 0
      %716 = vmatpush1.bf16.msra.mxu0 0
      %717 = vmatprep.subr.bf16.mxu0 0
      %718 = vmatpush1.bf16.msra.mxu0 0
      %719 = vmatprep.subr.bf16.mxu0 0
      %720 = vmatpush1.bf16.msra.mxu0 0
      %721 = vmatprep.subr.bf16.mxu0 0
      %722 = vmatpush1.bf16.msra.mxu0 0
      %723 = vmatprep.subr.bf16.mxu0 0
      %724 = vmatpush1.bf16.msra.mxu0 0
      %725 = vmatprep.subr.bf16.mxu0 0
      %726 = vmatpush1.bf16.msra.mxu0 0
      %727 = vmatprep.subr.bf16.mxu0 0
      %728 = vmatpush1.bf16.msra.mxu0 0
      %729 = vmatprep.subr.bf16.mxu0 0
      %730 = vmatpush1.bf16.msra.mxu0 0
      %731 = vmatprep.subr.bf16.mxu0 0
      %732 = vmatpush1.bf16.msra.mxu0 0
      %733 = vmatprep.subr.bf16.mxu0 0
      %734 = vmatpush1.bf16.msra.mxu0 0
      %735 = vmatprep.subr.bf16.mxu0 0
      %736 = vmatpush1.bf16.msra.mxu0 0
      %737 = vmatprep.mubr.bf16.mxu0 0
      %738 = vmatmul.mubr.bf16.gmra.mrb[0].mxu0 %v703
      %v739 = vpop.f32.mrb[0].mxu0
      %v740 = vadd.f32 %v686, %v739
      %v741 = vpop.f32.mrb[0].mxu0
      %v742 = vpop.f32.mrb[0].mxu0
      %v743 = vadd.f32 %v686, %v742
      %v744 = vpop.f32.mrb[0].mxu0
      %745 = vdwg.mxu0
      %v746 = vmul.f32 %v740, 0.5
      %v747 = vmul.f32 %v743, 0.5
      %v748 = vmul.f32 %v740, 0.044715
      %v749 = vmul.f32 %v743, 0.044715
      %v750 = vmul.f32 %v748, %v740
      %v751 = vmul.f32 %v749, %v743
      %v752 = vmul.f32 %v750, %v740
      %v753 = vmul.f32 %v751, %v743
      %v754 = vadd.f32 %v740, %v752
      %v755 = vadd.f32 %v743, %v753
      %v756 = vmul.f32 %v754, 0.7978846
      %v757 = vmul.f32 %v755, 0.7978846
      %v758 = vtanh.pop %v756
      %v759 = vtanh.pop %v757
      %v760 = vadd.f32 %v758, 1.0
      %v761 = vadd.f32 %v759, 1.0
      %v762 = vmul.f32 %v746, %v760
      %v763 = vmul.f32 %v747, %v761
      %v764 = vpack.c.bf16 %v763, %v762
      %v765 = vld [vmem:[%s4] sm:$0xf]
      %v766 = vld [vmem:[%s4 + $0x4] sm:$0xf]
      %v767 = vld [vmem:[%s4 + $0x8] sm:$0xf]
      %v768 = vld [vmem:[%s4 + $0xc] sm:$0xf]
      %v769 = vlaneseq
      %v770 = vshrl.u32 %v769, 7
      %v771 = vsub.s32 6, %v770
      %v772 = vrot.slane %v293, %v771
      %v777 = vunpack.c.l.b16 %v765
      %v778 = vunpack.c.l.b16 %v766
      %v779 = vunpack.c.l.b16 %v767
      %v780 = vunpack.c.l.b16 %v768
      %v781 = vpack.c.b16 %v778, %v777
      %v782 = vpack.c.b16 %v780, %v779
      %v786 = vsel %vm298, %v764, 0
      %788 = vmatprep.subr.bf16.mxu0 0
      %789 = vmatpush1.bf16.msra.mxu0 %v781
      %790 = vmatprep.subr.bf16.mxu0 0
      %791 = vmatpush1.bf16.msra.mxu0 %v782
      %792 = vmatprep.subr.bf16.mxu0 0
      %793 = vmatpush1.bf16.msra.mxu0 0
      %794 = vmatprep.subr.bf16.mxu0 0
      %795 = vmatpush1.bf16.msra.mxu0 0
      %796 = vmatprep.subr.bf16.mxu0 0
      %797 = vmatpush1.bf16.msra.mxu0 0
      %798 = vmatprep.subr.bf16.mxu0 0
      %799 = vmatpush1.bf16.msra.mxu0 0
      %800 = vmatprep.subr.bf16.mxu0 0
      %801 = vmatpush1.bf16.msra.mxu0 0
      %802 = vmatprep.subr.bf16.mxu0 0
      %803 = vmatpush1.bf16.msra.mxu0 0
      %804 = vmatprep.subr.bf16.mxu0 0
      %805 = vmatpush1.bf16.msra.mxu0 0
      %806 = vmatprep.subr.bf16.mxu0 0
      %807 = vmatpush1.bf16.msra.mxu0 0
      %808 = vmatprep.subr.bf16.mxu0 0
      %809 = vmatpush1.bf16.msra.mxu0 0
      %810 = vmatprep.subr.bf16.mxu0 0
      %811 = vmatpush1.bf16.msra.mxu0 0
      %812 = vmatprep.subr.bf16.mxu0 0
      %813 = vmatpush1.bf16.msra.mxu0 0
      %814 = vmatprep.subr.bf16.mxu0 0
      %815 = vmatpush1.bf16.msra.mxu0 0
      %816 = vmatprep.subr.bf16.mxu0 0
      %817 = vmatpush1.bf16.msra.mxu0 0
      %818 = vmatprep.subr.bf16.mxu0 0
      %819 = vmatpush1.bf16.msra.mxu0 0
      %820 = vmatprep.mubr.bf16.mxu0 0
      %821 = vmatmul.mubr.bf16.gmra.mrb[0].mxu0 %v786
      %v822 = vpop.f32.mrb[0].mxu0
      %v823 = vadd.f32 %v772, %v822
      %v824 = vpop.f32.mrb[0].mxu0
      %v825 = vpop.f32.mrb[0].mxu0
      %v826 = vadd.f32 %v772, %v825
      %v827 = vpop.f32.mrb[0].mxu0
      %828 = vdwg.mxu0
      %831 = vrot.lane.b32.xlu0 %v823, 64
      %v832 = vpop.permute.xlu0 %831
      %833 = vrot.lane.b32.xlu0 %v826, 64
      %v834 = vpop.permute.xlu0 %833
      %v837 = vadd.f32 %v614, %v832
      %v838 = vadd.f32 %v615, %v834
      %v839 = vpack.c.bf16 %v838, %v837
      %v841 = vunpack.c.l.b16 %v839
      %v842 = vunpack.c.h.b16 %v839
      %v843 = vpack.c.b16 %v841, %v841
      %v844 = vpack.c.b16 %v842, %v842
      %845 = vrot.lane.b32.xlu0 %v843, 64
      %v846 = vpop.permute.xlu0 %845
      %847 = vrot.lane.b32.xlu0 %v844, 64
      %v848 = vpop.permute.xlu0 %847
      %vm851 = vcmask 257024
      %852 = vst.msk [vmem:[%s286] sm:$0xf] %vm851, %v846
      %853 = vst.msk [vmem:[%s286 + $0x4] sm:$0xf] %vm851, %v848
      %856 = vrot.lane.b32.xlu0 %v837, 64
      %v857 = vpop.permute.xlu0 %856
      %858 = vrot.lane.b32.xlu0 %v838, 64
      %v859 = vpop.permute.xlu0 %858
      %862 = vxpose.xlu0.b32.start [1/16] %v857, 128
      %863 = vxpose.xlu0.b32.cont [2/16] %v859, 128
      %864 = vxpose.xlu0.b32.cont [3/16] 0.0, 128
      %865 = vxpose.xlu0.b32.cont [4/16] 0.0, 128
      %866 = vxpose.xlu0.b32.cont [5/16] 0.0, 128
      %867 = vxpose.xlu0.b32.cont [6/16] 0.0, 128
      %868 = vxpose.xlu0.b32.cont [7/16] 0.0, 128
      %869 = vxpose.xlu0.b32.cont [8/16] 0.0, 128
      %870 = vxpose.xlu0.b32.cont [9/16] 0.0, 128
      %871 = vxpose.xlu0.b32.cont [10/16] 0.0, 128
      %872 = vxpose.xlu0.b32.cont [11/16] 0.0, 128
      %873 = vxpose.xlu0.b32.cont [12/16] 0.0, 128
      %874 = vxpose.xlu0.b32.cont [13/16] 0.0, 128
      %875 = vxpose.xlu0.b32.cont [14/16] 0.0, 128
      %876 = vxpose.xlu0.b32.cont [15/16] 0.0, 128
      %877 = vxpose.xlu0.b32.end [16/16] 0.0, 128
      %v878 = vpop.trf.xlu0
      %v879 = vpop.trf.xlu0
      %v880 = vpop.trf.xlu0
      %v881 = vpop.trf.xlu0
      %v882 = vpop.trf.xlu0
      %v883 = vpop.trf.xlu0
      %v884 = vpop.trf.xlu0
      %v885 = vpop.trf.xlu0
      %v886 = vpop.trf.xlu0
      %v887 = vpop.trf.xlu0
      %v888 = vpop.trf.xlu0
      %v889 = vpop.trf.xlu0
      %v890 = vpop.trf.xlu0
      %v891 = vpop.trf.xlu0
      %v892 = vpop.trf.xlu0
      %v893 = vpop.trf.xlu0
      %894 = vst.msk [vmem:[%s291] sm:$0xff] %vm461, %v878
      %895 = vst.msk [vmem:[%s291 + $0x8] sm:$0xff] %vm461, %v879
      %896 = vst.msk [vmem:[%s291 + $0x10] sm:$0xff] %vm461, %v880
      %897 = vst.msk [vmem:[%s291 + $0x18] sm:$0xff] %vm461, %v881
      %p898 = scmp.lt.s32.totalorder %s19, 1
      %s899 = scalar_select %p898, %s19, 1
      %s900 = smul.addr %s899, 2
      %s901 = smul.addr %s900, 4
      %s902 = scalar_lea.vmem %s6, %s901
      %p903 = scmp.lt.s32.totalorder %s19, 1
      %s904 = scalar_select %p903, %s19, 1
      %s905 = smul.addr %s904, 4
      %s906 = smul.addr %s905, 8
      %s907 = scalar_lea.vmem %s7, %s906
      // Predicated region
      $region45: #{ftn_encoder_forward.8} parent=43 // pred_check
        %p908 = pneg %p168
      $region46: #{ftn_encoder_forward.8} parent=43 // pred_check_branch
        %910 = sbr.rel (%p908) target = $region48
      $region47: #{ftn_encoder_forward.8} parent=43 // pred_region
        _
      $region48: #{ftn_encoder_forward.8} parent=43 // pred_fallthru
        _
      // Predicated region
      $region49: #{ftn_encoder_forward.8} parent=43 // pred_check
        %p911 = pneg %p194
      $region50: #{ftn_encoder_forward.8} parent=43 // pred_check_branch
        %913 = sbr.rel (%p911) target = $region52
      $region51: #{ftn_encoder_forward.8} parent=43 // pred_region
        _
      $region52: #{ftn_encoder_forward.8} parent=43 // pred_fallthru
        _
    $region44: #{ftn_encoder_forward.8} parent=5 // pred_fallthru
      _
    %p914 = scmp.le.s32.totalorder 2, %s14
    // Predicated region
    $region53: #{ftn_encoder_forward.8} parent=5 // pred_check
      %p915 = pneg %p914
    $region54: #{ftn_encoder_forward.8} parent=5 // pred_check_branch
      %917 = sbr.rel (%p915) target = $region56
    $region55: #{ftn_encoder_forward.8} parent=5 // pred_region
      %s918 = ssub.s32 %s14, 2
      // Predicated region
      $region57: #{ftn_encoder_forward.8} parent=55 // pred_check
        %p919 = pneg %p174
      $region58: #{ftn_encoder_forward.8} parent=55 // pred_check_branch
        %921 = sbr.rel (%p919) target = $region60
      $region59: #{ftn_encoder_forward.8} parent=55 // pred_region
        %p922 = scmp.lt.s32.totalorder %s20, 1
        %s923 = scalar_select %p922, %s20, 1
        %s924 = smul.addr %s923, 2
        %s925 = smul.addr %s924, 4
        %s926 = scalar_lea.vmem %s6, %s925
      $region60: #{ftn_encoder_forward.8} parent=55 // pred_fallthru
        _
      // Predicated region
      $region61: #{ftn_encoder_forward.8} parent=55 // pred_check
        %p927 = pneg %p200
      $region62: #{ftn_encoder_forward.8} parent=55 // pred_check_branch
        %929 = sbr.rel (%p927) target = $region64
      $region63: #{ftn_encoder_forward.8} parent=55 // pred_region
        %p930 = scmp.lt.s32.totalorder %s20, 1
        %s931 = scalar_select %p930, %s20, 1
        %s932 = smul.addr %s931, 4
        %s933 = smul.addr %s932, 8
        %s934 = scalar_lea.vmem %s7, %s933
      $region64: #{ftn_encoder_forward.8} parent=55 // pred_fallthru
        _
    $region56: #{ftn_encoder_forward.8} parent=5 // pred_fallthru
      _
  $region6: #{ftn_encoder_forward.8} parent=0 // loop_footer
    %s18 = sadd.s32 1, %s14
  $region7: #{ftn_encoder_forward.8} parent=0 // loop_footer_branch
    %13 = sbr.rel target = $region3
  $region8: #{ftn_encoder_forward.8} parent=0 // loop_exit
    _

// kernel: ftn_encoder_forward.9
$region0: #{ftn_encoder_forward.9}
  #allocation0 [shape = 'u32[]', space=smem, size = 0x4, offset = 0x4, fixed_abs, tag = 'smem constant byte address 0x4 - core index']
  #allocation1 [shape = 'u32[144,128]{1,0:T(1,128)}', space=vmem, size = 0x12000, scoped, tag = 'internal scratch']
  %s0 = inlined_call_operand.vmem [shape: bf16[16,288], index: 0, kind: input, shape index: {}]
  %s1 = inlined_call_operand.vmem [shape: bf16[288,64], index: 1, kind: input, shape index: {}]
  %s2 = inlined_call_operand.vmem [shape: f32[1,64], index: 2, kind: input, shape index: {}]
  %s3 = inlined_call_operand.vmem [shape: f32[16,64], index: 3, kind: output, shape index: {}]
  %s4 = sld [smem:[#allocation0]]
  $region22: #{ftn_encoder_forward.9} parent=0
    _
  %s6 = ssub.s32 1, %s4
  %s7 = scalar_select 0, %s6, %s4
  // Predicated region
  $region2: #{ftn_encoder_forward.9} parent=0 // pred_check
    _
  $region3: #{ftn_encoder_forward.9} parent=0 // pred_check_branch
    %9 = sbr.rel (0) target = $region5
  $region4: #{ftn_encoder_forward.9} parent=0 // pred_region
    _
  $region5: #{ftn_encoder_forward.9} parent=0 // pred_fallthru
    _
  // Predicated region
  $region6: #{ftn_encoder_forward.9} parent=0 // pred_check
    _
  $region7: #{ftn_encoder_forward.9} parent=0 // pred_check_branch
    %11 = sbr.rel (0) target = $region9
  $region8: #{ftn_encoder_forward.9} parent=0 // pred_region
    _
  $region9: #{ftn_encoder_forward.9} parent=0 // pred_fallthru
    _
  // Predicated region
  $region10: #{ftn_encoder_forward.9} parent=0 // pred_check
    _
  $region11: #{ftn_encoder_forward.9} parent=0 // pred_check_branch
    %13 = sbr.rel (0) target = $region13
  $region12: #{ftn_encoder_forward.9} parent=0 // pred_region
    _
  $region13: #{ftn_encoder_forward.9} parent=0 // pred_fallthru
    _
  %v15 = vld [vmem:[%s0] sm:$0xff]
  %v16 = vld [vmem:[%s0 + $0x8] sm:$0xf]
  %v17 = vld [vmem:[%s0 + $0xc] sm:$0xff]
  %v18 = vld [vmem:[%s0 + $0x14] sm:$0xf]
  %v19 = vld [vmem:[%s1] sm:$0xf]
  %v20 = vld [vmem:[%s1 + $0x4] sm:$0xf]
  %v21 = vld [vmem:[%s1 + $0x8] sm:$0xf]
  %v22 = vld [vmem:[%s1 + $0xc] sm:$0xf]
  %v23 = vld [vmem:[%s1 + $0x10] sm:$0xf]
  %v24 = vld [vmem:[%s1 + $0x14] sm:$0xf]
  %v25 = vld [vmem:[%s1 + $0x18] sm:$0xf]
  %v26 = vld [vmem:[%s1 + $0x1c] sm:$0xf]
  %v27 = vld [vmem:[%s1 + $0x20] sm:$0xf]
  %v28 = vld [vmem:[%s1 + $0x24] sm:$0xf]
  %v29 = vld [vmem:[%s1 + $0x28] sm:$0xf]
  %v30 = vld [vmem:[%s1 + $0x2c] sm:$0xf]
  %v31 = vld [vmem:[%s1 + $0x30] sm:$0xf]
  %v32 = vld [vmem:[%s1 + $0x34] sm:$0xf]
  %v33 = vld [vmem:[%s1 + $0x38] sm:$0xf]
  %v34 = vld [vmem:[%s1 + $0x3c] sm:$0xf]
  %v35 = vld [vmem:[%s1 + $0x40] sm:$0xf]
  %v36 = vld [vmem:[%s1 + $0x44] sm:$0xf]
  %v37 = vld [vmem:[%s1 + $0x48] sm:$0xf]
  %v38 = vld [vmem:[%s1 + $0x4c] sm:$0xf]
  %v39 = vld [vmem:[%s1 + $0x50] sm:$0xf]
  %v40 = vld [vmem:[%s1 + $0x54] sm:$0xf]
  %v41 = vld [vmem:[%s1 + $0x58] sm:$0xf]
  %v42 = vld [vmem:[%s1 + $0x5c] sm:$0xf]
  %v43 = vld [vmem:[%s1 + $0x60] sm:$0xf]
  %v44 = vld [vmem:[%s1 + $0x64] sm:$0xf]
  %v45 = vld [vmem:[%s1 + $0x68] sm:$0xf]
  %v46 = vld [vmem:[%s1 + $0x6c] sm:$0xf]
  %v47 = vld [vmem:[%s1 + $0x70] sm:$0xf]
  %v48 = vld [vmem:[%s1 + $0x74] sm:$0xf]
  %v49 = vld [vmem:[%s1 + $0x78] sm:$0xf]
  %v50 = vld [vmem:[%s1 + $0x7c] sm:$0xf]
  %v51 = vld [vmem:[%s1 + $0x80] sm:$0xf]
  %v52 = vld [vmem:[%s1 + $0x84] sm:$0xf]
  %v53 = vld [vmem:[%s1 + $0x88] sm:$0xf]
  %v54 = vld [vmem:[%s1 + $0x8c] sm:$0xf]
  %v55 = vld [vmem:[%s2] sm:$0x1]
  %v57 = vlaneseq
  %v58 = vshrl.u32 %v57, 7
  %v59 = vsub.s32 0, %v58
  %v60 = vrot.slane %v55, %v59
  %v66 = vunpack.c.l.b16 %v15
  %v67 = vunpack.c.h.b16 %v15
  %v68 = vunpack.c.l.b16 %v16
  %v69 = vunpack.c.l.b16 %v17
  %v70 = vunpack.c.h.b16 %v17
  %v71 = vunpack.c.l.b16 %v18
  %v72 = vpack.c.b16 %v69, %v66
  %v73 = vpack.c.b16 %v70, %v67
  %v74 = vpack.c.b16 %v71, %v68
  %v113 = vunpack.c.l.b16 %v19
  %v114 = vunpack.c.l.b16 %v20
  %v115 = vunpack.c.l.b16 %v21
  %v116 = vunpack.c.l.b16 %v22
  %v117 = vunpack.c.l.b16 %v23
  %v118 = vunpack.c.l.b16 %v24
  %v119 = vunpack.c.l.b16 %v25
  %v120 = vunpack.c.l.b16 %v26
  %v121 = vunpack.c.l.b16 %v27
  %v122 = vunpack.c.l.b16 %v28
  %v123 = vunpack.c.l.b16 %v29
  %v124 = vunpack.c.l.b16 %v30
  %v125 = vunpack.c.l.b16 %v31
  %v126 = vunpack.c.l.b16 %v32
  %v127 = vunpack.c.l.b16 %v33
  %v128 = vunpack.c.l.b16 %v34
  %v129 = vunpack.c.l.b16 %v35
  %v130 = vunpack.c.l.b16 %v36
  %v131 = vunpack.c.l.b16 %v37
  %v132 = vunpack.c.l.b16 %v38
  %v133 = vunpack.c.l.b16 %v39
  %v134 = vunpack.c.l.b16 %v40
  %v135 = vunpack.c.l.b16 %v41
  %v136 = vunpack.c.l.b16 %v42
  %v137 = vunpack.c.l.b16 %v43
  %v138 = vunpack.c.l.b16 %v44
  %v139 = vunpack.c.l.b16 %v45
  %v140 = vunpack.c.l.b16 %v46
  %v141 = vunpack.c.l.b16 %v47
  %v142 = vunpack.c.l.b16 %v48
  %v143 = vunpack.c.l.b16 %v49
  %v144 = vunpack.c.l.b16 %v50
  %v145 = vunpack.c.l.b16 %v51
  %v146 = vunpack.c.l.b16 %v52
  %v147 = vunpack.c.l.b16 %v53
  %v148 = vunpack.c.l.b16 %v54
  %v149 = vpack.c.b16 %v114, %v113
  %v150 = vpack.c.b16 %v116, %v115
  %v151 = vpack.c.b16 %v118, %v117
  %v152 = vpack.c.b16 %v120, %v119
  %v153 = vpack.c.b16 %v122, %v121
  %v154 = vpack.c.b16 %v124, %v123
  %v155 = vpack.c.b16 %v126, %v125
  %v156 = vpack.c.b16 %v128, %v127
  %v157 = vpack.c.b16 %v130, %v129
  %v158 = vpack.c.b16 %v132, %v131
  %v159 = vpack.c.b16 %v134, %v133
  %v160 = vpack.c.b16 %v136, %v135
  %v161 = vpack.c.b16 %v138, %v137
  %v162 = vpack.c.b16 %v140, %v139
  %v163 = vpack.c.b16 %v142, %v141
  %v164 = vpack.c.b16 %v144, %v143
  %v165 = vpack.c.b16 %v146, %v145
  %v166 = vpack.c.b16 %v148, %v147
  %vm185 = vcmask 261120
  %v187 = vsel %vm185, %v74, 0
  %189 = vmatprep.subr.bf16.mxu0 0
  %190 = vmatpush1.bf16.msra.mxu0 %v149
  %191 = vmatprep.subr.bf16.mxu0 0
  %192 = vmatpush1.bf16.msra.mxu0 %v150
  %193 = vmatprep.subr.bf16.mxu0 0
  %194 = vmatpush1.bf16.msra.mxu0 %v151
  %195 = vmatprep.subr.bf16.mxu0 0
  %196 = vmatpush1.bf16.msra.mxu0 %v152
  %197 = vmatprep.subr.bf16.mxu0 0
  %198 = vmatpush1.bf16.msra.mxu0 %v153
  %199 = vmatprep.subr.bf16.mxu0 0
  %200 = vmatpush1.bf16.msra.mxu0 %v154
  %201 = vmatprep.subr.bf16.mxu0 0
  %202 = vmatpush1.bf16.msra.mxu0 %v155
  %203 = vmatprep.subr.bf16.mxu0 0
  %204 = vmatpush1.bf16.msra.mxu0 %v156
  %205 = vmatprep.subr.bf16.mxu0 0
  %206 = vmatpush1.bf16.msra.mxu0 %v157
  %207 = vmatprep.subr.bf16.mxu0 0
  %208 = vmatpush1.bf16.msra.mxu0 %v158
  %209 = vmatprep.subr.bf16.mxu0 0
  %210 = vmatpush1.bf16.msra.mxu0 %v159
  %211 = vmatprep.subr.bf16.mxu0 0
  %212 = vmatpush1.bf16.msra.mxu0 %v160
  %213 = vmatprep.subr.bf16.mxu0 0
  %214 = vmatpush1.bf16.msra.mxu0 %v161
  %215 = vmatprep.subr.bf16.mxu0 0
  %216 = vmatpush1.bf16.msra.mxu0 %v162
  %217 = vmatprep.subr.bf16.mxu0 0
  %218 = vmatpush1.bf16.msra.mxu0 %v163
  %219 = vmatprep.subr.bf16.mxu0 0
  %220 = vmatpush1.bf16.msra.mxu0 %v164
  %221 = vmatprep.mubr.bf16.mxu0 %v73
  %222 = vmatmul.mubr.bf16.gmra.mrb[0].mxu0 %v72
  %v223 = vpop.f32.mrb[0].mxu0
  %v224 = vadd.f32 %v60, %v223
  %v225 = vpop.f32.mrb[0].mxu0
  %v226 = vpop.f32.mrb[0].mxu0
  %v227 = vadd.f32 %v60, %v226
  %v228 = vpop.f32.mrb[0].mxu0
  %229 = vdwg.mxu0
  %230 = vmatprep.subr.bf16.mxu0 0
  %231 = vmatpush1.bf16.msra.mxu0 %v165
  %232 = vmatprep.subr.bf16.mxu0 0
  %233 = vmatpush1.bf16.msra.mxu0 %v166
  %234 = vmatprep.subr.bf16.mxu0 0
  %235 = vmatpush1.bf16.msra.mxu0 0
  %236 = vmatprep.subr.bf16.mxu0 0
  %237 = vmatpush1.bf16.msra.mxu0 0
  %238 = vmatprep.subr.bf16.mxu0 0
  %239 = vmatpush1.bf16.msra.mxu0 0
  %240 = vmatprep.subr.bf16.mxu0 0
  %241 = vmatpush1.bf16.msra.mxu0 0
  %242 = vmatprep.subr.bf16.mxu0 0
  %243 = vmatpush1.bf16.msra.mxu0 0
  %244 = vmatprep.subr.bf16.mxu0 0
  %245 = vmatpush1.bf16.msra.mxu0 0
  %246 = vmatprep.subr.bf16.mxu0 0
  %247 = vmatpush1.bf16.msra.mxu0 0
  %248 = vmatprep.subr.bf16.mxu0 0
  %249 = vmatpush1.bf16.msra.mxu0 0
  %250 = vmatprep.subr.bf16.mxu0 0
  %251 = vmatpush1.bf16.msra.mxu0 0
  %252 = vmatprep.subr.bf16.mxu0 0
  %253 = vmatpush1.bf16.msra.mxu0 0
  %254 = vmatprep.subr.bf16.mxu0 0
  %255 = vmatpush1.bf16.msra.mxu0 0
  %256 = vmatprep.subr.bf16.mxu0 0
  %257 = vmatpush1.bf16.msra.mxu0 0
  %258 = vmatprep.subr.bf16.mxu0 0
  %259 = vmatpush1.bf16.msra.mxu0 0
  %260 = vmatprep.subr.bf16.mxu0 0
  %261 = vmatpush1.bf16.msra.mxu0 0
  %262 = vmatprep.mubr.bf16.mxu0 0
  %263 = vmatmul.mubr.bf16.gmra.mrb[0].mxu0 %v187
  %v264 = vpop.f32.mrb[0].mxu0
  %v265 = vadd.f32 %v224, %v264
  %v266 = vpop.f32.mrb[0].mxu0
  %v267 = vpop.f32.mrb[0].mxu0
  %v268 = vadd.f32 %v227, %v267
  %v269 = vpop.f32.mrb[0].mxu0
  %270 = vdwg.mxu0
  %vm271 = vcmask 523264
  %272 = vst.msk [vmem:[%s3] sm:$0xff] %vm271, %v265
  %273 = vst.msk [vmem:[%s3 + $0x8] sm:$0xff] %vm271, %v268
  // Predicated region
  $region14: #{ftn_encoder_forward.9} parent=0 // pred_check
    _
  $region15: #{ftn_encoder_forward.9} parent=0 // pred_check_branch
    %275 = sbr.rel (0) target = $region17
  $region16: #{ftn_encoder_forward.9} parent=0 // pred_region
    _
  $region17: #{ftn_encoder_forward.9} parent=0 // pred_fallthru
    _
  // Predicated region
  $region18: #{ftn_encoder_forward.9} parent=0 // pred_check
    _
  $region19: #{ftn_encoder_forward.9} parent=0 // pred_check_branch
    %277 = sbr.rel (0) target = $region21
  $region20: #{ftn_encoder_forward.9} parent=0 // pred_region
    _
  $region21: #{ftn_encoder_forward.9} parent=0 // pred_fallthru
    _

</llo_original>
